<compile_context>
chip_gen: v5e
topology: v5e:2x2
jax: 0.10.0
libtpu: 0.0.40
codegen_flags: <defaults>
</compile_context>

<pallas_src>
import jax
import jax.numpy as jnp
import numpy as np
from jax.experimental import pallas as pl
from jax.experimental.pallas import tpu as pltpu

# ---------------- model config (consistent with FiBiNet.__init__) -----------
ONE_HOT_VOCABS   = [11, 7, 13, 9, 10]      # 5 one-hot fields
MULTI_HOT_VOCABS = [20, 15, 25]            # 3 multi-hot fields
MULTI_HOT_LEN    = 4
K_EMB            = 16                      # fix_emb_dim
SENET_R          = 4                       # senet reduction ratio
DEEP_HIDDEN      = (64, 32)                # deepnet_hidden_dims
BATCH            = 256
BATCH_TILE       = 128                     # rows per grid step (fills MXU rows)

F_FIELDS   = len(ONE_HOT_VOCABS) + len(MULTI_HOT_VOCABS)   # 8
R_DIM      = max(1, int(F_FIELDS / SENET_R))               # 2
N_PAIRS    = F_FIELDS * (F_FIELDS + 1) // 2                # 36
FIELDS_DIM = N_PAIRS * K_EMB                               # 576
DEEP_IN    = FIELDS_DIM * 2                                # 1152
FK         = F_FIELDS * K_EMB                              # 128 (lane-dense!)
FFK        = F_FIELDS * F_FIELDS * K_EMB                   # 1024


# ------------------------------ Pallas kernel -------------------------------
def _fibinet_kernel(e2_ref, sew1f_ref, sew2f_ref, ma_ref, w1a_ref, w1b_ref,
                    db1_ref, dw2_ref, db2_ref, fw_ref, fb_ref, out_ref):
    f32 = jnp.float32
    hp = jax.lax.Precision.HIGHEST
    tb = e2_ref.shape[0]
    e2 = e2_ref[...]                                          # [TB, FK] f32

    # ---------------- SENet ----------------
    # sum-pool over K and the per-field gate broadcast are folded into
    # sew1f / sew2f on the host (exact: pure 0/1 copy structure).
    h1 = jax.nn.sigmoid(
        jnp.dot(e2, sew1f_ref[...], precision=hp,
                preferred_element_type=f32))                  # [TB, R]
    gate = jax.nn.sigmoid(
        jnp.dot(h1, sew2f_ref[...], precision=hp,
                preferred_element_type=f32))                  # [TB, FK]
    se2 = e2 * gate                                           # [TB, FK]

    # ---------------- bilinear interaction (both halves, one MXU pass) ------
    # x2 stacks raw / SENet embeddings along the sublane (batch) axis so the
    # block-structured expand weight `ma` is streamed through the MXU once.
    #   viw[b, i*FK + j*K + k] = sum_l x[b, i*K+l] * W[l, k]
    #   vjr[b, i*FK + j*K + k] = x[b, j*K+k]        (lane-tile replication)
    x2 = jnp.concatenate([e2, se2], axis=0)                   # [2TB, FK] f32
    viw = jnp.dot(x2.astype(jnp.bfloat16), ma_ref[...],
                  preferred_element_type=f32)                 # [2TB, FFK] f32
    vjr = jnp.concatenate([x2] * F_FIELDS, axis=1)            # [2TB, FFK] f32
    full2 = viw * vjr                                         # vi@W * vj (VPU)
    full_p = full2[:tb]                                       # raw-emb half
    full_q = full2[tb:]                                       # SENet half

    # ---------------- DeepNet layer 1 (selector folded into w1a/w1b) --------
    h = (jnp.dot(full_p.astype(jnp.bfloat16), w1a_ref[...],
                 preferred_element_type=f32)
         + jnp.dot(full_q.astype(jnp.bfloat16), w1b_ref[...],
                   preferred_element_type=f32)
         + db1_ref[...])
    h = jnp.maximum(h, 0.0)                                   # [TB, H1]

    # ---------------- DeepNet layer 2 ----------------
    h = jnp.maximum(
        jnp.dot(h.astype(jnp.bfloat16), dw2_ref[...],
                preferred_element_type=f32) + db2_ref[...], 0.0)   # [TB, H2]

    # ---------------- final Linear(H2, 1) + Sigmoid (VPU/XLU, no MXU) -------
    logits = jnp.sum(h * fw_ref[...], axis=1, keepdims=True) + fb_ref[0, 0]
    out_ref[...] = jax.nn.sigmoid(logits)                     # [TB, 1]


# ------------------------------ wrapper --------------------------------------
def fibinet_forward(emb_x, folded, *, batch_tile=BATCH_TILE):
    B, F, K = emb_x.shape
    e2 = emb_x.reshape(B, F * K).astype(jnp.float32)          # lane-dense [B, 128]

    tb = min(batch_tile, B)
    assert B % tb == 0, "BATCH must be a multiple of the batch tile"
    grid = (B // tb,)

    def wspec(arr):                                           # weight: resident in VMEM
        nd = arr.ndim
        return pl.BlockSpec(arr.shape, lambda i, _nd=nd: (0,) * _nd)

    in_specs = [
        pl.BlockSpec((tb, F * K), lambda i: (i, 0)),          # e2 batch tile
        wspec(folded["sew1f"]),
        wspec(folded["sew2f"]),
        wspec(folded["ma"]),
        wspec(folded["w1a"]),
        wspec(folded["w1b"]),
        wspec(folded["db1"]),
        wspec(folded["dw2"]),
        wspec(folded["db2"]),
        wspec(folded["fw"]),
        pl.BlockSpec(memory_space=pltpu.MemorySpace.SMEM),    # scalar final bias
    ]

    return pl.pallas_call(
        _fibinet_kernel,
        out_shape=jax.ShapeDtypeStruct((B, 1), jnp.float32),
        grid=grid,
        in_specs=in_specs,
        out_specs=pl.BlockSpec((tb, 1), lambda i: (i, 0)),
        compiler_params=pltpu.CompilerParams(
            dimension_semantics=("parallel",)),
    )(e2, folded["sew1f"], folded["sew2f"], folded["ma"], folded["w1a"],
      folded["w1b"], folded["db1"], folded["dw2"], folded["db2"],
      folded["fw"], folded["fb"])


# ---------------------- host-side weight folding -----------------------------
def fold_params(params):
    F, K = F_FIELDS, K_EMB
    H1, H2 = DEEP_HIDDEN

    se_w1 = np.asarray(params["se_w1"], np.float32)           # [R, F]
    se_w2 = np.asarray(params["se_w2"], np.float32)           # [F, R]
    W     = np.asarray(params["bilinear_w"], np.float32)      # [K, K]
    d_w1  = np.asarray(params["d_w1"], np.float32)            # [H1, 2*P*K]
    d_b1  = np.asarray(params["d_b1"], np.float32)            # [1, H1]
    d_w2  = np.asarray(params["d_w2"], np.float32)            # [H2, H1]
    d_b2  = np.asarray(params["d_b2"], np.float32)            # [1, H2]
    f_w   = np.asarray(params["f_w"], np.float32)             # [1, H2]
    f_b   = np.asarray(params["f_b"], np.float32)             # [1, 1]

    eye_f = np.eye(F, dtype=np.float32)
    # SENet: fold sum-pool over K into w1, fold per-field->per-lane broadcast into w2.
    sum_pool = np.kron(eye_f, np.ones((K, 1), np.float32))    # [F*K, F]
    expand   = np.kron(eye_f, np.ones((1, K), np.float32))    # [F, F*K]
    sew1f = sum_pool @ se_w1.T                                 # [F*K, R]
    sew2f = se_w2.T @ expand                                   # [R, F*K]

    # Bilinear expansion: (e2 @ ma)[b, i*F*K + j*K + k] = (e @ W)[b, i, k]
    ma = np.kron(eye_f, np.tile(W, (1, F))).astype(np.float32)   # [F*K, F*F*K]

    # Fold the lower-triangular (j <= i) pair selection into deep layer 1.
    d1t = d_w1.T                                               # [2*P*K, H1]
    d1_top, d1_bot = d1t[:FIELDS_DIM], d1t[FIELDS_DIM:]
    w1a = np.zeros((FFK, H1), np.float32)                      # for cross_p half
    w1b = np.zeros((FFK, H1), np.float32)                      # for cross_q half
    p = 0
    for i in range(F):
        for j in range(i + 1):
            s = (i * F + j) * K
            w1a[s:s + K] = d1_top[p * K:(p + 1) * K]
            w1b[s:s + K] = d1_bot[p * K:(p + 1) * K]
            p += 1

    return dict(
        sew1f=jnp.asarray(sew1f, jnp.float32),
        sew2f=jnp.asarray(sew2f, jnp.float32),
        ma=jnp.asarray(ma, jnp.bfloat16),
        w1a=jnp.asarray(w1a, jnp.bfloat16),
        w1b=jnp.asarray(w1b, jnp.bfloat16),
        db1=jnp.asarray(d_b1, jnp.float32),
        dw2=jnp.asarray(d_w2.T, jnp.bfloat16),                 # [H1, H2]
        db2=jnp.asarray(d_b2, jnp.float32),
        fw=jnp.asarray(f_w, jnp.float32),                      # [1, H2]
        fb=jnp.asarray(f_b, jnp.float32),                      # [1, 1] -> SMEM
    )


# ------------------------- params / glue (plain JAX) -------------------------
def init_params(key):
    ks = list(jax.random.split(key, 32))
    it = iter(ks)

    def unif(shape, bound):
        return jax.random.uniform(next(it), shape, jnp.float32, -bound, bound)

    one_hot_tables = [jax.random.normal(next(it), (v, K_EMB), jnp.float32) * 0.1
                      for v in ONE_HOT_VOCABS]
    multi_hot_tables = [jax.random.normal(next(it), (v, K_EMB), jnp.float32) * 0.1
                        for v in MULTI_HOT_VOCABS]

    params = {}
    params["se_w1"] = unif((R_DIM, F_FIELDS), 1.0 / np.sqrt(F_FIELDS))
    params["se_w2"] = unif((F_FIELDS, R_DIM), 1.0 / np.sqrt(R_DIM))
    params["bilinear_w"] = unif((K_EMB, K_EMB),
                                float(np.sqrt(6.0 / (K_EMB + K_EMB))))
    h1, h2 = DEEP_HIDDEN
    params["d_w1"] = unif((h1, DEEP_IN), 1.0 / np.sqrt(DEEP_IN))
    params["d_b1"] = unif((1, h1), 1.0 / np.sqrt(DEEP_IN))
    params["d_w2"] = unif((h2, h1), 1.0 / np.sqrt(h1))
    params["d_b2"] = unif((1, h2), 1.0 / np.sqrt(h1))
    params["f_w"] = unif((1, h2), 1.0 / np.sqrt(h2))
    params["f_b"] = unif((1, 1), 1.0 / np.sqrt(h2))
    return params, one_hot_tables, multi_hot_tables


def embedding_layer(one_hot_x, multi_hot_x, one_hot_tables, multi_hot_tables):
    # TODO(synk): EmbeddingLayer source was not provided; assume per-field
    # lookup for one-hot fields and sum-pooled lookup for multi-hot fields.
    embs = [tbl[one_hot_x[:, f]] for f, tbl in enumerate(one_hot_tables)]
    embs += [jnp.sum(tbl[multi_hot_x[:, f, :]], axis=1)
             for f, tbl in enumerate(multi_hot_tables)]
    return jnp.stack(embs, axis=1).astype(jnp.float32)         # [B, F, K]


# ------------------------ pure-JAX reference (for checking) ------------------
def fibinet_reference(emb_x, params):
    hp = jax.lax.Precision.HIGHEST
    e = emb_x.astype(jnp.float32)
    B, F, K = e.shape
    h_fsq = jnp.sum(e, axis=2)
    h1 = jax.nn.sigmoid(jnp.dot(h_fsq, params["se_w1"].T, precision=hp))
    h2 = jax.nn.sigmoid(jnp.dot(h1, params["se_w2"].T, precision=hp))
    se = e * h2[:, :, None]

    tril = np.tril(np.ones((F, F), dtype=bool)).reshape(-1)
    keep = np.nonzero(tril)[0]

    def cross(x):
        viw = jnp.einsum("bfk,kl->bfl", x, params["bilinear_w"], precision=hp)
        full = viw[:, :, None, :] * x[:, None, :, :]
        return full.reshape(B, F * F, K)[:, keep, :].reshape(B, -1)

    h = jnp.concatenate([cross(e), cross(se)], axis=1)
    h = jnp.maximum(jnp.dot(h, params["d_w1"].T, precision=hp) + params["d_b1"], 0.0)
    h = jnp.maximum(jnp.dot(h, params["d_w2"].T, precision=hp) + params["d_b2"], 0.0)
    return jax.nn.sigmoid(jnp.dot(h, params["f_w"].T, precision=hp) + params["f_b"])


# ----------------------------------- main ------------------------------------
if __name__ == "__main__":
    key = jax.random.PRNGKey(0)
    pkey, k1, k2 = jax.random.split(key, 3)
    params, one_hot_tables, multi_hot_tables = init_params(pkey)

    # deterministic integer field ids
    oh_cols = []
    for f, v in enumerate(ONE_HOT_VOCABS):
        oh_cols.append(jax.random.randint(jax.random.fold_in(k1, f),
                                          (BATCH,), 0, v, dtype=jnp.int32))
    one_hot_x = jnp.stack(oh_cols, axis=1)                     # [B, 5]

    mh_cols = []
    for f, v in enumerate(MULTI_HOT_VOCABS):
        mh_cols.append(jax.random.randint(jax.random.fold_in(k2, f),
                                          (BATCH, MULTI_HOT_LEN), 0, v,
                                          dtype=jnp.int32))
    multi_hot_x = jnp.stack(mh_cols, axis=1)                   # [B, 3, 4]

    emb_x = embedding_layer(one_hot_x, multi_hot_x, one_hot_tables,
                            multi_hot_tables)                  # [B, F, K]

    folded = fold_params(params)
    out = fibinet_forward(emb_x, folded, batch_tile=BATCH_TILE)
    jax.block_until_ready(out)

    ref = fibinet_reference(emb_x, params)
    # bf16 MXU operands (f32 accumulation) => loosened tolerance vs f32 reference.
    np.testing.assert_allclose(np.asarray(out), np.asarray(ref),
                               rtol=2e-2, atol=2e-3)
    assert out.shape == (BATCH, 1)
    print("KERNEL_OK")
</pallas_src>

<mosaic_0001>
module attributes {stable_mosaic.version = 11 : i64} {
  func.func @_fibinet_kernel(%arg0: i32, %arg1: memref<128x128xf32, #tpu.memory_space<vmem>>, %arg2: memref<128x2xf32, #tpu.memory_space<vmem>>, %arg3: memref<2x128xf32, #tpu.memory_space<vmem>>, %arg4: memref<128x1024xbf16, #tpu.memory_space<vmem>>, %arg5: memref<1024x64xbf16, #tpu.memory_space<vmem>>, %arg6: memref<1024x64xbf16, #tpu.memory_space<vmem>>, %arg7: memref<1x64xf32, #tpu.memory_space<vmem>>, %arg8: memref<64x32xbf16, #tpu.memory_space<vmem>>, %arg9: memref<1x32xf32, #tpu.memory_space<vmem>>, %arg10: memref<1x32xf32, #tpu.memory_space<vmem>>, %arg11: memref<1x1xf32, #tpu.memory_space<smem>>, %arg12: memref<128x1xf32, #tpu.memory_space<vmem>>) attributes {dimension_semantics = [#tpu.dimension_semantics<parallel>], iteration_bounds = array<i64: 2>, scalar_prefetch = 0 : i64, scratch_operands = 0 : i64, tpu.core_type = #tpu.core_type<tc>, window_params = [{transform_indices = @transform_0, window_bounds = array<i64: 128, 128>}, {pipeline_mode = #tpu.pipeline_mode<synchronous>, transform_indices = @transform_1, window_bounds = array<i64: 128, 2>}, {pipeline_mode = #tpu.pipeline_mode<synchronous>, transform_indices = @transform_2, window_bounds = array<i64: 2, 128>}, {pipeline_mode = #tpu.pipeline_mode<synchronous>, transform_indices = @transform_3, window_bounds = array<i64: 128, 1024>}, {pipeline_mode = #tpu.pipeline_mode<synchronous>, transform_indices = @transform_4, window_bounds = array<i64: 1024, 64>}, {pipeline_mode = #tpu.pipeline_mode<synchronous>, transform_indices = @transform_5, window_bounds = array<i64: 1024, 64>}, {pipeline_mode = #tpu.pipeline_mode<synchronous>, transform_indices = @transform_6, window_bounds = array<i64: 1, 64>}, {pipeline_mode = #tpu.pipeline_mode<synchronous>, transform_indices = @transform_7, window_bounds = array<i64: 64, 32>}, {pipeline_mode = #tpu.pipeline_mode<synchronous>, transform_indices = @transform_8, window_bounds = array<i64: 1, 32>}, {pipeline_mode = #tpu.pipeline_mode<synchronous>, transform_indices = @transform_9, window_bounds = array<i64: 1, 32>}, {transform_indices = @transform_10, window_bounds = array<i64: 1, 1>}, {transform_indices = @transform_11, window_bounds = array<i64: 128, 1>}]} {
    %c0 = arith.constant 0 : index
    %c0_0 = arith.constant 0 : index
    %0 = vector.load %arg1[%c0, %c0_0] : memref<128x128xf32, #tpu.memory_space<vmem>>, vector<128x128xf32>
    %c0_1 = arith.constant 0 : index
    %c0_2 = arith.constant 0 : index
    %1 = vector.load %arg2[%c0_1, %c0_2] : memref<128x2xf32, #tpu.memory_space<vmem>>, vector<128x2xf32>
    %cst = arith.constant dense<0.000000e+00> : vector<128x2xf32>
    %2 = tpu.matmul %0, %1, %cst {dimension_numbers = #tpu.dot_dimension_numbers<[1], [0], [0], [1], [0, 0, 1, 1], [], []>, precision = #tpu.contract_precision<fp32>} : vector<128x128xf32>, vector<128x2xf32>, vector<128x2xf32> -> vector<128x2xf32>
    %3 = arith.negf %2 : vector<128x2xf32>
    %4 = math.exp %3 : vector<128x2xf32>
    %cst_3 = arith.constant 1.000000e+00 : f32
    %5 = vector.broadcast %cst_3 : f32 to vector<128x2xf32>
    %6 = arith.addf %5, %4 : vector<128x2xf32>
    %7 = arith.divf %5, %6 : vector<128x2xf32>
    %c0_4 = arith.constant 0 : index
    %c0_5 = arith.constant 0 : index
    %8 = vector.load %arg3[%c0_4, %c0_5] : memref<2x128xf32, #tpu.memory_space<vmem>>, vector<2x128xf32>
    %cst_6 = arith.constant dense<0.000000e+00> : vector<128x128xf32>
    %9 = tpu.matmul %7, %8, %cst_6 {dimension_numbers = #tpu.dot_dimension_numbers<[1], [0], [0], [1], [0, 0, 1, 1], [], []>, precision = #tpu.contract_precision<fp32>} : vector<128x2xf32>, vector<2x128xf32>, vector<128x128xf32> -> vector<128x128xf32>
    %10 = arith.negf %9 : vector<128x128xf32>
    %11 = math.exp %10 : vector<128x128xf32>
    %cst_7 = arith.constant 1.000000e+00 : f32
    %12 = vector.broadcast %cst_7 : f32 to vector<128x128xf32>
    %13 = arith.addf %12, %11 : vector<128x128xf32>
    %14 = arith.divf %12, %13 : vector<128x128xf32>
    %15 = arith.mulf %0, %14 : vector<128x128xf32>
    %16 = tpu.concatenate %0, %15 in 0 : vector<128x128xf32>, vector<128x128xf32> -> vector<256x128xf32>
    %17 = arith.truncf %16 : vector<256x128xf32> to vector<256x128xbf16>
    %c0_8 = arith.constant 0 : index
    %c0_9 = arith.constant 0 : index
    %18 = vector.load %arg4[%c0_8, %c0_9] : memref<128x1024xbf16, #tpu.memory_space<vmem>>, vector<128x1024xbf16>
    %cst_10 = arith.constant dense<0.000000e+00> : vector<256x1024xf32>
    %19 = tpu.matmul %17, %18, %cst_10 {dimension_numbers = #tpu.dot_dimension_numbers<[1], [0], [0], [1], [0, 0, 1, 1], [], []>} : vector<256x128xbf16>, vector<128x1024xbf16>, vector<256x1024xf32> -> vector<256x1024xf32>
    %20 = tpu.concatenate %16, %16, %16, %16, %16, %16, %16, %16 in 1 : vector<256x128xf32>, vector<256x128xf32>, vector<256x128xf32>, vector<256x128xf32>, vector<256x128xf32>, vector<256x128xf32>, vector<256x128xf32>, vector<256x128xf32> -> vector<256x1024xf32>
    %21 = arith.mulf %19, %20 : vector<256x1024xf32>
    %22 = vector.extract_strided_slice %21 {offsets = [0, 0], sizes = [128, 1024], strides = [1, 1]} : vector<256x1024xf32> to vector<128x1024xf32>
    %23 = vector.extract_strided_slice %21 {offsets = [128, 0], sizes = [128, 1024], strides = [1, 1]} : vector<256x1024xf32> to vector<128x1024xf32>
    %24 = arith.truncf %22 : vector<128x1024xf32> to vector<128x1024xbf16>
    %c0_11 = arith.constant 0 : index
    %c0_12 = arith.constant 0 : index
    %25 = vector.load %arg5[%c0_11, %c0_12] : memref<1024x64xbf16, #tpu.memory_space<vmem>>, vector<1024x64xbf16>
    %cst_13 = arith.constant dense<0.000000e+00> : vector<128x64xf32>
    %26 = tpu.matmul %24, %25, %cst_13 {dimension_numbers = #tpu.dot_dimension_numbers<[1], [0], [0], [1], [0, 0, 1, 1], [], []>} : vector<128x1024xbf16>, vector<1024x64xbf16>, vector<128x64xf32> -> vector<128x64xf32>
    %27 = arith.truncf %23 : vector<128x1024xf32> to vector<128x1024xbf16>
    %c0_14 = arith.constant 0 : index
    %c0_15 = arith.constant 0 : index
    %28 = vector.load %arg6[%c0_14, %c0_15] : memref<1024x64xbf16, #tpu.memory_space<vmem>>, vector<1024x64xbf16>
    %cst_16 = arith.constant dense<0.000000e+00> : vector<128x64xf32>
    %29 = tpu.matmul %27, %28, %cst_16 {dimension_numbers = #tpu.dot_dimension_numbers<[1], [0], [0], [1], [0, 0, 1, 1], [], []>} : vector<128x1024xbf16>, vector<1024x64xbf16>, vector<128x64xf32> -> vector<128x64xf32>
    %30 = arith.addf %26, %29 : vector<128x64xf32>
    %c0_17 = arith.constant 0 : index
    %c0_18 = arith.constant 0 : index
    %31 = vector.load %arg7[%c0_17, %c0_18] : memref<1x64xf32, #tpu.memory_space<vmem>>, vector<1x64xf32>
    %32 = vector.broadcast %31 : vector<1x64xf32> to vector<128x64xf32>
    %33 = arith.addf %30, %32 : vector<128x64xf32>
    %cst_19 = arith.constant 0.000000e+00 : f32
    %34 = vector.broadcast %cst_19 : f32 to vector<128x64xf32>
    %35 = arith.maximumf %33, %34 : vector<128x64xf32>
    %36 = arith.truncf %35 : vector<128x64xf32> to vector<128x64xbf16>
    %c0_20 = arith.constant 0 : index
    %c0_21 = arith.constant 0 : index
    %37 = vector.load %arg8[%c0_20, %c0_21] : memref<64x32xbf16, #tpu.memory_space<vmem>>, vector<64x32xbf16>
    %cst_22 = arith.constant dense<0.000000e+00> : vector<128x32xf32>
    %38 = tpu.matmul %36, %37, %cst_22 {dimension_numbers = #tpu.dot_dimension_numbers<[1], [0], [0], [1], [0, 0, 1, 1], [], []>} : vector<128x64xbf16>, vector<64x32xbf16>, vector<128x32xf32> -> vector<128x32xf32>
    %c0_23 = arith.constant 0 : index
    %c0_24 = arith.constant 0 : index
    %39 = vector.load %arg9[%c0_23, %c0_24] : memref<1x32xf32, #tpu.memory_space<vmem>>, vector<1x32xf32>
    %40 = vector.broadcast %39 : vector<1x32xf32> to vector<128x32xf32>
    %41 = arith.addf %38, %40 : vector<128x32xf32>
    %cst_25 = arith.constant 0.000000e+00 : f32
    %42 = vector.broadcast %cst_25 : f32 to vector<128x32xf32>
    %43 = arith.maximumf %41, %42 : vector<128x32xf32>
    %c0_26 = arith.constant 0 : index
    %c0_27 = arith.constant 0 : index
    %44 = vector.load %arg10[%c0_26, %c0_27] : memref<1x32xf32, #tpu.memory_space<vmem>>, vector<1x32xf32>
    %45 = vector.broadcast %44 : vector<1x32xf32> to vector<128x32xf32>
    %46 = arith.mulf %43, %45 : vector<128x32xf32>
    %cst_28 = arith.constant dense<0.000000e+00> : vector<128xf32>
    %47 = vector.multi_reduction <add>, %46, %cst_28 [1] : vector<128x32xf32> to vector<128xf32>
    %48 = vector.shape_cast %47 : vector<128xf32> to vector<128x1xf32>
    %c0_29 = arith.constant 0 : index
    %c0_30 = arith.constant 0 : index
    %49 = memref.load %arg11[%c0_29, %c0_30] : memref<1x1xf32, #tpu.memory_space<smem>>
    %50 = vector.broadcast %49 : f32 to vector<128x1xf32>
    %51 = arith.addf %48, %50 : vector<128x1xf32>
    %52 = arith.negf %51 : vector<128x1xf32>
    %53 = math.exp %52 : vector<128x1xf32>
    %cst_31 = arith.constant 1.000000e+00 : f32
    %54 = vector.broadcast %cst_31 : f32 to vector<128x1xf32>
    %55 = arith.addf %54, %53 : vector<128x1xf32>
    %56 = arith.divf %54, %55 : vector<128x1xf32>
    %c0_32 = arith.constant 0 : index
    %c0_33 = arith.constant 0 : index
    %57 = vector.load %arg12[%c0_32, %c0_33] : memref<128x1xf32, #tpu.memory_space<vmem>>, vector<128x1xf32>
    tpu.vector_store %arg12[%c0_32, %c0_33], %56 {strides = array<i32>} : memref<128x1xf32, #tpu.memory_space<vmem>>, vector<128x1xf32>,
    return
  }
  func.func @transform_0(%arg0: i32) -> (i32, i32) {
    %c0_i32 = arith.constant 0 : i32
    %c0_i32_0 = arith.constant 0 : i32
    return %arg0, %c0_i32 : i32, i32
  }
  func.func @transform_1(%arg0: i32) -> (i32, i32) {
    %c0_i32 = arith.constant 0 : i32
    %c0_i32_0 = arith.constant 0 : i32
    %c0_i32_1 = arith.constant 0 : i32
    return %c0_i32, %c0_i32_0 : i32, i32
  }
  func.func @transform_2(%arg0: i32) -> (i32, i32) {
    %c0_i32 = arith.constant 0 : i32
    %c0_i32_0 = arith.constant 0 : i32
    %c0_i32_1 = arith.constant 0 : i32
    return %c0_i32, %c0_i32_0 : i32, i32
  }
  func.func @transform_3(%arg0: i32) -> (i32, i32) {
    %c0_i32 = arith.constant 0 : i32
    %c0_i32_0 = arith.constant 0 : i32
    %c0_i32_1 = arith.constant 0 : i32
    return %c0_i32, %c0_i32_0 : i32, i32
  }
  func.func @transform_4(%arg0: i32) -> (i32, i32) {
    %c0_i32 = arith.constant 0 : i32
    %c0_i32_0 = arith.constant 0 : i32
    %c0_i32_1 = arith.constant 0 : i32
    return %c0_i32, %c0_i32_0 : i32, i32
  }
  func.func @transform_5(%arg0: i32) -> (i32, i32) {
    %c0_i32 = arith.constant 0 : i32
    %c0_i32_0 = arith.constant 0 : i32
    %c0_i32_1 = arith.constant 0 : i32
    return %c0_i32, %c0_i32_0 : i32, i32
  }
  func.func @transform_6(%arg0: i32) -> (i32, i32) {
    %c0_i32 = arith.constant 0 : i32
    %c0_i32_0 = arith.constant 0 : i32
    %c0_i32_1 = arith.constant 0 : i32
    return %c0_i32, %c0_i32_0 : i32, i32
  }
  func.func @transform_7(%arg0: i32) -> (i32, i32) {
    %c0_i32 = arith.constant 0 : i32
    %c0_i32_0 = arith.constant 0 : i32
    %c0_i32_1 = arith.constant 0 : i32
    return %c0_i32, %c0_i32_0 : i32, i32
  }
  func.func @transform_8(%arg0: i32) -> (i32, i32) {
    %c0_i32 = arith.constant 0 : i32
    %c0_i32_0 = arith.constant 0 : i32
    %c0_i32_1 = arith.constant 0 : i32
    return %c0_i32, %c0_i32_0 : i32, i32
  }
  func.func @transform_9(%arg0: i32) -> (i32, i32) {
    %c0_i32 = arith.constant 0 : i32
    %c0_i32_0 = arith.constant 0 : i32
    %c0_i32_1 = arith.constant 0 : i32
    return %c0_i32, %c0_i32_0 : i32, i32
  }
  func.func @transform_10(%arg0: i32) -> (i32, i32) {
    %c0_i32 = arith.constant 0 : i32
    %c0_i32_0 = arith.constant 0 : i32
    %c0_i32_1 = arith.constant 0 : i32
    return %c0_i32, %c0_i32_0 : i32, i32
  }
  func.func @transform_11(%arg0: i32) -> (i32, i32) {
    %c0_i32 = arith.constant 0 : i32
    %c0_i32_0 = arith.constant 0 : i32
    return %arg0, %c0_i32 : i32, i32
  }
}

</mosaic_0001>

<llo_original>
// kernel: tpu_custom_call.1
$region0: #{tpu_custom_call.1}
  #allocation0 [shape = 'u32[]', space=smem, size = 0x4, offset = 0x4, fixed_abs, tag = 'smem constant byte address 0x4 - core index']
  #allocation1 [shape = 'u32[72,128]{1,0:T(1,128)}', space=vmem, size = 0x9000, scoped, tag = 'internal scratch']
  #allocation2 [shape = 'f32[1,1]{1,0:T(1,128)S(6)}', space=smem, size = 0x200, scoped, tag = 'scoped memory for tpu_custom_call.1']
  %s0 = inlined_call_operand.vmem [shape: f32[256,128], index: 0, kind: input, shape index: {}]
  %s1 = inlined_call_operand.vmem [shape: f32[128,2], index: 1, kind: input, shape index: {}]
  %s2 = inlined_call_operand.vmem [shape: f32[2,128], index: 2, kind: input, shape index: {}]
  %s3 = inlined_call_operand.vmem [shape: bf16[128,1024], index: 3, kind: input, shape index: {}]
  %s4 = inlined_call_operand.vmem [shape: bf16[1024,64], index: 4, kind: input, shape index: {}]
  %s5 = inlined_call_operand.vmem [shape: bf16[1024,64], index: 5, kind: input, shape index: {}]
  %s6 = inlined_call_operand.vmem [shape: f32[1,64], index: 6, kind: input, shape index: {}]
  %s7 = inlined_call_operand.vmem [shape: bf16[64,32], index: 7, kind: input, shape index: {}]
  %s8 = inlined_call_operand.vmem [shape: f32[1,32], index: 8, kind: input, shape index: {}]
  %s9 = inlined_call_operand.vmem [shape: f32[1,32], index: 9, kind: input, shape index: {}]
  %s10 = inlined_call_operand.<no memory space> [shape: f32[1,1], index: 10, kind: input, shape index: {}]
  %s11 = inlined_call_operand.vmem [shape: f32[256,1], index: 11, kind: output, shape index: {}]
  %s12 = sld [smem:[#allocation0]]
  $region77: #{tpu_custom_call.1} parent=0
    _
  %s14 = ssub.s32 1, %s12
  %s15 = scalar_select 0, %s14, %s12
  %16 = sst [smem:[#allocation2]] %s10
  loop: start=0, step=1, limit=4
  $region2: #{tpu_custom_call.1} parent=0 // loop_pre_header
    _
  $region3: #{tpu_custom_call.1} parent=0 // loop_header
    %s18 = sphi 0, %s22
    %p19 = scmp.ge.s32.totalorder %s18, 4
    %s28 = sphi 0, %s30
    %s31 = sphi 0, %s28
    %s32 = sphi 0, %s31
    %s48 = sphi 0, %s32
    %s52 = sphi 0, %s52
    %s54 = sphi 0, %s52
    %s55 = sphi 0, %s54
    %s69 = sphi 0, %s55
    %s73 = sphi 0, %s73
    %s75 = sphi 0, %s73
    %s76 = sphi 0, %s75
    %s90 = sphi 0, %s76
    %s94 = sphi 0, %s94
    %s96 = sphi 0, %s94
    %s97 = sphi 0, %s96
    %s111 = sphi 0, %s97
    %s115 = sphi 0, %s115
    %s117 = sphi 0, %s115
    %s118 = sphi 0, %s117
    %s132 = sphi 0, %s118
    %s136 = sphi 0, %s136
    %s138 = sphi 0, %s136
    %s139 = sphi 0, %s138
    %s153 = sphi 0, %s139
    %s157 = sphi 0, %s157
    %s159 = sphi 0, %s157
    %s160 = sphi 0, %s159
    %s174 = sphi 0, %s160
    %s178 = sphi 0, %s178
    %s180 = sphi 0, %s178
    %s181 = sphi 0, %s180
    %s195 = sphi 0, %s181
    %s199 = sphi 0, %s199
    %s201 = sphi 0, %s199
    %s202 = sphi 0, %s201
    %s216 = sphi 0, %s202
    %s220 = sphi 0, %s220
    %s222 = sphi 0, %s220
    %s223 = sphi 0, %s222
    %s237 = sphi 0, %s223
    %s241 = sphi 0, %s241
    %s243 = sphi 0, %s241
    %s244 = sphi 0, %s243
    %s258 = sphi 0, %s244
    %s264 = sphi 0, %s266
    %s267 = sphi 0, %s264
    %s268 = sphi 0, %s267
    %s284 = sphi 0, %s268
  $region4: #{tpu_custom_call.1} parent=0 // loop_header_branch
    %21 = sbr.rel (%p19) target = $region8
  $region5: #{tpu_custom_call.1} parent=0 // loop_body
    %s23 = ssub.s32 %s18, 1
    %s24 = ssub.s32 %s18, 2
    %s25 = sadd.s32 %s18, 1
    %s26 = ssub.s32 %s18, %s25
    %p27 = scmp.eq.s32.totalorder %s26, 0
    %s29 = sadd.s32 %s28, 1
    %s30 = scalar_select %p27, %s28, %s29
    %p33 = pneg %p27
    %p34 = scmp.eq.s32.totalorder %s18, 1
    %p35 = por %p33, %p34
    %p36 = scmp.ne.s32.totalorder %s28, %s31
    %p37 = scmp.eq.s32.totalorder %s18, 0
    %p38 = por %p36, %p37
    %p39 = scmp.ne.s32.totalorder %s28, %s31
    %p40 = scmp.eq.s32.totalorder %s23, 1
    %p41 = por %p39, %p40
    %p42 = scmp.ne.s32.totalorder %s31, %s32
    %p43 = scmp.eq.s32.totalorder %s23, 0
    %p44 = por %p42, %p43
    %p45 = scmp.ne.s32.totalorder %s31, %s32
    %p46 = scmp.eq.s32.totalorder %s24, 1
    %p47 = por %p45, %p46
    %p49 = scmp.ne.s32.totalorder %s32, %s48
    %p50 = scmp.eq.s32.totalorder %s24, 0
    %p51 = por %p49, %p50
    %s53 = sadd.s32 %s52, 1
    %p56 = scmp.eq.s32.totalorder %s18, 1
    %p57 = scmp.ne.s32.totalorder %s52, %s54
    %p58 = scmp.eq.s32.totalorder %s18, 0
    %p59 = por %p57, %p58
    %p60 = scmp.ne.s32.totalorder %s52, %s54
    %p61 = scmp.eq.s32.totalorder %s23, 1
    %p62 = por %p60, %p61
    %p63 = scmp.ne.s32.totalorder %s54, %s55
    %p64 = scmp.eq.s32.totalorder %s23, 0
    %p65 = por %p63, %p64
    %p66 = scmp.ne.s32.totalorder %s54, %s55
    %p67 = scmp.eq.s32.totalorder %s24, 1
    %p68 = por %p66, %p67
    %p70 = scmp.ne.s32.totalorder %s55, %s69
    %p71 = scmp.eq.s32.totalorder %s24, 0
    %p72 = por %p70, %p71
    %s74 = sadd.s32 %s73, 1
    %p77 = scmp.eq.s32.totalorder %s18, 1
    %p78 = scmp.ne.s32.totalorder %s73, %s75
    %p79 = scmp.eq.s32.totalorder %s18, 0
    %p80 = por %p78, %p79
    %p81 = scmp.ne.s32.totalorder %s73, %s75
    %p82 = scmp.eq.s32.totalorder %s23, 1
    %p83 = por %p81, %p82
    %p84 = scmp.ne.s32.totalorder %s75, %s76
    %p85 = scmp.eq.s32.totalorder %s23, 0
    %p86 = por %p84, %p85
    %p87 = scmp.ne.s32.totalorder %s75, %s76
    %p88 = scmp.eq.s32.totalorder %s24, 1
    %p89 = por %p87, %p88
    %p91 = scmp.ne.s32.totalorder %s76, %s90
    %p92 = scmp.eq.s32.totalorder %s24, 0
    %p93 = por %p91, %p92
    %s95 = sadd.s32 %s94, 1
    %p98 = scmp.eq.s32.totalorder %s18, 1
    %p99 = scmp.ne.s32.totalorder %s94, %s96
    %p100 = scmp.eq.s32.totalorder %s18, 0
    %p101 = por %p99, %p100
    %p102 = scmp.ne.s32.totalorder %s94, %s96
    %p103 = scmp.eq.s32.totalorder %s23, 1
    %p104 = por %p102, %p103
    %p105 = scmp.ne.s32.totalorder %s96, %s97
    %p106 = scmp.eq.s32.totalorder %s23, 0
    %p107 = por %p105, %p106
    %p108 = scmp.ne.s32.totalorder %s96, %s97
    %p109 = scmp.eq.s32.totalorder %s24, 1
    %p110 = por %p108, %p109
    %p112 = scmp.ne.s32.totalorder %s97, %s111
    %p113 = scmp.eq.s32.totalorder %s24, 0
    %p114 = por %p112, %p113
    %s116 = sadd.s32 %s115, 1
    %p119 = scmp.eq.s32.totalorder %s18, 1
    %p120 = scmp.ne.s32.totalorder %s115, %s117
    %p121 = scmp.eq.s32.totalorder %s18, 0
    %p122 = por %p120, %p121
    %p123 = scmp.ne.s32.totalorder %s115, %s117
    %p124 = scmp.eq.s32.totalorder %s23, 1
    %p125 = por %p123, %p124
    %p126 = scmp.ne.s32.totalorder %s117, %s118
    %p127 = scmp.eq.s32.totalorder %s23, 0
    %p128 = por %p126, %p127
    %p129 = scmp.ne.s32.totalorder %s117, %s118
    %p130 = scmp.eq.s32.totalorder %s24, 1
    %p131 = por %p129, %p130
    %p133 = scmp.ne.s32.totalorder %s118, %s132
    %p134 = scmp.eq.s32.totalorder %s24, 0
    %p135 = por %p133, %p134
    %s137 = sadd.s32 %s136, 1
    %p140 = scmp.eq.s32.totalorder %s18, 1
    %p141 = scmp.ne.s32.totalorder %s136, %s138
    %p142 = scmp.eq.s32.totalorder %s18, 0
    %p143 = por %p141, %p142
    %p144 = scmp.ne.s32.totalorder %s136, %s138
    %p145 = scmp.eq.s32.totalorder %s23, 1
    %p146 = por %p144, %p145
    %p147 = scmp.ne.s32.totalorder %s138, %s139
    %p148 = scmp.eq.s32.totalorder %s23, 0
    %p149 = por %p147, %p148
    %p150 = scmp.ne.s32.totalorder %s138, %s139
    %p151 = scmp.eq.s32.totalorder %s24, 1
    %p152 = por %p150, %p151
    %p154 = scmp.ne.s32.totalorder %s139, %s153
    %p155 = scmp.eq.s32.totalorder %s24, 0
    %p156 = por %p154, %p155
    %s158 = sadd.s32 %s157, 1
    %p161 = scmp.eq.s32.totalorder %s18, 1
    %p162 = scmp.ne.s32.totalorder %s157, %s159
    %p163 = scmp.eq.s32.totalorder %s18, 0
    %p164 = por %p162, %p163
    %p165 = scmp.ne.s32.totalorder %s157, %s159
    %p166 = scmp.eq.s32.totalorder %s23, 1
    %p167 = por %p165, %p166
    %p168 = scmp.ne.s32.totalorder %s159, %s160
    %p169 = scmp.eq.s32.totalorder %s23, 0
    %p170 = por %p168, %p169
    %p171 = scmp.ne.s32.totalorder %s159, %s160
    %p172 = scmp.eq.s32.totalorder %s24, 1
    %p173 = por %p171, %p172
    %p175 = scmp.ne.s32.totalorder %s160, %s174
    %p176 = scmp.eq.s32.totalorder %s24, 0
    %p177 = por %p175, %p176
    %s179 = sadd.s32 %s178, 1
    %p182 = scmp.eq.s32.totalorder %s18, 1
    %p183 = scmp.ne.s32.totalorder %s178, %s180
    %p184 = scmp.eq.s32.totalorder %s18, 0
    %p185 = por %p183, %p184
    %p186 = scmp.ne.s32.totalorder %s178, %s180
    %p187 = scmp.eq.s32.totalorder %s23, 1
    %p188 = por %p186, %p187
    %p189 = scmp.ne.s32.totalorder %s180, %s181
    %p190 = scmp.eq.s32.totalorder %s23, 0
    %p191 = por %p189, %p190
    %p192 = scmp.ne.s32.totalorder %s180, %s181
    %p193 = scmp.eq.s32.totalorder %s24, 1
    %p194 = por %p192, %p193
    %p196 = scmp.ne.s32.totalorder %s181, %s195
    %p197 = scmp.eq.s32.totalorder %s24, 0
    %p198 = por %p196, %p197
    %s200 = sadd.s32 %s199, 1
    %p203 = scmp.eq.s32.totalorder %s18, 1
    %p204 = scmp.ne.s32.totalorder %s199, %s201
    %p205 = scmp.eq.s32.totalorder %s18, 0
    %p206 = por %p204, %p205
    %p207 = scmp.ne.s32.totalorder %s199, %s201
    %p208 = scmp.eq.s32.totalorder %s23, 1
    %p209 = por %p207, %p208
    %p210 = scmp.ne.s32.totalorder %s201, %s202
    %p211 = scmp.eq.s32.totalorder %s23, 0
    %p212 = por %p210, %p211
    %p213 = scmp.ne.s32.totalorder %s201, %s202
    %p214 = scmp.eq.s32.totalorder %s24, 1
    %p215 = por %p213, %p214
    %p217 = scmp.ne.s32.totalorder %s202, %s216
    %p218 = scmp.eq.s32.totalorder %s24, 0
    %p219 = por %p217, %p218
    %s221 = sadd.s32 %s220, 1
    %p224 = scmp.eq.s32.totalorder %s18, 1
    %p225 = scmp.ne.s32.totalorder %s220, %s222
    %p226 = scmp.eq.s32.totalorder %s18, 0
    %p227 = por %p225, %p226
    %p228 = scmp.ne.s32.totalorder %s220, %s222
    %p229 = scmp.eq.s32.totalorder %s23, 1
    %p230 = por %p228, %p229
    %p231 = scmp.ne.s32.totalorder %s222, %s223
    %p232 = scmp.eq.s32.totalorder %s23, 0
    %p233 = por %p231, %p232
    %p234 = scmp.ne.s32.totalorder %s222, %s223
    %p235 = scmp.eq.s32.totalorder %s24, 1
    %p236 = por %p234, %p235
    %p238 = scmp.ne.s32.totalorder %s223, %s237
    %p239 = scmp.eq.s32.totalorder %s24, 0
    %p240 = por %p238, %p239
    %s242 = sadd.s32 %s241, 1
    %p245 = scmp.eq.s32.totalorder %s18, 1
    %p246 = scmp.ne.s32.totalorder %s241, %s243
    %p247 = scmp.eq.s32.totalorder %s18, 0
    %p248 = por %p246, %p247
    %p249 = scmp.ne.s32.totalorder %s241, %s243
    %p250 = scmp.eq.s32.totalorder %s23, 1
    %p251 = por %p249, %p250
    %p252 = scmp.ne.s32.totalorder %s243, %s244
    %p253 = scmp.eq.s32.totalorder %s23, 0
    %p254 = por %p252, %p253
    %p255 = scmp.ne.s32.totalorder %s243, %s244
    %p256 = scmp.eq.s32.totalorder %s24, 1
    %p257 = por %p255, %p256
    %p259 = scmp.ne.s32.totalorder %s244, %s258
    %p260 = scmp.eq.s32.totalorder %s24, 0
    %p261 = por %p259, %p260
    %s262 = ssub.s32 %s18, %s25
    %p263 = scmp.eq.s32.totalorder %s262, 0
    %s265 = sadd.s32 %s264, 1
    %s266 = scalar_select %p263, %s264, %s265
    %p269 = pneg %p263
    %p270 = scmp.eq.s32.totalorder %s18, 1
    %p271 = por %p269, %p270
    %p272 = scmp.ne.s32.totalorder %s264, %s267
    %p273 = scmp.eq.s32.totalorder %s18, 0
    %p274 = por %p272, %p273
    %p275 = scmp.ne.s32.totalorder %s264, %s267
    %p276 = scmp.eq.s32.totalorder %s23, 1
    %p277 = por %p275, %p276
    %p278 = scmp.ne.s32.totalorder %s267, %s268
    %p279 = scmp.eq.s32.totalorder %s23, 0
    %p280 = por %p278, %p279
    %p281 = scmp.ne.s32.totalorder %s267, %s268
    %p282 = scmp.eq.s32.totalorder %s24, 1
    %p283 = por %p281, %p282
    %p285 = scmp.ne.s32.totalorder %s268, %s284
    %p286 = scmp.eq.s32.totalorder %s24, 0
    %p287 = por %p285, %p286
    %p288 = scmp.le.s32.totalorder 1, %s18
    %p289 = scmp.lt.s32.totalorder %s18, 3
    %p290 = pnand %p288, %p289
    %p291 = pneg %p290
    // Predicated region
    $region9: #{tpu_custom_call.1} parent=5 // pred_check
      _
    $region10: #{tpu_custom_call.1} parent=5 // pred_check_branch
      %293 = sbr.rel (%p290) target = $region12
    $region11: #{tpu_custom_call.1} parent=5 // pred_region
      %s294 = ssub.s32 %s18, 1
      // Predicated region
      $region13: #{tpu_custom_call.1} parent=11 // pred_check
        %p295 = pneg %p65
      $region14: #{tpu_custom_call.1} parent=11 // pred_check_branch
        %297 = sbr.rel (%p295) target = $region16
      $region15: #{tpu_custom_call.1} parent=11 // pred_region
        _
      $region16: #{tpu_custom_call.1} parent=11 // pred_fallthru
        _
      // Predicated region
      $region17: #{tpu_custom_call.1} parent=11 // pred_check
        %p298 = pneg %p86
      $region18: #{tpu_custom_call.1} parent=11 // pred_check_branch
        %300 = sbr.rel (%p298) target = $region20
      $region19: #{tpu_custom_call.1} parent=11 // pred_region
        _
      $region20: #{tpu_custom_call.1} parent=11 // pred_fallthru
        _
      // Predicated region
      $region21: #{tpu_custom_call.1} parent=11 // pred_check
        %p301 = pneg %p107
      $region22: #{tpu_custom_call.1} parent=11 // pred_check_branch
        %303 = sbr.rel (%p301) target = $region24
      $region23: #{tpu_custom_call.1} parent=11 // pred_region
        _
      $region24: #{tpu_custom_call.1} parent=11 // pred_fallthru
        _
      // Predicated region
      $region25: #{tpu_custom_call.1} parent=11 // pred_check
        %p304 = pneg %p128
      $region26: #{tpu_custom_call.1} parent=11 // pred_check_branch
        %306 = sbr.rel (%p304) target = $region28
      $region27: #{tpu_custom_call.1} parent=11 // pred_region
        _
      $region28: #{tpu_custom_call.1} parent=11 // pred_fallthru
        _
      // Predicated region
      $region29: #{tpu_custom_call.1} parent=11 // pred_check
        %p307 = pneg %p149
      $region30: #{tpu_custom_call.1} parent=11 // pred_check_branch
        %309 = sbr.rel (%p307) target = $region32
      $region31: #{tpu_custom_call.1} parent=11 // pred_region
        _
      $region32: #{tpu_custom_call.1} parent=11 // pred_fallthru
        _
      // Predicated region
      $region33: #{tpu_custom_call.1} parent=11 // pred_check
        %p310 = pneg %p170
      $region34: #{tpu_custom_call.1} parent=11 // pred_check_branch
        %312 = sbr.rel (%p310) target = $region36
      $region35: #{tpu_custom_call.1} parent=11 // pred_region
        _
      $region36: #{tpu_custom_call.1} parent=11 // pred_fallthru
        _
      // Predicated region
      $region37: #{tpu_custom_call.1} parent=11 // pred_check
        %p313 = pneg %p191
      $region38: #{tpu_custom_call.1} parent=11 // pred_check_branch
        %315 = sbr.rel (%p313) target = $region40
      $region39: #{tpu_custom_call.1} parent=11 // pred_region
        _
      $region40: #{tpu_custom_call.1} parent=11 // pred_fallthru
        _
      // Predicated region
      $region41: #{tpu_custom_call.1} parent=11 // pred_check
        %p316 = pneg %p212
      $region42: #{tpu_custom_call.1} parent=11 // pred_check_branch
        %318 = sbr.rel (%p316) target = $region44
      $region43: #{tpu_custom_call.1} parent=11 // pred_region
        _
      $region44: #{tpu_custom_call.1} parent=11 // pred_fallthru
        _
      // Predicated region
      $region45: #{tpu_custom_call.1} parent=11 // pred_check
        %p319 = pneg %p233
      $region46: #{tpu_custom_call.1} parent=11 // pred_check_branch
        %321 = sbr.rel (%p319) target = $region48
      $region47: #{tpu_custom_call.1} parent=11 // pred_region
        _
      $region48: #{tpu_custom_call.1} parent=11 // pred_fallthru
        _
      // Predicated region
      $region49: #{tpu_custom_call.1} parent=11 // pred_check
        %p322 = pneg %p254
      $region50: #{tpu_custom_call.1} parent=11 // pred_check_branch
        %324 = sbr.rel (%p322) target = $region52
      $region51: #{tpu_custom_call.1} parent=11 // pred_region
        _
      $region52: #{tpu_custom_call.1} parent=11 // pred_fallthru
        _
    $region12: #{tpu_custom_call.1} parent=5 // pred_fallthru
      _
    %p325 = scmp.lt.s32.totalorder %s18, 2
    // Predicated region
    $region53: #{tpu_custom_call.1} parent=5 // pred_check
      %p326 = pneg %p325
    $region54: #{tpu_custom_call.1} parent=5 // pred_check_branch
      %328 = sbr.rel (%p326) target = $region56
    $region55: #{tpu_custom_call.1} parent=5 // pred_region
      // Predicated region
      $region57: #{tpu_custom_call.1} parent=55 // pred_check
        %p329 = pneg %p38
      $region58: #{tpu_custom_call.1} parent=55 // pred_check_branch
        %331 = sbr.rel (%p329) target = $region60
      $region59: #{tpu_custom_call.1} parent=55 // pred_region
        %s332 = smul.u32 16, %s18
        %p333 = scmp.lt.s32.totalorder %s332, 31
        %s334 = scalar_select %p333, %s332, 31
        %s335 = smul.addr %s334, 8
        %s336 = scalar_lea.vmem %s0, %s335
        %s337 = smul.u32 16, %s18
      $region60: #{tpu_custom_call.1} parent=55 // pred_fallthru
        _
    $region56: #{tpu_custom_call.1} parent=5 // pred_fallthru
      _
    %p338 = scmp.le.s32.totalorder 1, %s18
    %p339 = scmp.lt.s32.totalorder %s18, 3
    %p340 = pnand %p338, %p339
    %p341 = pneg %p340
    // Predicated region
    $region61: #{tpu_custom_call.1} parent=5 // pred_check
      _
    $region62: #{tpu_custom_call.1} parent=5 // pred_check_branch
      %343 = sbr.rel (%p340) target = $region64
    $region63: #{tpu_custom_call.1} parent=5 // pred_region
      %s344 = ssub.s32 %s18, 1
      %s345 = smul.u32 16, %s23
      %p346 = scmp.lt.s32.totalorder %s345, 31
      %s347 = scalar_select %p346, %s345, 31
      %s348 = smul.addr %s347, 8
      %s349 = scalar_lea.vmem %s0, %s348
      %p350 = pneg %p44
      %p351 = pneg %p41
      %p352 = pneg %p65
      %p353 = pneg %p62
      %p354 = pneg %p86
      %p355 = pneg %p83
      %p356 = pneg %p107
      %p357 = pneg %p104
      %p358 = pneg %p128
      %p359 = pneg %p125
      %p360 = pneg %p149
      %p361 = pneg %p146
      %p362 = pneg %p170
      %p363 = pneg %p167
      %p364 = pneg %p191
      %p365 = pneg %p188
      %p366 = pneg %p212
      %p367 = pneg %p209
      %p368 = pneg %p233
      %p369 = pneg %p230
      %p370 = pneg %p254
      %p371 = pneg %p251
      %p372 = pneg %p280
      %p373 = pneg %p277
      %s374 = smul.u32 16, %s23
      %p375 = scmp.lt.s32.totalorder %s374, 31
      %s376 = scalar_select %p375, %s374, 31
      %s377 = smul.addr %s376, 8
      %s378 = scalar_lea.vmem %s11, %s377
      %s379 = smul.u32 16, %s23
      %p380 = scmp.lt.s32.totalorder %s379, 31
      %s381 = scalar_select %p380, %s379, 31
      %s382 = smul.addr %s381, 8
      %s383 = scalar_lea.vmem %s0, %s382
      %s384 = smul.u32 16, %s23
      %s385 = smul.u32 16, %s23
      %p386 = scmp.lt.s32.totalorder %s385, 31
      %s387 = scalar_select %p386, %s385, 31
      %s388 = smul.addr %s387, 8
      %s389 = scalar_lea.vmem %s11, %s388
      %s390 = smul.u32 16, %s23
      %v392 = vld [vmem:[%s383] sm:$0xff]
      %v393 = vld [vmem:[%s383 + $0x8] sm:$0xff]
      %v394 = vld [vmem:[%s383 + $0x10] sm:$0xff]
      %v395 = vld [vmem:[%s383 + $0x18] sm:$0xff]
      %v396 = vld [vmem:[%s383 + $0x20] sm:$0xff]
      %v397 = vld [vmem:[%s383 + $0x28] sm:$0xff]
      %v398 = vld [vmem:[%s383 + $0x30] sm:$0xff]
      %v399 = vld [vmem:[%s383 + $0x38] sm:$0xff]
      %v400 = vld [vmem:[%s383 + $0x40] sm:$0xff]
      %v401 = vld [vmem:[%s383 + $0x48] sm:$0xff]
      %v402 = vld [vmem:[%s383 + $0x50] sm:$0xff]
      %v403 = vld [vmem:[%s383 + $0x58] sm:$0xff]
      %v404 = vld [vmem:[%s383 + $0x60] sm:$0xff]
      %v405 = vld [vmem:[%s383 + $0x68] sm:$0xff]
      %v406 = vld [vmem:[%s383 + $0x70] sm:$0xff]
      %v407 = vld [vmem:[%s383 + $0x78] sm:$0xff]
      %v408 = vld [vmem:[%s1] sm:$0xff]
      %v409 = vld [vmem:[%s1 + $0x8] sm:$0xff]
      %v410 = vld [vmem:[%s1 + $0x10] sm:$0xff]
      %v411 = vld [vmem:[%s1 + $0x18] sm:$0xff]
      %v412 = vld [vmem:[%s1 + $0x20] sm:$0xff]
      %v413 = vld [vmem:[%s1 + $0x28] sm:$0xff]
      %v414 = vld [vmem:[%s1 + $0x30] sm:$0xff]
      %v415 = vld [vmem:[%s1 + $0x38] sm:$0xff]
      %v416 = vld [vmem:[%s1 + $0x40] sm:$0xff]
      %v417 = vld [vmem:[%s1 + $0x48] sm:$0xff]
      %v418 = vld [vmem:[%s1 + $0x50] sm:$0xff]
      %v419 = vld [vmem:[%s1 + $0x58] sm:$0xff]
      %v420 = vld [vmem:[%s1 + $0x60] sm:$0xff]
      %v421 = vld [vmem:[%s1 + $0x68] sm:$0xff]
      %v422 = vld [vmem:[%s1 + $0x70] sm:$0xff]
      %v423 = vld [vmem:[%s1 + $0x78] sm:$0xff]
      %v424 = vand.u32 %v423, 4294901760
      %425 = vmatpush.msra.mxu0 %v424
      %v426 = vand.u32 %v422, 4294901760
      %427 = vmatpush.msra.mxu0 %v426
      %v428 = vand.u32 %v421, 4294901760
      %429 = vmatpush.msra.mxu0 %v428
      %v430 = vand.u32 %v420, 4294901760
      %431 = vmatpush.msra.mxu0 %v430
      %v432 = vand.u32 %v419, 4294901760
      %433 = vmatpush.msra.mxu0 %v432
      %v434 = vand.u32 %v418, 4294901760
      %435 = vmatpush.msra.mxu0 %v434
      %v436 = vand.u32 %v417, 4294901760
      %437 = vmatpush.msra.mxu0 %v436
      %v438 = vand.u32 %v416, 4294901760
      %439 = vmatpush.msra.mxu0 %v438
      %v440 = vand.u32 %v415, 4294901760
      %441 = vmatpush.msra.mxu0 %v440
      %v442 = vand.u32 %v414, 4294901760
      %443 = vmatpush.msra.mxu0 %v442
      %v444 = vand.u32 %v413, 4294901760
      %445 = vmatpush.msra.mxu0 %v444
      %v446 = vand.u32 %v412, 4294901760
      %447 = vmatpush.msra.mxu0 %v446
      %v448 = vand.u32 %v411, 4294901760
      %449 = vmatpush.msra.mxu0 %v448
      %v450 = vand.u32 %v410, 4294901760
      %451 = vmatpush.msra.mxu0 %v450
      %v452 = vand.u32 %v409, 4294901760
      %453 = vmatpush.msra.mxu0 %v452
      %v454 = vand.u32 %v408, 4294901760
      %455 = vmatpush.msra.mxu0 %v454
      %v456 = vand.u32 %v392, 4294901760
      %v457 = vsub.f32 %v392, %v456
      %v458 = vand.u32 %v457, 4294901760
      %v459 = vsub.f32 %v457, %v458
      %v460 = vand.u32 %v459, 4294901760
      %461 = vmatmul.f32.gmra.mxu0 %v460
      %v462 = vpop.f32.mrf.mxu0
      %v463 = vadd.f32 0.0, %v462
      %v464 = vand.u32 %v393, 4294901760
      %v465 = vsub.f32 %v393, %v464
      %v466 = vand.u32 %v465, 4294901760
      %v467 = vsub.f32 %v465, %v466
      %v468 = vand.u32 %v467, 4294901760
      %469 = vmatmul.f32.gmra.mxu0 %v468
      %v470 = vpop.f32.mrf.mxu0
      %v471 = vadd.f32 0.0, %v470
      %v472 = vand.u32 %v394, 4294901760
      %v473 = vsub.f32 %v394, %v472
      %v474 = vand.u32 %v473, 4294901760
      %v475 = vsub.f32 %v473, %v474
      %v476 = vand.u32 %v475, 4294901760
      %477 = vmatmul.f32.gmra.mxu0 %v476
      %v478 = vpop.f32.mrf.mxu0
      %v479 = vadd.f32 0.0, %v478
      %v480 = vand.u32 %v395, 4294901760
      %v481 = vsub.f32 %v395, %v480
      %v482 = vand.u32 %v481, 4294901760
      %v483 = vsub.f32 %v481, %v482
      %v484 = vand.u32 %v483, 4294901760
      %485 = vmatmul.f32.gmra.mxu0 %v484
      %v486 = vpop.f32.mrf.mxu0
      %v487 = vadd.f32 0.0, %v486
      %v488 = vand.u32 %v396, 4294901760
      %v489 = vsub.f32 %v396, %v488
      %v490 = vand.u32 %v489, 4294901760
      %v491 = vsub.f32 %v489, %v490
      %v492 = vand.u32 %v491, 4294901760
      %493 = vmatmul.f32.gmra.mxu0 %v492
      %v494 = vpop.f32.mrf.mxu0
      %v495 = vadd.f32 0.0, %v494
      %v496 = vand.u32 %v397, 4294901760
      %v497 = vsub.f32 %v397, %v496
      %v498 = vand.u32 %v497, 4294901760
      %v499 = vsub.f32 %v497, %v498
      %v500 = vand.u32 %v499, 4294901760
      %501 = vmatmul.f32.gmra.mxu0 %v500
      %v502 = vpop.f32.mrf.mxu0
      %v503 = vadd.f32 0.0, %v502
      %v504 = vand.u32 %v398, 4294901760
      %v505 = vsub.f32 %v398, %v504
      %v506 = vand.u32 %v505, 4294901760
      %v507 = vsub.f32 %v505, %v506
      %v508 = vand.u32 %v507, 4294901760
      %509 = vmatmul.f32.gmra.mxu0 %v508
      %v510 = vpop.f32.mrf.mxu0
      %v511 = vadd.f32 0.0, %v510
      %v512 = vand.u32 %v399, 4294901760
      %v513 = vsub.f32 %v399, %v512
      %v514 = vand.u32 %v513, 4294901760
      %v515 = vsub.f32 %v513, %v514
      %v516 = vand.u32 %v515, 4294901760
      %517 = vmatmul.f32.gmra.mxu0 %v516
      %v518 = vpop.f32.mrf.mxu0
      %v519 = vadd.f32 0.0, %v518
      %v520 = vand.u32 %v400, 4294901760
      %v521 = vsub.f32 %v400, %v520
      %v522 = vand.u32 %v521, 4294901760
      %v523 = vsub.f32 %v521, %v522
      %v524 = vand.u32 %v523, 4294901760
      %525 = vmatmul.f32.gmra.mxu0 %v524
      %v526 = vpop.f32.mrf.mxu0
      %v527 = vadd.f32 0.0, %v526
      %v528 = vand.u32 %v401, 4294901760
      %v529 = vsub.f32 %v401, %v528
      %v530 = vand.u32 %v529, 4294901760
      %v531 = vsub.f32 %v529, %v530
      %v532 = vand.u32 %v531, 4294901760
      %533 = vmatmul.f32.gmra.mxu0 %v532
      %v534 = vpop.f32.mrf.mxu0
      %v535 = vadd.f32 0.0, %v534
      %v536 = vand.u32 %v402, 4294901760
      %v537 = vsub.f32 %v402, %v536
      %v538 = vand.u32 %v537, 4294901760
      %v539 = vsub.f32 %v537, %v538
      %v540 = vand.u32 %v539, 4294901760
      %541 = vmatmul.f32.gmra.mxu0 %v540
      %v542 = vpop.f32.mrf.mxu0
      %v543 = vadd.f32 0.0, %v542
      %v544 = vand.u32 %v403, 4294901760
      %v545 = vsub.f32 %v403, %v544
      %v546 = vand.u32 %v545, 4294901760
      %v547 = vsub.f32 %v545, %v546
      %v548 = vand.u32 %v547, 4294901760
      %549 = vmatmul.f32.gmra.mxu0 %v548
      %v550 = vpop.f32.mrf.mxu0
      %v551 = vadd.f32 0.0, %v550
      %v552 = vand.u32 %v404, 4294901760
      %v553 = vsub.f32 %v404, %v552
      %v554 = vand.u32 %v553, 4294901760
      %v555 = vsub.f32 %v553, %v554
      %v556 = vand.u32 %v555, 4294901760
      %557 = vmatmul.f32.gmra.mxu0 %v556
      %v558 = vpop.f32.mrf.mxu0
      %v559 = vadd.f32 0.0, %v558
      %v560 = vand.u32 %v405, 4294901760
      %v561 = vsub.f32 %v405, %v560
      %v562 = vand.u32 %v561, 4294901760
      %v563 = vsub.f32 %v561, %v562
      %v564 = vand.u32 %v563, 4294901760
      %565 = vmatmul.f32.gmra.mxu0 %v564
      %v566 = vpop.f32.mrf.mxu0
      %v567 = vadd.f32 0.0, %v566
      %v568 = vand.u32 %v406, 4294901760
      %v569 = vsub.f32 %v406, %v568
      %v570 = vand.u32 %v569, 4294901760
      %v571 = vsub.f32 %v569, %v570
      %v572 = vand.u32 %v571, 4294901760
      %573 = vmatmul.f32.gmra.mxu0 %v572
      %v574 = vpop.f32.mrf.mxu0
      %v575 = vadd.f32 0.0, %v574
      %v576 = vand.u32 %v407, 4294901760
      %v577 = vsub.f32 %v407, %v576
      %v578 = vand.u32 %v577, 4294901760
      %v579 = vsub.f32 %v577, %v578
      %v580 = vand.u32 %v579, 4294901760
      %581 = vmatmul.f32.gmra.mxu0 %v580
      %v582 = vpop.f32.mrf.mxu0
      %v583 = vadd.f32 0.0, %v582
      %584 = vdwg.mxu0
      %v585 = vand.u32 %v423, 4294901760
      %v586 = vsub.f32 %v423, %v585
      %v587 = vand.u32 %v586, 4294901760
      %v588 = vsub.f32 %v586, %v587
      %v589 = vand.u32 %v588, 4294901760
      %590 = vmatpush.msra.mxu0 %v589
      %v591 = vand.u32 %v422, 4294901760
      %v592 = vsub.f32 %v422, %v591
      %v593 = vand.u32 %v592, 4294901760
      %v594 = vsub.f32 %v592, %v593
      %v595 = vand.u32 %v594, 4294901760
      %596 = vmatpush.msra.mxu0 %v595
      %v597 = vand.u32 %v421, 4294901760
      %v598 = vsub.f32 %v421, %v597
      %v599 = vand.u32 %v598, 4294901760
      %v600 = vsub.f32 %v598, %v599
      %v601 = vand.u32 %v600, 4294901760
      %602 = vmatpush.msra.mxu0 %v601
      %v603 = vand.u32 %v420, 4294901760
      %v604 = vsub.f32 %v420, %v603
      %v605 = vand.u32 %v604, 4294901760
      %v606 = vsub.f32 %v604, %v605
      %v607 = vand.u32 %v606, 4294901760
      %608 = vmatpush.msra.mxu0 %v607
      %v609 = vand.u32 %v419, 4294901760
      %v610 = vsub.f32 %v419, %v609
      %v611 = vand.u32 %v610, 4294901760
      %v612 = vsub.f32 %v610, %v611
      %v613 = vand.u32 %v612, 4294901760
      %614 = vmatpush.msra.mxu0 %v613
      %v615 = vand.u32 %v418, 4294901760
      %v616 = vsub.f32 %v418, %v615
      %v617 = vand.u32 %v616, 4294901760
      %v618 = vsub.f32 %v616, %v617
      %v619 = vand.u32 %v618, 4294901760
      %620 = vmatpush.msra.mxu0 %v619
      %v621 = vand.u32 %v417, 4294901760
      %v622 = vsub.f32 %v417, %v621
      %v623 = vand.u32 %v622, 4294901760
      %v624 = vsub.f32 %v622, %v623
      %v625 = vand.u32 %v624, 4294901760
      %626 = vmatpush.msra.mxu0 %v625
      %v627 = vand.u32 %v416, 4294901760
      %v628 = vsub.f32 %v416, %v627
      %v629 = vand.u32 %v628, 4294901760
      %v630 = vsub.f32 %v628, %v629
      %v631 = vand.u32 %v630, 4294901760
      %632 = vmatpush.msra.mxu0 %v631
      %v633 = vand.u32 %v415, 4294901760
      %v634 = vsub.f32 %v415, %v633
      %v635 = vand.u32 %v634, 4294901760
      %v636 = vsub.f32 %v634, %v635
      %v637 = vand.u32 %v636, 4294901760
      %638 = vmatpush.msra.mxu0 %v637
      %v639 = vand.u32 %v414, 4294901760
      %v640 = vsub.f32 %v414, %v639
      %v641 = vand.u32 %v640, 4294901760
      %v642 = vsub.f32 %v640, %v641
      %v643 = vand.u32 %v642, 4294901760
      %644 = vmatpush.msra.mxu0 %v643
      %v645 = vand.u32 %v413, 4294901760
      %v646 = vsub.f32 %v413, %v645
      %v647 = vand.u32 %v646, 4294901760
      %v648 = vsub.f32 %v646, %v647
      %v649 = vand.u32 %v648, 4294901760
      %650 = vmatpush.msra.mxu0 %v649
      %v651 = vand.u32 %v412, 4294901760
      %v652 = vsub.f32 %v412, %v651
      %v653 = vand.u32 %v652, 4294901760
      %v654 = vsub.f32 %v652, %v653
      %v655 = vand.u32 %v654, 4294901760
      %656 = vmatpush.msra.mxu0 %v655
      %v657 = vand.u32 %v411, 4294901760
      %v658 = vsub.f32 %v411, %v657
      %v659 = vand.u32 %v658, 4294901760
      %v660 = vsub.f32 %v658, %v659
      %v661 = vand.u32 %v660, 4294901760
      %662 = vmatpush.msra.mxu0 %v661
      %v663 = vand.u32 %v410, 4294901760
      %v664 = vsub.f32 %v410, %v663
      %v665 = vand.u32 %v664, 4294901760
      %v666 = vsub.f32 %v664, %v665
      %v667 = vand.u32 %v666, 4294901760
      %668 = vmatpush.msra.mxu0 %v667
      %v669 = vand.u32 %v409, 4294901760
      %v670 = vsub.f32 %v409, %v669
      %v671 = vand.u32 %v670, 4294901760
      %v672 = vsub.f32 %v670, %v671
      %v673 = vand.u32 %v672, 4294901760
      %674 = vmatpush.msra.mxu0 %v673
      %v675 = vand.u32 %v408, 4294901760
      %v676 = vsub.f32 %v408, %v675
      %v677 = vand.u32 %v676, 4294901760
      %v678 = vsub.f32 %v676, %v677
      %v679 = vand.u32 %v678, 4294901760
      %680 = vmatpush.msra.mxu0 %v679
      %v681 = vand.u32 %v392, 4294901760
      %682 = vmatmul.f32.gmra.mxu0 %v681
      %v683 = vpop.f32.mrf.mxu0
      %v684 = vadd.f32 %v463, %v683
      %v685 = vand.u32 %v393, 4294901760
      %686 = vmatmul.f32.gmra.mxu0 %v685
      %v687 = vpop.f32.mrf.mxu0
      %v688 = vadd.f32 %v471, %v687
      %v689 = vand.u32 %v394, 4294901760
      %690 = vmatmul.f32.gmra.mxu0 %v689
      %v691 = vpop.f32.mrf.mxu0
      %v692 = vadd.f32 %v479, %v691
      %v693 = vand.u32 %v395, 4294901760
      %694 = vmatmul.f32.gmra.mxu0 %v693
      %v695 = vpop.f32.mrf.mxu0
      %v696 = vadd.f32 %v487, %v695
      %v697 = vand.u32 %v396, 4294901760
      %698 = vmatmul.f32.gmra.mxu0 %v697
      %v699 = vpop.f32.mrf.mxu0
      %v700 = vadd.f32 %v495, %v699
      %v701 = vand.u32 %v397, 4294901760
      %702 = vmatmul.f32.gmra.mxu0 %v701
      %v703 = vpop.f32.mrf.mxu0
      %v704 = vadd.f32 %v503, %v703
      %v705 = vand.u32 %v398, 4294901760
      %706 = vmatmul.f32.gmra.mxu0 %v705
      %v707 = vpop.f32.mrf.mxu0
      %v708 = vadd.f32 %v511, %v707
      %v709 = vand.u32 %v399, 4294901760
      %710 = vmatmul.f32.gmra.mxu0 %v709
      %v711 = vpop.f32.mrf.mxu0
      %v712 = vadd.f32 %v519, %v711
      %v713 = vand.u32 %v400, 4294901760
      %714 = vmatmul.f32.gmra.mxu0 %v713
      %v715 = vpop.f32.mrf.mxu0
      %v716 = vadd.f32 %v527, %v715
      %v717 = vand.u32 %v401, 4294901760
      %718 = vmatmul.f32.gmra.mxu0 %v717
      %v719 = vpop.f32.mrf.mxu0
      %v720 = vadd.f32 %v535, %v719
      %v721 = vand.u32 %v402, 4294901760
      %722 = vmatmul.f32.gmra.mxu0 %v721
      %v723 = vpop.f32.mrf.mxu0
      %v724 = vadd.f32 %v543, %v723
      %v725 = vand.u32 %v403, 4294901760
      %726 = vmatmul.f32.gmra.mxu0 %v725
      %v727 = vpop.f32.mrf.mxu0
      %v728 = vadd.f32 %v551, %v727
      %v729 = vand.u32 %v404, 4294901760
      %730 = vmatmul.f32.gmra.mxu0 %v729
      %v731 = vpop.f32.mrf.mxu0
      %v732 = vadd.f32 %v559, %v731
      %v733 = vand.u32 %v405, 4294901760
      %734 = vmatmul.f32.gmra.mxu0 %v733
      %v735 = vpop.f32.mrf.mxu0
      %v736 = vadd.f32 %v567, %v735
      %v737 = vand.u32 %v406, 4294901760
      %738 = vmatmul.f32.gmra.mxu0 %v737
      %v739 = vpop.f32.mrf.mxu0
      %v740 = vadd.f32 %v575, %v739
      %v741 = vand.u32 %v407, 4294901760
      %742 = vmatmul.f32.gmra.mxu0 %v741
      %v743 = vpop.f32.mrf.mxu0
      %v744 = vadd.f32 %v583, %v743
      %745 = vdwg.mxu0
      %v746 = vand.u32 %v423, 4294901760
      %v747 = vsub.f32 %v423, %v746
      %748 = vmatpush.msra.mxu0 %v747
      %v749 = vand.u32 %v422, 4294901760
      %v750 = vsub.f32 %v422, %v749
      %751 = vmatpush.msra.mxu0 %v750
      %v752 = vand.u32 %v421, 4294901760
      %v753 = vsub.f32 %v421, %v752
      %754 = vmatpush.msra.mxu0 %v753
      %v755 = vand.u32 %v420, 4294901760
      %v756 = vsub.f32 %v420, %v755
      %757 = vmatpush.msra.mxu0 %v756
      %v758 = vand.u32 %v419, 4294901760
      %v759 = vsub.f32 %v419, %v758
      %760 = vmatpush.msra.mxu0 %v759
      %v761 = vand.u32 %v418, 4294901760
      %v762 = vsub.f32 %v418, %v761
      %763 = vmatpush.msra.mxu0 %v762
      %v764 = vand.u32 %v417, 4294901760
      %v765 = vsub.f32 %v417, %v764
      %766 = vmatpush.msra.mxu0 %v765
      %v767 = vand.u32 %v416, 4294901760
      %v768 = vsub.f32 %v416, %v767
      %769 = vmatpush.msra.mxu0 %v768
      %v770 = vand.u32 %v415, 4294901760
      %v771 = vsub.f32 %v415, %v770
      %772 = vmatpush.msra.mxu0 %v771
      %v773 = vand.u32 %v414, 4294901760
      %v774 = vsub.f32 %v414, %v773
      %775 = vmatpush.msra.mxu0 %v774
      %v776 = vand.u32 %v413, 4294901760
      %v777 = vsub.f32 %v413, %v776
      %778 = vmatpush.msra.mxu0 %v777
      %v779 = vand.u32 %v412, 4294901760
      %v780 = vsub.f32 %v412, %v779
      %781 = vmatpush.msra.mxu0 %v780
      %v782 = vand.u32 %v411, 4294901760
      %v783 = vsub.f32 %v411, %v782
      %784 = vmatpush.msra.mxu0 %v783
      %v785 = vand.u32 %v410, 4294901760
      %v786 = vsub.f32 %v410, %v785
      %787 = vmatpush.msra.mxu0 %v786
      %v788 = vand.u32 %v409, 4294901760
      %v789 = vsub.f32 %v409, %v788
      %790 = vmatpush.msra.mxu0 %v789
      %v791 = vand.u32 %v408, 4294901760
      %v792 = vsub.f32 %v408, %v791
      %793 = vmatpush.msra.mxu0 %v792
      %v794 = vand.u32 %v392, 4294901760
      %v795 = vsub.f32 %v392, %v794
      %796 = vmatmul.f32.gmra.mxu0 %v795
      %v797 = vpop.f32.mrf.mxu0
      %v798 = vadd.f32 %v684, %v797
      %v799 = vand.u32 %v393, 4294901760
      %v800 = vsub.f32 %v393, %v799
      %801 = vmatmul.f32.gmra.mxu0 %v800
      %v802 = vpop.f32.mrf.mxu0
      %v803 = vadd.f32 %v688, %v802
      %v804 = vand.u32 %v394, 4294901760
      %v805 = vsub.f32 %v394, %v804
      %806 = vmatmul.f32.gmra.mxu0 %v805
      %v807 = vpop.f32.mrf.mxu0
      %v808 = vadd.f32 %v692, %v807
      %v809 = vand.u32 %v395, 4294901760
      %v810 = vsub.f32 %v395, %v809
      %811 = vmatmul.f32.gmra.mxu0 %v810
      %v812 = vpop.f32.mrf.mxu0
      %v813 = vadd.f32 %v696, %v812
      %v814 = vand.u32 %v396, 4294901760
      %v815 = vsub.f32 %v396, %v814
      %816 = vmatmul.f32.gmra.mxu0 %v815
      %v817 = vpop.f32.mrf.mxu0
      %v818 = vadd.f32 %v700, %v817
      %v819 = vand.u32 %v397, 4294901760
      %v820 = vsub.f32 %v397, %v819
      %821 = vmatmul.f32.gmra.mxu0 %v820
      %v822 = vpop.f32.mrf.mxu0
      %v823 = vadd.f32 %v704, %v822
      %v824 = vand.u32 %v398, 4294901760
      %v825 = vsub.f32 %v398, %v824
      %826 = vmatmul.f32.gmra.mxu0 %v825
      %v827 = vpop.f32.mrf.mxu0
      %v828 = vadd.f32 %v708, %v827
      %v829 = vand.u32 %v399, 4294901760
      %v830 = vsub.f32 %v399, %v829
      %831 = vmatmul.f32.gmra.mxu0 %v830
      %v832 = vpop.f32.mrf.mxu0
      %v833 = vadd.f32 %v712, %v832
      %v834 = vand.u32 %v400, 4294901760
      %v835 = vsub.f32 %v400, %v834
      %836 = vmatmul.f32.gmra.mxu0 %v835
      %v837 = vpop.f32.mrf.mxu0
      %v838 = vadd.f32 %v716, %v837
      %v839 = vand.u32 %v401, 4294901760
      %v840 = vsub.f32 %v401, %v839
      %841 = vmatmul.f32.gmra.mxu0 %v840
      %v842 = vpop.f32.mrf.mxu0
      %v843 = vadd.f32 %v720, %v842
      %v844 = vand.u32 %v402, 4294901760
      %v845 = vsub.f32 %v402, %v844
      %846 = vmatmul.f32.gmra.mxu0 %v845
      %v847 = vpop.f32.mrf.mxu0
      %v848 = vadd.f32 %v724, %v847
      %v849 = vand.u32 %v403, 4294901760
      %v850 = vsub.f32 %v403, %v849
      %851 = vmatmul.f32.gmra.mxu0 %v850
      %v852 = vpop.f32.mrf.mxu0
      %v853 = vadd.f32 %v728, %v852
      %v854 = vand.u32 %v404, 4294901760
      %v855 = vsub.f32 %v404, %v854
      %856 = vmatmul.f32.gmra.mxu0 %v855
      %v857 = vpop.f32.mrf.mxu0
      %v858 = vadd.f32 %v732, %v857
      %v859 = vand.u32 %v405, 4294901760
      %v860 = vsub.f32 %v405, %v859
      %861 = vmatmul.f32.gmra.mxu0 %v860
      %v862 = vpop.f32.mrf.mxu0
      %v863 = vadd.f32 %v736, %v862
      %v864 = vand.u32 %v406, 4294901760
      %v865 = vsub.f32 %v406, %v864
      %866 = vmatmul.f32.gmra.mxu0 %v865
      %v867 = vpop.f32.mrf.mxu0
      %v868 = vadd.f32 %v740, %v867
      %v869 = vand.u32 %v407, 4294901760
      %v870 = vsub.f32 %v407, %v869
      %871 = vmatmul.f32.gmra.mxu0 %v870
      %v872 = vpop.f32.mrf.mxu0
      %v873 = vadd.f32 %v744, %v872
      %874 = vdwg.mxu0
      %v875 = vand.u32 %v423, 4294901760
      %876 = vmatpush.msra.mxu0 %v875
      %v877 = vand.u32 %v422, 4294901760
      %878 = vmatpush.msra.mxu0 %v877
      %v879 = vand.u32 %v421, 4294901760
      %880 = vmatpush.msra.mxu0 %v879
      %v881 = vand.u32 %v420, 4294901760
      %882 = vmatpush.msra.mxu0 %v881
      %v883 = vand.u32 %v419, 4294901760
      %884 = vmatpush.msra.mxu0 %v883
      %v885 = vand.u32 %v418, 4294901760
      %886 = vmatpush.msra.mxu0 %v885
      %v887 = vand.u32 %v417, 4294901760
      %888 = vmatpush.msra.mxu0 %v887
      %v889 = vand.u32 %v416, 4294901760
      %890 = vmatpush.msra.mxu0 %v889
      %v891 = vand.u32 %v415, 4294901760
      %892 = vmatpush.msra.mxu0 %v891
      %v893 = vand.u32 %v414, 4294901760
      %894 = vmatpush.msra.mxu0 %v893
      %v895 = vand.u32 %v413, 4294901760
      %896 = vmatpush.msra.mxu0 %v895
      %v897 = vand.u32 %v412, 4294901760
      %898 = vmatpush.msra.mxu0 %v897
      %v899 = vand.u32 %v411, 4294901760
      %900 = vmatpush.msra.mxu0 %v899
      %v901 = vand.u32 %v410, 4294901760
      %902 = vmatpush.msra.mxu0 %v901
      %v903 = vand.u32 %v409, 4294901760
      %904 = vmatpush.msra.mxu0 %v903
      %v905 = vand.u32 %v408, 4294901760
      %906 = vmatpush.msra.mxu0 %v905
      %v907 = vand.u32 %v392, 4294901760
      %v908 = vsub.f32 %v392, %v907
      %v909 = vand.u32 %v908, 4294901760
      %910 = vmatmul.f32.gmra.mxu0 %v909
      %v911 = vpop.f32.mrf.mxu0
      %v912 = vadd.f32 %v798, %v911
      %v913 = vand.u32 %v393, 4294901760
      %v914 = vsub.f32 %v393, %v913
      %v915 = vand.u32 %v914, 4294901760
      %916 = vmatmul.f32.gmra.mxu0 %v915
      %v917 = vpop.f32.mrf.mxu0
      %v918 = vadd.f32 %v803, %v917
      %v919 = vand.u32 %v394, 4294901760
      %v920 = vsub.f32 %v394, %v919
      %v921 = vand.u32 %v920, 4294901760
      %922 = vmatmul.f32.gmra.mxu0 %v921
      %v923 = vpop.f32.mrf.mxu0
      %v924 = vadd.f32 %v808, %v923
      %v925 = vand.u32 %v395, 4294901760
      %v926 = vsub.f32 %v395, %v925
      %v927 = vand.u32 %v926, 4294901760
      %928 = vmatmul.f32.gmra.mxu0 %v927
      %v929 = vpop.f32.mrf.mxu0
      %v930 = vadd.f32 %v813, %v929
      %v931 = vand.u32 %v396, 4294901760
      %v932 = vsub.f32 %v396, %v931
      %v933 = vand.u32 %v932, 4294901760
      %934 = vmatmul.f32.gmra.mxu0 %v933
      %v935 = vpop.f32.mrf.mxu0
      %v936 = vadd.f32 %v818, %v935
      %v937 = vand.u32 %v397, 4294901760
      %v938 = vsub.f32 %v397, %v937
      %v939 = vand.u32 %v938, 4294901760
      %940 = vmatmul.f32.gmra.mxu0 %v939
      %v941 = vpop.f32.mrf.mxu0
      %v942 = vadd.f32 %v823, %v941
      %v943 = vand.u32 %v398, 4294901760
      %v944 = vsub.f32 %v398, %v943
      %v945 = vand.u32 %v944, 4294901760
      %946 = vmatmul.f32.gmra.mxu0 %v945
      %v947 = vpop.f32.mrf.mxu0
      %v948 = vadd.f32 %v828, %v947
      %v949 = vand.u32 %v399, 4294901760
      %v950 = vsub.f32 %v399, %v949
      %v951 = vand.u32 %v950, 4294901760
      %952 = vmatmul.f32.gmra.mxu0 %v951
      %v953 = vpop.f32.mrf.mxu0
      %v954 = vadd.f32 %v833, %v953
      %v955 = vand.u32 %v400, 4294901760
      %v956 = vsub.f32 %v400, %v955
      %v957 = vand.u32 %v956, 4294901760
      %958 = vmatmul.f32.gmra.mxu0 %v957
      %v959 = vpop.f32.mrf.mxu0
      %v960 = vadd.f32 %v838, %v959
      %v961 = vand.u32 %v401, 4294901760
      %v962 = vsub.f32 %v401, %v961
      %v963 = vand.u32 %v962, 4294901760
      %964 = vmatmul.f32.gmra.mxu0 %v963
      %v965 = vpop.f32.mrf.mxu0
      %v966 = vadd.f32 %v843, %v965
      %v967 = vand.u32 %v402, 4294901760
      %v968 = vsub.f32 %v402, %v967
      %v969 = vand.u32 %v968, 4294901760
      %970 = vmatmul.f32.gmra.mxu0 %v969
      %v971 = vpop.f32.mrf.mxu0
      %v972 = vadd.f32 %v848, %v971
      %v973 = vand.u32 %v403, 4294901760
      %v974 = vsub.f32 %v403, %v973
      %v975 = vand.u32 %v974, 4294901760
      %976 = vmatmul.f32.gmra.mxu0 %v975
      %v977 = vpop.f32.mrf.mxu0
      %v978 = vadd.f32 %v853, %v977
      %v979 = vand.u32 %v404, 4294901760
      %v980 = vsub.f32 %v404, %v979
      %v981 = vand.u32 %v980, 4294901760
      %982 = vmatmul.f32.gmra.mxu0 %v981
      %v983 = vpop.f32.mrf.mxu0
      %v984 = vadd.f32 %v858, %v983
      %v985 = vand.u32 %v405, 4294901760
      %v986 = vsub.f32 %v405, %v985
      %v987 = vand.u32 %v986, 4294901760
      %988 = vmatmul.f32.gmra.mxu0 %v987
      %v989 = vpop.f32.mrf.mxu0
      %v990 = vadd.f32 %v863, %v989
      %v991 = vand.u32 %v406, 4294901760
      %v992 = vsub.f32 %v406, %v991
      %v993 = vand.u32 %v992, 4294901760
      %994 = vmatmul.f32.gmra.mxu0 %v993
      %v995 = vpop.f32.mrf.mxu0
      %v996 = vadd.f32 %v868, %v995
      %v997 = vand.u32 %v407, 4294901760
      %v998 = vsub.f32 %v407, %v997
      %v999 = vand.u32 %v998, 4294901760
      %1000 = vmatmul.f32.gmra.mxu0 %v999
      %v1001 = vpop.f32.mrf.mxu0
      %v1002 = vadd.f32 %v873, %v1001
      %1003 = vdwg.mxu0
      %v1004 = vand.u32 %v423, 4294901760
      %v1005 = vsub.f32 %v423, %v1004
      %v1006 = vand.u32 %v1005, 4294901760
      %1007 = vmatpush.msra.mxu0 %v1006
      %v1008 = vand.u32 %v422, 4294901760
      %v1009 = vsub.f32 %v422, %v1008
      %v1010 = vand.u32 %v1009, 4294901760
      %1011 = vmatpush.msra.mxu0 %v1010
      %v1012 = vand.u32 %v421, 4294901760
      %v1013 = vsub.f32 %v421, %v1012
      %v1014 = vand.u32 %v1013, 4294901760
      %1015 = vmatpush.msra.mxu0 %v1014
      %v1016 = vand.u32 %v420, 4294901760
      %v1017 = vsub.f32 %v420, %v1016
      %v1018 = vand.u32 %v1017, 4294901760
      %1019 = vmatpush.msra.mxu0 %v1018
      %v1020 = vand.u32 %v419, 4294901760
      %v1021 = vsub.f32 %v419, %v1020
      %v1022 = vand.u32 %v1021, 4294901760
      %1023 = vmatpush.msra.mxu0 %v1022
      %v1024 = vand.u32 %v418, 4294901760
      %v1025 = vsub.f32 %v418, %v1024
      %v1026 = vand.u32 %v1025, 4294901760
      %1027 = vmatpush.msra.mxu0 %v1026
      %v1028 = vand.u32 %v417, 4294901760
      %v1029 = vsub.f32 %v417, %v1028
      %v1030 = vand.u32 %v1029, 4294901760
      %1031 = vmatpush.msra.mxu0 %v1030
      %v1032 = vand.u32 %v416, 4294901760
      %v1033 = vsub.f32 %v416, %v1032
      %v1034 = vand.u32 %v1033, 4294901760
      %1035 = vmatpush.msra.mxu0 %v1034
      %v1036 = vand.u32 %v415, 4294901760
      %v1037 = vsub.f32 %v415, %v1036
      %v1038 = vand.u32 %v1037, 4294901760
      %1039 = vmatpush.msra.mxu0 %v1038
      %v1040 = vand.u32 %v414, 4294901760
      %v1041 = vsub.f32 %v414, %v1040
      %v1042 = vand.u32 %v1041, 4294901760
      %1043 = vmatpush.msra.mxu0 %v1042
      %v1044 = vand.u32 %v413, 4294901760
      %v1045 = vsub.f32 %v413, %v1044
      %v1046 = vand.u32 %v1045, 4294901760
      %1047 = vmatpush.msra.mxu0 %v1046
      %v1048 = vand.u32 %v412, 4294901760
      %v1049 = vsub.f32 %v412, %v1048
      %v1050 = vand.u32 %v1049, 4294901760
      %1051 = vmatpush.msra.mxu0 %v1050
      %v1052 = vand.u32 %v411, 4294901760
      %v1053 = vsub.f32 %v411, %v1052
      %v1054 = vand.u32 %v1053, 4294901760
      %1055 = vmatpush.msra.mxu0 %v1054
      %v1056 = vand.u32 %v410, 4294901760
      %v1057 = vsub.f32 %v410, %v1056
      %v1058 = vand.u32 %v1057, 4294901760
      %1059 = vmatpush.msra.mxu0 %v1058
      %v1060 = vand.u32 %v409, 4294901760
      %v1061 = vsub.f32 %v409, %v1060
      %v1062 = vand.u32 %v1061, 4294901760
      %1063 = vmatpush.msra.mxu0 %v1062
      %v1064 = vand.u32 %v408, 4294901760
      %v1065 = vsub.f32 %v408, %v1064
      %v1066 = vand.u32 %v1065, 4294901760
      %1067 = vmatpush.msra.mxu0 %v1066
      %v1068 = vand.u32 %v392, 4294901760
      %1069 = vmatmul.f32.gmra.mxu0 %v1068
      %v1070 = vpop.f32.mrf.mxu0
      %v1071 = vadd.f32 %v912, %v1070
      %v1072 = vand.u32 %v393, 4294901760
      %1073 = vmatmul.f32.gmra.mxu0 %v1072
      %v1074 = vpop.f32.mrf.mxu0
      %v1075 = vadd.f32 %v918, %v1074
      %v1076 = vand.u32 %v394, 4294901760
      %1077 = vmatmul.f32.gmra.mxu0 %v1076
      %v1078 = vpop.f32.mrf.mxu0
      %v1079 = vadd.f32 %v924, %v1078
      %v1080 = vand.u32 %v395, 4294901760
      %1081 = vmatmul.f32.gmra.mxu0 %v1080
      %v1082 = vpop.f32.mrf.mxu0
      %v1083 = vadd.f32 %v930, %v1082
      %v1084 = vand.u32 %v396, 4294901760
      %1085 = vmatmul.f32.gmra.mxu0 %v1084
      %v1086 = vpop.f32.mrf.mxu0
      %v1087 = vadd.f32 %v936, %v1086
      %v1088 = vand.u32 %v397, 4294901760
      %1089 = vmatmul.f32.gmra.mxu0 %v1088
      %v1090 = vpop.f32.mrf.mxu0
      %v1091 = vadd.f32 %v942, %v1090
      %v1092 = vand.u32 %v398, 4294901760
      %1093 = vmatmul.f32.gmra.mxu0 %v1092
      %v1094 = vpop.f32.mrf.mxu0
      %v1095 = vadd.f32 %v948, %v1094
      %v1096 = vand.u32 %v399, 4294901760
      %1097 = vmatmul.f32.gmra.mxu0 %v1096
      %v1098 = vpop.f32.mrf.mxu0
      %v1099 = vadd.f32 %v954, %v1098
      %v1100 = vand.u32 %v400, 4294901760
      %1101 = vmatmul.f32.gmra.mxu0 %v1100
      %v1102 = vpop.f32.mrf.mxu0
      %v1103 = vadd.f32 %v960, %v1102
      %v1104 = vand.u32 %v401, 4294901760
      %1105 = vmatmul.f32.gmra.mxu0 %v1104
      %v1106 = vpop.f32.mrf.mxu0
      %v1107 = vadd.f32 %v966, %v1106
      %v1108 = vand.u32 %v402, 4294901760
      %1109 = vmatmul.f32.gmra.mxu0 %v1108
      %v1110 = vpop.f32.mrf.mxu0
      %v1111 = vadd.f32 %v972, %v1110
      %v1112 = vand.u32 %v403, 4294901760
      %1113 = vmatmul.f32.gmra.mxu0 %v1112
      %v1114 = vpop.f32.mrf.mxu0
      %v1115 = vadd.f32 %v978, %v1114
      %v1116 = vand.u32 %v404, 4294901760
      %1117 = vmatmul.f32.gmra.mxu0 %v1116
      %v1118 = vpop.f32.mrf.mxu0
      %v1119 = vadd.f32 %v984, %v1118
      %v1120 = vand.u32 %v405, 4294901760
      %1121 = vmatmul.f32.gmra.mxu0 %v1120
      %v1122 = vpop.f32.mrf.mxu0
      %v1123 = vadd.f32 %v990, %v1122
      %v1124 = vand.u32 %v406, 4294901760
      %1125 = vmatmul.f32.gmra.mxu0 %v1124
      %v1126 = vpop.f32.mrf.mxu0
      %v1127 = vadd.f32 %v996, %v1126
      %v1128 = vand.u32 %v407, 4294901760
      %1129 = vmatmul.f32.gmra.mxu0 %v1128
      %v1130 = vpop.f32.mrf.mxu0
      %v1131 = vadd.f32 %v1002, %v1130
      %1132 = vdwg.mxu0
      %v1133 = vand.u32 %v423, 4294901760
      %1134 = vmatpush.msra.mxu0 %v1133
      %v1135 = vand.u32 %v422, 4294901760
      %1136 = vmatpush.msra.mxu0 %v1135
      %v1137 = vand.u32 %v421, 4294901760
      %1138 = vmatpush.msra.mxu0 %v1137
      %v1139 = vand.u32 %v420, 4294901760
      %1140 = vmatpush.msra.mxu0 %v1139
      %v1141 = vand.u32 %v419, 4294901760
      %1142 = vmatpush.msra.mxu0 %v1141
      %v1143 = vand.u32 %v418, 4294901760
      %1144 = vmatpush.msra.mxu0 %v1143
      %v1145 = vand.u32 %v417, 4294901760
      %1146 = vmatpush.msra.mxu0 %v1145
      %v1147 = vand.u32 %v416, 4294901760
      %1148 = vmatpush.msra.mxu0 %v1147
      %v1149 = vand.u32 %v415, 4294901760
      %1150 = vmatpush.msra.mxu0 %v1149
      %v1151 = vand.u32 %v414, 4294901760
      %1152 = vmatpush.msra.mxu0 %v1151
      %v1153 = vand.u32 %v413, 4294901760
      %1154 = vmatpush.msra.mxu0 %v1153
      %v1155 = vand.u32 %v412, 4294901760
      %1156 = vmatpush.msra.mxu0 %v1155
      %v1157 = vand.u32 %v411, 4294901760
      %1158 = vmatpush.msra.mxu0 %v1157
      %v1159 = vand.u32 %v410, 4294901760
      %1160 = vmatpush.msra.mxu0 %v1159
      %v1161 = vand.u32 %v409, 4294901760
      %1162 = vmatpush.msra.mxu0 %v1161
      %v1163 = vand.u32 %v408, 4294901760
      %1164 = vmatpush.msra.mxu0 %v1163
      %v1165 = vand.u32 %v392, 4294901760
      %1166 = vmatmul.f32.gmra.mxu0 %v1165
      %v1167 = vpop.f32.mrf.mxu0
      %v1168 = vadd.f32 %v1071, %v1167
      %v1169 = vand.u32 %v393, 4294901760
      %1170 = vmatmul.f32.gmra.mxu0 %v1169
      %v1171 = vpop.f32.mrf.mxu0
      %v1172 = vadd.f32 %v1075, %v1171
      %v1173 = vand.u32 %v394, 4294901760
      %1174 = vmatmul.f32.gmra.mxu0 %v1173
      %v1175 = vpop.f32.mrf.mxu0
      %v1176 = vadd.f32 %v1079, %v1175
      %v1177 = vand.u32 %v395, 4294901760
      %1178 = vmatmul.f32.gmra.mxu0 %v1177
      %v1179 = vpop.f32.mrf.mxu0
      %v1180 = vadd.f32 %v1083, %v1179
      %v1181 = vand.u32 %v396, 4294901760
      %1182 = vmatmul.f32.gmra.mxu0 %v1181
      %v1183 = vpop.f32.mrf.mxu0
      %v1184 = vadd.f32 %v1087, %v1183
      %v1185 = vand.u32 %v397, 4294901760
      %1186 = vmatmul.f32.gmra.mxu0 %v1185
      %v1187 = vpop.f32.mrf.mxu0
      %v1188 = vadd.f32 %v1091, %v1187
      %v1189 = vand.u32 %v398, 4294901760
      %1190 = vmatmul.f32.gmra.mxu0 %v1189
      %v1191 = vpop.f32.mrf.mxu0
      %v1192 = vadd.f32 %v1095, %v1191
      %v1193 = vand.u32 %v399, 4294901760
      %1194 = vmatmul.f32.gmra.mxu0 %v1193
      %v1195 = vpop.f32.mrf.mxu0
      %v1196 = vadd.f32 %v1099, %v1195
      %v1197 = vand.u32 %v400, 4294901760
      %1198 = vmatmul.f32.gmra.mxu0 %v1197
      %v1199 = vpop.f32.mrf.mxu0
      %v1200 = vadd.f32 %v1103, %v1199
      %v1201 = vand.u32 %v401, 4294901760
      %1202 = vmatmul.f32.gmra.mxu0 %v1201
      %v1203 = vpop.f32.mrf.mxu0
      %v1204 = vadd.f32 %v1107, %v1203
      %v1205 = vand.u32 %v402, 4294901760
      %1206 = vmatmul.f32.gmra.mxu0 %v1205
      %v1207 = vpop.f32.mrf.mxu0
      %v1208 = vadd.f32 %v1111, %v1207
      %v1209 = vand.u32 %v403, 4294901760
      %1210 = vmatmul.f32.gmra.mxu0 %v1209
      %v1211 = vpop.f32.mrf.mxu0
      %v1212 = vadd.f32 %v1115, %v1211
      %v1213 = vand.u32 %v404, 4294901760
      %1214 = vmatmul.f32.gmra.mxu0 %v1213
      %v1215 = vpop.f32.mrf.mxu0
      %v1216 = vadd.f32 %v1119, %v1215
      %v1217 = vand.u32 %v405, 4294901760
      %1218 = vmatmul.f32.gmra.mxu0 %v1217
      %v1219 = vpop.f32.mrf.mxu0
      %v1220 = vadd.f32 %v1123, %v1219
      %v1221 = vand.u32 %v406, 4294901760
      %1222 = vmatmul.f32.gmra.mxu0 %v1221
      %v1223 = vpop.f32.mrf.mxu0
      %v1224 = vadd.f32 %v1127, %v1223
      %v1225 = vand.u32 %v407, 4294901760
      %1226 = vmatmul.f32.gmra.mxu0 %v1225
      %v1227 = vpop.f32.mrf.mxu0
      %v1228 = vadd.f32 %v1131, %v1227
      %1229 = vdwg.mxu0
      %v1230 = vxor.u32 %v1168, 2147483648
      %v1231 = vxor.u32 %v1172, 2147483648
      %v1232 = vxor.u32 %v1176, 2147483648
      %v1233 = vxor.u32 %v1180, 2147483648
      %v1234 = vxor.u32 %v1184, 2147483648
      %v1235 = vxor.u32 %v1188, 2147483648
      %v1236 = vxor.u32 %v1192, 2147483648
      %v1237 = vxor.u32 %v1196, 2147483648
      %v1238 = vxor.u32 %v1200, 2147483648
      %v1239 = vxor.u32 %v1204, 2147483648
      %v1240 = vxor.u32 %v1208, 2147483648
      %v1241 = vxor.u32 %v1212, 2147483648
      %v1242 = vxor.u32 %v1216, 2147483648
      %v1243 = vxor.u32 %v1220, 2147483648
      %v1244 = vxor.u32 %v1224, 2147483648
      %v1245 = vxor.u32 %v1228, 2147483648
      %v1246 = vmul.f32 %v1230, 1.442695
      %v1247 = vpow.pop %v1246
      %v1248 = vmul.f32 %v1231, 1.442695
      %v1249 = vpow.pop %v1248
      %v1250 = vmul.f32 %v1232, 1.442695
      %v1251 = vpow.pop %v1250
      %v1252 = vmul.f32 %v1233, 1.442695
      %v1253 = vpow.pop %v1252
      %v1254 = vmul.f32 %v1234, 1.442695
      %v1255 = vpow.pop %v1254
      %v1256 = vmul.f32 %v1235, 1.442695
      %v1257 = vpow.pop %v1256
      %v1258 = vmul.f32 %v1236, 1.442695
      %v1259 = vpow.pop %v1258
      %v1260 = vmul.f32 %v1237, 1.442695
      %v1261 = vpow.pop %v1260
      %v1262 = vmul.f32 %v1238, 1.442695
      %v1263 = vpow.pop %v1262
      %v1264 = vmul.f32 %v1239, 1.442695
      %v1265 = vpow.pop %v1264
      %v1266 = vmul.f32 %v1240, 1.442695
      %v1267 = vpow.pop %v1266
      %v1268 = vmul.f32 %v1241, 1.442695
      %v1269 = vpow.pop %v1268
      %v1270 = vmul.f32 %v1242, 1.442695
      %v1271 = vpow.pop %v1270
      %v1272 = vmul.f32 %v1243, 1.442695
      %v1273 = vpow.pop %v1272
      %v1274 = vmul.f32 %v1244, 1.442695
      %v1275 = vpow.pop %v1274
      %v1276 = vmul.f32 %v1245, 1.442695
      %v1277 = vpow.pop %v1276
      %v1278 = vadd.f32 %v1247, 1.0
      %v1279 = vadd.f32 %v1249, 1.0
      %v1280 = vadd.f32 %v1251, 1.0
      %v1281 = vadd.f32 %v1253, 1.0
      %v1282 = vadd.f32 %v1255, 1.0
      %v1283 = vadd.f32 %v1257, 1.0
      %v1284 = vadd.f32 %v1259, 1.0
      %v1285 = vadd.f32 %v1261, 1.0
      %v1286 = vadd.f32 %v1263, 1.0
      %v1287 = vadd.f32 %v1265, 1.0
      %v1288 = vadd.f32 %v1267, 1.0
      %v1289 = vadd.f32 %v1269, 1.0
      %v1290 = vadd.f32 %v1271, 1.0
      %v1291 = vadd.f32 %v1273, 1.0
      %v1292 = vadd.f32 %v1275, 1.0
      %v1293 = vadd.f32 %v1277, 1.0
      %v1294 = vrcp.pop %v1278
      %v1295 = vmul.f32 %v1278, %v1294
      %v1296 = vsub.f32 1.0, %v1295
      %v1297 = vmul.f32 %v1294, %v1296
      %v1298 = vadd.f32 %v1294, %v1297
      %vm1299 = vweird.f32 %v1278
      %vm1300 = vweird.f32 %v1294
      %vm1301 = vmor %vm1299, %vm1300
      %v1302 = vsel %vm1301, %v1294, %v1298
      %v1303 = vand.u32 2147483647, %v1278
      %vm1304 = vcmp.eq.f32.partialorder %v1303, 8.507059e+37
      %v1305 = vand.u32 %v1278, 2147483648
      %v1306 = vor.u32 1.1754944e-38, %v1305
      %v1307 = vsel %vm1304, %v1306, %v1302
      %v1308 = vmul.f32 1.0, %v1307
      %v1309 = vrcp.pop %v1279
      %v1310 = vmul.f32 %v1279, %v1309
      %v1311 = vsub.f32 1.0, %v1310
      %v1312 = vmul.f32 %v1309, %v1311
      %v1313 = vadd.f32 %v1309, %v1312
      %vm1314 = vweird.f32 %v1279
      %vm1315 = vweird.f32 %v1309
      %vm1316 = vmor %vm1314, %vm1315
      %v1317 = vsel %vm1316, %v1309, %v1313
      %v1318 = vand.u32 2147483647, %v1279
      %vm1319 = vcmp.eq.f32.partialorder %v1318, 8.507059e+37
      %v1320 = vand.u32 %v1279, 2147483648
      %v1321 = vor.u32 1.1754944e-38, %v1320
      %v1322 = vsel %vm1319, %v1321, %v1317
      %v1323 = vmul.f32 1.0, %v1322
      %v1324 = vrcp.pop %v1280
      %v1325 = vmul.f32 %v1280, %v1324
      %v1326 = vsub.f32 1.0, %v1325
      %v1327 = vmul.f32 %v1324, %v1326
      %v1328 = vadd.f32 %v1324, %v1327
      %vm1329 = vweird.f32 %v1280
      %vm1330 = vweird.f32 %v1324
      %vm1331 = vmor %vm1329, %vm1330
      %v1332 = vsel %vm1331, %v1324, %v1328
      %v1333 = vand.u32 2147483647, %v1280
      %vm1334 = vcmp.eq.f32.partialorder %v1333, 8.507059e+37
      %v1335 = vand.u32 %v1280, 2147483648
      %v1336 = vor.u32 1.1754944e-38, %v1335
      %v1337 = vsel %vm1334, %v1336, %v1332
      %v1338 = vmul.f32 1.0, %v1337
      %v1339 = vrcp.pop %v1281
      %v1340 = vmul.f32 %v1281, %v1339
      %v1341 = vsub.f32 1.0, %v1340
      %v1342 = vmul.f32 %v1339, %v1341
      %v1343 = vadd.f32 %v1339, %v1342
      %vm1344 = vweird.f32 %v1281
      %vm1345 = vweird.f32 %v1339
      %vm1346 = vmor %vm1344, %vm1345
      %v1347 = vsel %vm1346, %v1339, %v1343
      %v1348 = vand.u32 2147483647, %v1281
      %vm1349 = vcmp.eq.f32.partialorder %v1348, 8.507059e+37
      %v1350 = vand.u32 %v1281, 2147483648
      %v1351 = vor.u32 1.1754944e-38, %v1350
      %v1352 = vsel %vm1349, %v1351, %v1347
      %v1353 = vmul.f32 1.0, %v1352
      %v1354 = vrcp.pop %v1282
      %v1355 = vmul.f32 %v1282, %v1354
      %v1356 = vsub.f32 1.0, %v1355
      %v1357 = vmul.f32 %v1354, %v1356
      %v1358 = vadd.f32 %v1354, %v1357
      %vm1359 = vweird.f32 %v1282
      %vm1360 = vweird.f32 %v1354
      %vm1361 = vmor %vm1359, %vm1360
      %v1362 = vsel %vm1361, %v1354, %v1358
      %v1363 = vand.u32 2147483647, %v1282
      %vm1364 = vcmp.eq.f32.partialorder %v1363, 8.507059e+37
      %v1365 = vand.u32 %v1282, 2147483648
      %v1366 = vor.u32 1.1754944e-38, %v1365
      %v1367 = vsel %vm1364, %v1366, %v1362
      %v1368 = vmul.f32 1.0, %v1367
      %v1369 = vrcp.pop %v1283
      %v1370 = vmul.f32 %v1283, %v1369
      %v1371 = vsub.f32 1.0, %v1370
      %v1372 = vmul.f32 %v1369, %v1371
      %v1373 = vadd.f32 %v1369, %v1372
      %vm1374 = vweird.f32 %v1283
      %vm1375 = vweird.f32 %v1369
      %vm1376 = vmor %vm1374, %vm1375
      %v1377 = vsel %vm1376, %v1369, %v1373
      %v1378 = vand.u32 2147483647, %v1283
      %vm1379 = vcmp.eq.f32.partialorder %v1378, 8.507059e+37
      %v1380 = vand.u32 %v1283, 2147483648
      %v1381 = vor.u32 1.1754944e-38, %v1380
      %v1382 = vsel %vm1379, %v1381, %v1377
      %v1383 = vmul.f32 1.0, %v1382
      %v1384 = vrcp.pop %v1284
      %v1385 = vmul.f32 %v1284, %v1384
      %v1386 = vsub.f32 1.0, %v1385
      %v1387 = vmul.f32 %v1384, %v1386
      %v1388 = vadd.f32 %v1384, %v1387
      %vm1389 = vweird.f32 %v1284
      %vm1390 = vweird.f32 %v1384
      %vm1391 = vmor %vm1389, %vm1390
      %v1392 = vsel %vm1391, %v1384, %v1388
      %v1393 = vand.u32 2147483647, %v1284
      %vm1394 = vcmp.eq.f32.partialorder %v1393, 8.507059e+37
      %v1395 = vand.u32 %v1284, 2147483648
      %v1396 = vor.u32 1.1754944e-38, %v1395
      %v1397 = vsel %vm1394, %v1396, %v1392
      %v1398 = vmul.f32 1.0, %v1397
      %v1399 = vrcp.pop %v1285
      %v1400 = vmul.f32 %v1285, %v1399
      %v1401 = vsub.f32 1.0, %v1400
      %v1402 = vmul.f32 %v1399, %v1401
      %v1403 = vadd.f32 %v1399, %v1402
      %vm1404 = vweird.f32 %v1285
      %vm1405 = vweird.f32 %v1399
      %vm1406 = vmor %vm1404, %vm1405
      %v1407 = vsel %vm1406, %v1399, %v1403
      %v1408 = vand.u32 2147483647, %v1285
      %vm1409 = vcmp.eq.f32.partialorder %v1408, 8.507059e+37
      %v1410 = vand.u32 %v1285, 2147483648
      %v1411 = vor.u32 1.1754944e-38, %v1410
      %v1412 = vsel %vm1409, %v1411, %v1407
      %v1413 = vmul.f32 1.0, %v1412
      %v1414 = vrcp.pop %v1286
      %v1415 = vmul.f32 %v1286, %v1414
      %v1416 = vsub.f32 1.0, %v1415
      %v1417 = vmul.f32 %v1414, %v1416
      %v1418 = vadd.f32 %v1414, %v1417
      %vm1419 = vweird.f32 %v1286
      %vm1420 = vweird.f32 %v1414
      %vm1421 = vmor %vm1419, %vm1420
      %v1422 = vsel %vm1421, %v1414, %v1418
      %v1423 = vand.u32 2147483647, %v1286
      %vm1424 = vcmp.eq.f32.partialorder %v1423, 8.507059e+37
      %v1425 = vand.u32 %v1286, 2147483648
      %v1426 = vor.u32 1.1754944e-38, %v1425
      %v1427 = vsel %vm1424, %v1426, %v1422
      %v1428 = vmul.f32 1.0, %v1427
      %v1429 = vrcp.pop %v1287
      %v1430 = vmul.f32 %v1287, %v1429
      %v1431 = vsub.f32 1.0, %v1430
      %v1432 = vmul.f32 %v1429, %v1431
      %v1433 = vadd.f32 %v1429, %v1432
      %vm1434 = vweird.f32 %v1287
      %vm1435 = vweird.f32 %v1429
      %vm1436 = vmor %vm1434, %vm1435
      %v1437 = vsel %vm1436, %v1429, %v1433
      %v1438 = vand.u32 2147483647, %v1287
      %vm1439 = vcmp.eq.f32.partialorder %v1438, 8.507059e+37
      %v1440 = vand.u32 %v1287, 2147483648
      %v1441 = vor.u32 1.1754944e-38, %v1440
      %v1442 = vsel %vm1439, %v1441, %v1437
      %v1443 = vmul.f32 1.0, %v1442
      %v1444 = vrcp.pop %v1288
      %v1445 = vmul.f32 %v1288, %v1444
      %v1446 = vsub.f32 1.0, %v1445
      %v1447 = vmul.f32 %v1444, %v1446
      %v1448 = vadd.f32 %v1444, %v1447
      %vm1449 = vweird.f32 %v1288
      %vm1450 = vweird.f32 %v1444
      %vm1451 = vmor %vm1449, %vm1450
      %v1452 = vsel %vm1451, %v1444, %v1448
      %v1453 = vand.u32 2147483647, %v1288
      %vm1454 = vcmp.eq.f32.partialorder %v1453, 8.507059e+37
      %v1455 = vand.u32 %v1288, 2147483648
      %v1456 = vor.u32 1.1754944e-38, %v1455
      %v1457 = vsel %vm1454, %v1456, %v1452
      %v1458 = vmul.f32 1.0, %v1457
      %v1459 = vrcp.pop %v1289
      %v1460 = vmul.f32 %v1289, %v1459
      %v1461 = vsub.f32 1.0, %v1460
      %v1462 = vmul.f32 %v1459, %v1461
      %v1463 = vadd.f32 %v1459, %v1462
      %vm1464 = vweird.f32 %v1289
      %vm1465 = vweird.f32 %v1459
      %vm1466 = vmor %vm1464, %vm1465
      %v1467 = vsel %vm1466, %v1459, %v1463
      %v1468 = vand.u32 2147483647, %v1289
      %vm1469 = vcmp.eq.f32.partialorder %v1468, 8.507059e+37
      %v1470 = vand.u32 %v1289, 2147483648
      %v1471 = vor.u32 1.1754944e-38, %v1470
      %v1472 = vsel %vm1469, %v1471, %v1467
      %v1473 = vmul.f32 1.0, %v1472
      %v1474 = vrcp.pop %v1290
      %v1475 = vmul.f32 %v1290, %v1474
      %v1476 = vsub.f32 1.0, %v1475
      %v1477 = vmul.f32 %v1474, %v1476
      %v1478 = vadd.f32 %v1474, %v1477
      %vm1479 = vweird.f32 %v1290
      %vm1480 = vweird.f32 %v1474
      %vm1481 = vmor %vm1479, %vm1480
      %v1482 = vsel %vm1481, %v1474, %v1478
      %v1483 = vand.u32 2147483647, %v1290
      %vm1484 = vcmp.eq.f32.partialorder %v1483, 8.507059e+37
      %v1485 = vand.u32 %v1290, 2147483648
      %v1486 = vor.u32 1.1754944e-38, %v1485
      %v1487 = vsel %vm1484, %v1486, %v1482
      %v1488 = vmul.f32 1.0, %v1487
      %v1489 = vrcp.pop %v1291
      %v1490 = vmul.f32 %v1291, %v1489
      %v1491 = vsub.f32 1.0, %v1490
      %v1492 = vmul.f32 %v1489, %v1491
      %v1493 = vadd.f32 %v1489, %v1492
      %vm1494 = vweird.f32 %v1291
      %vm1495 = vweird.f32 %v1489
      %vm1496 = vmor %vm1494, %vm1495
      %v1497 = vsel %vm1496, %v1489, %v1493
      %v1498 = vand.u32 2147483647, %v1291
      %vm1499 = vcmp.eq.f32.partialorder %v1498, 8.507059e+37
      %v1500 = vand.u32 %v1291, 2147483648
      %v1501 = vor.u32 1.1754944e-38, %v1500
      %v1502 = vsel %vm1499, %v1501, %v1497
      %v1503 = vmul.f32 1.0, %v1502
      %v1504 = vrcp.pop %v1292
      %v1505 = vmul.f32 %v1292, %v1504
      %v1506 = vsub.f32 1.0, %v1505
      %v1507 = vmul.f32 %v1504, %v1506
      %v1508 = vadd.f32 %v1504, %v1507
      %vm1509 = vweird.f32 %v1292
      %vm1510 = vweird.f32 %v1504
      %vm1511 = vmor %vm1509, %vm1510
      %v1512 = vsel %vm1511, %v1504, %v1508
      %v1513 = vand.u32 2147483647, %v1292
      %vm1514 = vcmp.eq.f32.partialorder %v1513, 8.507059e+37
      %v1515 = vand.u32 %v1292, 2147483648
      %v1516 = vor.u32 1.1754944e-38, %v1515
      %v1517 = vsel %vm1514, %v1516, %v1512
      %v1518 = vmul.f32 1.0, %v1517
      %v1519 = vrcp.pop %v1293
      %v1520 = vmul.f32 %v1293, %v1519
      %v1521 = vsub.f32 1.0, %v1520
      %v1522 = vmul.f32 %v1519, %v1521
      %v1523 = vadd.f32 %v1519, %v1522
      %vm1524 = vweird.f32 %v1293
      %vm1525 = vweird.f32 %v1519
      %vm1526 = vmor %vm1524, %vm1525
      %v1527 = vsel %vm1526, %v1519, %v1523
      %v1528 = vand.u32 2147483647, %v1293
      %vm1529 = vcmp.eq.f32.partialorder %v1528, 8.507059e+37
      %v1530 = vand.u32 %v1293, 2147483648
      %v1531 = vor.u32 1.1754944e-38, %v1530
      %v1532 = vsel %vm1529, %v1531, %v1527
      %v1533 = vmul.f32 1.0, %v1532
      %v1534 = vld [vmem:[%s2] sm:$0x3]
      %vm1535 = vcmask 15360
      %v1537 = vsel %vm1535, %v1308, 0
      %v1540 = vsel %vm1535, %v1323, 0
      %v1543 = vsel %vm1535, %v1338, 0
      %v1546 = vsel %vm1535, %v1353, 0
      %v1549 = vsel %vm1535, %v1368, 0
      %v1552 = vsel %vm1535, %v1383, 0
      %v1555 = vsel %vm1535, %v1398, 0
      %v1558 = vsel %vm1535, %v1413, 0
      %v1561 = vsel %vm1535, %v1428, 0
      %v1564 = vsel %vm1535, %v1443, 0
      %v1567 = vsel %vm1535, %v1458, 0
      %v1570 = vsel %vm1535, %v1473, 0
      %v1573 = vsel %vm1535, %v1488, 0
      %v1576 = vsel %vm1535, %v1503, 0
      %v1579 = vsel %vm1535, %v1518, 0
      %v1582 = vsel %vm1535, %v1533, 0
      %vm1584 = vcmask 1041408
      %v1586 = vsel %vm1584, %v1534, 0
      %1588 = vmatpush.msra.mxu0 0.0
      %1589 = vmatpush.msra.mxu0 0.0
      %1590 = vmatpush.msra.mxu0 0.0
      %1591 = vmatpush.msra.mxu0 0.0
      %1592 = vmatpush.msra.mxu0 0.0
      %1593 = vmatpush.msra.mxu0 0.0
      %1594 = vmatpush.msra.mxu0 0.0
      %1595 = vmatpush.msra.mxu0 0.0
      %1596 = vmatpush.msra.mxu0 0.0
      %1597 = vmatpush.msra.mxu0 0.0
      %1598 = vmatpush.msra.mxu0 0.0
      %1599 = vmatpush.msra.mxu0 0.0
      %1600 = vmatpush.msra.mxu0 0.0
      %1601 = vmatpush.msra.mxu0 0.0
      %1602 = vmatpush.msra.mxu0 0.0
      %v1603 = vand.u32 %v1586, 4294901760
      %1604 = vmatpush.msra.mxu0 %v1603
      %v1605 = vand.u32 %v1537, 4294901760
      %v1606 = vsub.f32 %v1537, %v1605
      %v1607 = vand.u32 %v1606, 4294901760
      %v1608 = vsub.f32 %v1606, %v1607
      %v1609 = vand.u32 %v1608, 4294901760
      %1610 = vmatmul.f32.gmra.mxu0 %v1609
      %v1611 = vpop.f32.mrf.mxu0
      %v1612 = vadd.f32 0.0, %v1611
      %v1613 = vand.u32 %v1540, 4294901760
      %v1614 = vsub.f32 %v1540, %v1613
      %v1615 = vand.u32 %v1614, 4294901760
      %v1616 = vsub.f32 %v1614, %v1615
      %v1617 = vand.u32 %v1616, 4294901760
      %1618 = vmatmul.f32.gmra.mxu0 %v1617
      %v1619 = vpop.f32.mrf.mxu0
      %v1620 = vadd.f32 0.0, %v1619
      %v1621 = vand.u32 %v1543, 4294901760
      %v1622 = vsub.f32 %v1543, %v1621
      %v1623 = vand.u32 %v1622, 4294901760
      %v1624 = vsub.f32 %v1622, %v1623
      %v1625 = vand.u32 %v1624, 4294901760
      %1626 = vmatmul.f32.gmra.mxu0 %v1625
      %v1627 = vpop.f32.mrf.mxu0
      %v1628 = vadd.f32 0.0, %v1627
      %v1629 = vand.u32 %v1546, 4294901760
      %v1630 = vsub.f32 %v1546, %v1629
      %v1631 = vand.u32 %v1630, 4294901760
      %v1632 = vsub.f32 %v1630, %v1631
      %v1633 = vand.u32 %v1632, 4294901760
      %1634 = vmatmul.f32.gmra.mxu0 %v1633
      %v1635 = vpop.f32.mrf.mxu0
      %v1636 = vadd.f32 0.0, %v1635
      %v1637 = vand.u32 %v1549, 4294901760
      %v1638 = vsub.f32 %v1549, %v1637
      %v1639 = vand.u32 %v1638, 4294901760
      %v1640 = vsub.f32 %v1638, %v1639
      %v1641 = vand.u32 %v1640, 4294901760
      %1642 = vmatmul.f32.gmra.mxu0 %v1641
      %v1643 = vpop.f32.mrf.mxu0
      %v1644 = vadd.f32 0.0, %v1643
      %v1645 = vand.u32 %v1552, 4294901760
      %v1646 = vsub.f32 %v1552, %v1645
      %v1647 = vand.u32 %v1646, 4294901760
      %v1648 = vsub.f32 %v1646, %v1647
      %v1649 = vand.u32 %v1648, 4294901760
      %1650 = vmatmul.f32.gmra.mxu0 %v1649
      %v1651 = vpop.f32.mrf.mxu0
      %v1652 = vadd.f32 0.0, %v1651
      %v1653 = vand.u32 %v1555, 4294901760
      %v1654 = vsub.f32 %v1555, %v1653
      %v1655 = vand.u32 %v1654, 4294901760
      %v1656 = vsub.f32 %v1654, %v1655
      %v1657 = vand.u32 %v1656, 4294901760
      %1658 = vmatmul.f32.gmra.mxu0 %v1657
      %v1659 = vpop.f32.mrf.mxu0
      %v1660 = vadd.f32 0.0, %v1659
      %v1661 = vand.u32 %v1558, 4294901760
      %v1662 = vsub.f32 %v1558, %v1661
      %v1663 = vand.u32 %v1662, 4294901760
      %v1664 = vsub.f32 %v1662, %v1663
      %v1665 = vand.u32 %v1664, 4294901760
      %1666 = vmatmul.f32.gmra.mxu0 %v1665
      %v1667 = vpop.f32.mrf.mxu0
      %v1668 = vadd.f32 0.0, %v1667
      %v1669 = vand.u32 %v1561, 4294901760
      %v1670 = vsub.f32 %v1561, %v1669
      %v1671 = vand.u32 %v1670, 4294901760
      %v1672 = vsub.f32 %v1670, %v1671
      %v1673 = vand.u32 %v1672, 4294901760
      %1674 = vmatmul.f32.gmra.mxu0 %v1673
      %v1675 = vpop.f32.mrf.mxu0
      %v1676 = vadd.f32 0.0, %v1675
      %v1677 = vand.u32 %v1564, 4294901760
      %v1678 = vsub.f32 %v1564, %v1677
      %v1679 = vand.u32 %v1678, 4294901760
      %v1680 = vsub.f32 %v1678, %v1679
      %v1681 = vand.u32 %v1680, 4294901760
      %1682 = vmatmul.f32.gmra.mxu0 %v1681
      %v1683 = vpop.f32.mrf.mxu0
      %v1684 = vadd.f32 0.0, %v1683
      %v1685 = vand.u32 %v1567, 4294901760
      %v1686 = vsub.f32 %v1567, %v1685
      %v1687 = vand.u32 %v1686, 4294901760
      %v1688 = vsub.f32 %v1686, %v1687
      %v1689 = vand.u32 %v1688, 4294901760
      %1690 = vmatmul.f32.gmra.mxu0 %v1689
      %v1691 = vpop.f32.mrf.mxu0
      %v1692 = vadd.f32 0.0, %v1691
      %v1693 = vand.u32 %v1570, 4294901760
      %v1694 = vsub.f32 %v1570, %v1693
      %v1695 = vand.u32 %v1694, 4294901760
      %v1696 = vsub.f32 %v1694, %v1695
      %v1697 = vand.u32 %v1696, 4294901760
      %1698 = vmatmul.f32.gmra.mxu0 %v1697
      %v1699 = vpop.f32.mrf.mxu0
      %v1700 = vadd.f32 0.0, %v1699
      %v1701 = vand.u32 %v1573, 4294901760
      %v1702 = vsub.f32 %v1573, %v1701
      %v1703 = vand.u32 %v1702, 4294901760
      %v1704 = vsub.f32 %v1702, %v1703
      %v1705 = vand.u32 %v1704, 4294901760
      %1706 = vmatmul.f32.gmra.mxu0 %v1705
      %v1707 = vpop.f32.mrf.mxu0
      %v1708 = vadd.f32 0.0, %v1707
      %v1709 = vand.u32 %v1576, 4294901760
      %v1710 = vsub.f32 %v1576, %v1709
      %v1711 = vand.u32 %v1710, 4294901760
      %v1712 = vsub.f32 %v1710, %v1711
      %v1713 = vand.u32 %v1712, 4294901760
      %1714 = vmatmul.f32.gmra.mxu0 %v1713
      %v1715 = vpop.f32.mrf.mxu0
      %v1716 = vadd.f32 0.0, %v1715
      %v1717 = vand.u32 %v1579, 4294901760
      %v1718 = vsub.f32 %v1579, %v1717
      %v1719 = vand.u32 %v1718, 4294901760
      %v1720 = vsub.f32 %v1718, %v1719
      %v1721 = vand.u32 %v1720, 4294901760
      %1722 = vmatmul.f32.gmra.mxu0 %v1721
      %v1723 = vpop.f32.mrf.mxu0
      %v1724 = vadd.f32 0.0, %v1723
      %v1725 = vand.u32 %v1582, 4294901760
      %v1726 = vsub.f32 %v1582, %v1725
      %v1727 = vand.u32 %v1726, 4294901760
      %v1728 = vsub.f32 %v1726, %v1727
      %v1729 = vand.u32 %v1728, 4294901760
      %1730 = vmatmul.f32.gmra.mxu0 %v1729
      %v1731 = vpop.f32.mrf.mxu0
      %v1732 = vadd.f32 0.0, %v1731
      %1733 = vdwg.mxu0
      %1734 = vmatpush.msra.mxu0 0.0
      %1735 = vmatpush.msra.mxu0 0.0
      %1736 = vmatpush.msra.mxu0 0.0
      %1737 = vmatpush.msra.mxu0 0.0
      %1738 = vmatpush.msra.mxu0 0.0
      %1739 = vmatpush.msra.mxu0 0.0
      %1740 = vmatpush.msra.mxu0 0.0
      %1741 = vmatpush.msra.mxu0 0.0
      %1742 = vmatpush.msra.mxu0 0.0
      %1743 = vmatpush.msra.mxu0 0.0
      %1744 = vmatpush.msra.mxu0 0.0
      %1745 = vmatpush.msra.mxu0 0.0
      %1746 = vmatpush.msra.mxu0 0.0
      %1747 = vmatpush.msra.mxu0 0.0
      %1748 = vmatpush.msra.mxu0 0.0
      %v1749 = vand.u32 %v1586, 4294901760
      %v1750 = vsub.f32 %v1586, %v1749
      %v1751 = vand.u32 %v1750, 4294901760
      %v1752 = vsub.f32 %v1750, %v1751
      %v1753 = vand.u32 %v1752, 4294901760
      %1754 = vmatpush.msra.mxu0 %v1753
      %v1755 = vand.u32 %v1537, 4294901760
      %1756 = vmatmul.f32.gmra.mxu0 %v1755
      %v1757 = vpop.f32.mrf.mxu0
      %v1758 = vadd.f32 %v1612, %v1757
      %v1759 = vand.u32 %v1540, 4294901760
      %1760 = vmatmul.f32.gmra.mxu0 %v1759
      %v1761 = vpop.f32.mrf.mxu0
      %v1762 = vadd.f32 %v1620, %v1761
      %v1763 = vand.u32 %v1543, 4294901760
      %1764 = vmatmul.f32.gmra.mxu0 %v1763
      %v1765 = vpop.f32.mrf.mxu0
      %v1766 = vadd.f32 %v1628, %v1765
      %v1767 = vand.u32 %v1546, 4294901760
      %1768 = vmatmul.f32.gmra.mxu0 %v1767
      %v1769 = vpop.f32.mrf.mxu0
      %v1770 = vadd.f32 %v1636, %v1769
      %v1771 = vand.u32 %v1549, 4294901760
      %1772 = vmatmul.f32.gmra.mxu0 %v1771
      %v1773 = vpop.f32.mrf.mxu0
      %v1774 = vadd.f32 %v1644, %v1773
      %v1775 = vand.u32 %v1552, 4294901760
      %1776 = vmatmul.f32.gmra.mxu0 %v1775
      %v1777 = vpop.f32.mrf.mxu0
      %v1778 = vadd.f32 %v1652, %v1777
      %v1779 = vand.u32 %v1555, 4294901760
      %1780 = vmatmul.f32.gmra.mxu0 %v1779
      %v1781 = vpop.f32.mrf.mxu0
      %v1782 = vadd.f32 %v1660, %v1781
      %v1783 = vand.u32 %v1558, 4294901760
      %1784 = vmatmul.f32.gmra.mxu0 %v1783
      %v1785 = vpop.f32.mrf.mxu0
      %v1786 = vadd.f32 %v1668, %v1785
      %v1787 = vand.u32 %v1561, 4294901760
      %1788 = vmatmul.f32.gmra.mxu0 %v1787
      %v1789 = vpop.f32.mrf.mxu0
      %v1790 = vadd.f32 %v1676, %v1789
      %v1791 = vand.u32 %v1564, 4294901760
      %1792 = vmatmul.f32.gmra.mxu0 %v1791
      %v1793 = vpop.f32.mrf.mxu0
      %v1794 = vadd.f32 %v1684, %v1793
      %v1795 = vand.u32 %v1567, 4294901760
      %1796 = vmatmul.f32.gmra.mxu0 %v1795
      %v1797 = vpop.f32.mrf.mxu0
      %v1798 = vadd.f32 %v1692, %v1797
      %v1799 = vand.u32 %v1570, 4294901760
      %1800 = vmatmul.f32.gmra.mxu0 %v1799
      %v1801 = vpop.f32.mrf.mxu0
      %v1802 = vadd.f32 %v1700, %v1801
      %v1803 = vand.u32 %v1573, 4294901760
      %1804 = vmatmul.f32.gmra.mxu0 %v1803
      %v1805 = vpop.f32.mrf.mxu0
      %v1806 = vadd.f32 %v1708, %v1805
      %v1807 = vand.u32 %v1576, 4294901760
      %1808 = vmatmul.f32.gmra.mxu0 %v1807
      %v1809 = vpop.f32.mrf.mxu0
      %v1810 = vadd.f32 %v1716, %v1809
      %v1811 = vand.u32 %v1579, 4294901760
      %1812 = vmatmul.f32.gmra.mxu0 %v1811
      %v1813 = vpop.f32.mrf.mxu0
      %v1814 = vadd.f32 %v1724, %v1813
      %v1815 = vand.u32 %v1582, 4294901760
      %1816 = vmatmul.f32.gmra.mxu0 %v1815
      %v1817 = vpop.f32.mrf.mxu0
      %v1818 = vadd.f32 %v1732, %v1817
      %1819 = vdwg.mxu0
      %1820 = vmatpush.msra.mxu0 0.0
      %1821 = vmatpush.msra.mxu0 0.0
      %1822 = vmatpush.msra.mxu0 0.0
      %1823 = vmatpush.msra.mxu0 0.0
      %1824 = vmatpush.msra.mxu0 0.0
      %1825 = vmatpush.msra.mxu0 0.0
      %1826 = vmatpush.msra.mxu0 0.0
      %1827 = vmatpush.msra.mxu0 0.0
      %1828 = vmatpush.msra.mxu0 0.0
      %1829 = vmatpush.msra.mxu0 0.0
      %1830 = vmatpush.msra.mxu0 0.0
      %1831 = vmatpush.msra.mxu0 0.0
      %1832 = vmatpush.msra.mxu0 0.0
      %1833 = vmatpush.msra.mxu0 0.0
      %1834 = vmatpush.msra.mxu0 0.0
      %v1835 = vand.u32 %v1586, 4294901760
      %v1836 = vsub.f32 %v1586, %v1835
      %1837 = vmatpush.msra.mxu0 %v1836
      %v1838 = vand.u32 %v1537, 4294901760
      %v1839 = vsub.f32 %v1537, %v1838
      %1840 = vmatmul.f32.gmra.mxu0 %v1839
      %v1841 = vpop.f32.mrf.mxu0
      %v1842 = vadd.f32 %v1758, %v1841
      %v1843 = vand.u32 %v1540, 4294901760
      %v1844 = vsub.f32 %v1540, %v1843
      %1845 = vmatmul.f32.gmra.mxu0 %v1844
      %v1846 = vpop.f32.mrf.mxu0
      %v1847 = vadd.f32 %v1762, %v1846
      %v1848 = vand.u32 %v1543, 4294901760
      %v1849 = vsub.f32 %v1543, %v1848
      %1850 = vmatmul.f32.gmra.mxu0 %v1849
      %v1851 = vpop.f32.mrf.mxu0
      %v1852 = vadd.f32 %v1766, %v1851
      %v1853 = vand.u32 %v1546, 4294901760
      %v1854 = vsub.f32 %v1546, %v1853
      %1855 = vmatmul.f32.gmra.mxu0 %v1854
      %v1856 = vpop.f32.mrf.mxu0
      %v1857 = vadd.f32 %v1770, %v1856
      %v1858 = vand.u32 %v1549, 4294901760
      %v1859 = vsub.f32 %v1549, %v1858
      %1860 = vmatmul.f32.gmra.mxu0 %v1859
      %v1861 = vpop.f32.mrf.mxu0
      %v1862 = vadd.f32 %v1774, %v1861
      %v1863 = vand.u32 %v1552, 4294901760
      %v1864 = vsub.f32 %v1552, %v1863
      %1865 = vmatmul.f32.gmra.mxu0 %v1864
      %v1866 = vpop.f32.mrf.mxu0
      %v1867 = vadd.f32 %v1778, %v1866
      %v1868 = vand.u32 %v1555, 4294901760
      %v1869 = vsub.f32 %v1555, %v1868
      %1870 = vmatmul.f32.gmra.mxu0 %v1869
      %v1871 = vpop.f32.mrf.mxu0
      %v1872 = vadd.f32 %v1782, %v1871
      %v1873 = vand.u32 %v1558, 4294901760
      %v1874 = vsub.f32 %v1558, %v1873
      %1875 = vmatmul.f32.gmra.mxu0 %v1874
      %v1876 = vpop.f32.mrf.mxu0
      %v1877 = vadd.f32 %v1786, %v1876
      %v1878 = vand.u32 %v1561, 4294901760
      %v1879 = vsub.f32 %v1561, %v1878
      %1880 = vmatmul.f32.gmra.mxu0 %v1879
      %v1881 = vpop.f32.mrf.mxu0
      %v1882 = vadd.f32 %v1790, %v1881
      %v1883 = vand.u32 %v1564, 4294901760
      %v1884 = vsub.f32 %v1564, %v1883
      %1885 = vmatmul.f32.gmra.mxu0 %v1884
      %v1886 = vpop.f32.mrf.mxu0
      %v1887 = vadd.f32 %v1794, %v1886
      %v1888 = vand.u32 %v1567, 4294901760
      %v1889 = vsub.f32 %v1567, %v1888
      %1890 = vmatmul.f32.gmra.mxu0 %v1889
      %v1891 = vpop.f32.mrf.mxu0
      %v1892 = vadd.f32 %v1798, %v1891
      %v1893 = vand.u32 %v1570, 4294901760
      %v1894 = vsub.f32 %v1570, %v1893
      %1895 = vmatmul.f32.gmra.mxu0 %v1894
      %v1896 = vpop.f32.mrf.mxu0
      %v1897 = vadd.f32 %v1802, %v1896
      %v1898 = vand.u32 %v1573, 4294901760
      %v1899 = vsub.f32 %v1573, %v1898
      %1900 = vmatmul.f32.gmra.mxu0 %v1899
      %v1901 = vpop.f32.mrf.mxu0
      %v1902 = vadd.f32 %v1806, %v1901
      %v1903 = vand.u32 %v1576, 4294901760
      %v1904 = vsub.f32 %v1576, %v1903
      %1905 = vmatmul.f32.gmra.mxu0 %v1904
      %v1906 = vpop.f32.mrf.mxu0
      %v1907 = vadd.f32 %v1810, %v1906
      %v1908 = vand.u32 %v1579, 4294901760
      %v1909 = vsub.f32 %v1579, %v1908
      %1910 = vmatmul.f32.gmra.mxu0 %v1909
      %v1911 = vpop.f32.mrf.mxu0
      %v1912 = vadd.f32 %v1814, %v1911
      %v1913 = vand.u32 %v1582, 4294901760
      %v1914 = vsub.f32 %v1582, %v1913
      %1915 = vmatmul.f32.gmra.mxu0 %v1914
      %v1916 = vpop.f32.mrf.mxu0
      %v1917 = vadd.f32 %v1818, %v1916
      %1918 = vdwg.mxu0
      %1919 = vmatpush.msra.mxu0 0.0
      %1920 = vmatpush.msra.mxu0 0.0
      %1921 = vmatpush.msra.mxu0 0.0
      %1922 = vmatpush.msra.mxu0 0.0
      %1923 = vmatpush.msra.mxu0 0.0
      %1924 = vmatpush.msra.mxu0 0.0
      %1925 = vmatpush.msra.mxu0 0.0
      %1926 = vmatpush.msra.mxu0 0.0
      %1927 = vmatpush.msra.mxu0 0.0
      %1928 = vmatpush.msra.mxu0 0.0
      %1929 = vmatpush.msra.mxu0 0.0
      %1930 = vmatpush.msra.mxu0 0.0
      %1931 = vmatpush.msra.mxu0 0.0
      %1932 = vmatpush.msra.mxu0 0.0
      %1933 = vmatpush.msra.mxu0 0.0
      %v1934 = vand.u32 %v1586, 4294901760
      %1935 = vmatpush.msra.mxu0 %v1934
      %v1936 = vand.u32 %v1537, 4294901760
      %v1937 = vsub.f32 %v1537, %v1936
      %v1938 = vand.u32 %v1937, 4294901760
      %1939 = vmatmul.f32.gmra.mxu0 %v1938
      %v1940 = vpop.f32.mrf.mxu0
      %v1941 = vadd.f32 %v1842, %v1940
      %v1942 = vand.u32 %v1540, 4294901760
      %v1943 = vsub.f32 %v1540, %v1942
      %v1944 = vand.u32 %v1943, 4294901760
      %1945 = vmatmul.f32.gmra.mxu0 %v1944
      %v1946 = vpop.f32.mrf.mxu0
      %v1947 = vadd.f32 %v1847, %v1946
      %v1948 = vand.u32 %v1543, 4294901760
      %v1949 = vsub.f32 %v1543, %v1948
      %v1950 = vand.u32 %v1949, 4294901760
      %1951 = vmatmul.f32.gmra.mxu0 %v1950
      %v1952 = vpop.f32.mrf.mxu0
      %v1953 = vadd.f32 %v1852, %v1952
      %v1954 = vand.u32 %v1546, 4294901760
      %v1955 = vsub.f32 %v1546, %v1954
      %v1956 = vand.u32 %v1955, 4294901760
      %1957 = vmatmul.f32.gmra.mxu0 %v1956
      %v1958 = vpop.f32.mrf.mxu0
      %v1959 = vadd.f32 %v1857, %v1958
      %v1960 = vand.u32 %v1549, 4294901760
      %v1961 = vsub.f32 %v1549, %v1960
      %v1962 = vand.u32 %v1961, 4294901760
      %1963 = vmatmul.f32.gmra.mxu0 %v1962
      %v1964 = vpop.f32.mrf.mxu0
      %v1965 = vadd.f32 %v1862, %v1964
      %v1966 = vand.u32 %v1552, 4294901760
      %v1967 = vsub.f32 %v1552, %v1966
      %v1968 = vand.u32 %v1967, 4294901760
      %1969 = vmatmul.f32.gmra.mxu0 %v1968
      %v1970 = vpop.f32.mrf.mxu0
      %v1971 = vadd.f32 %v1867, %v1970
      %v1972 = vand.u32 %v1555, 4294901760
      %v1973 = vsub.f32 %v1555, %v1972
      %v1974 = vand.u32 %v1973, 4294901760
      %1975 = vmatmul.f32.gmra.mxu0 %v1974
      %v1976 = vpop.f32.mrf.mxu0
      %v1977 = vadd.f32 %v1872, %v1976
      %v1978 = vand.u32 %v1558, 4294901760
      %v1979 = vsub.f32 %v1558, %v1978
      %v1980 = vand.u32 %v1979, 4294901760
      %1981 = vmatmul.f32.gmra.mxu0 %v1980
      %v1982 = vpop.f32.mrf.mxu0
      %v1983 = vadd.f32 %v1877, %v1982
      %v1984 = vand.u32 %v1561, 4294901760
      %v1985 = vsub.f32 %v1561, %v1984
      %v1986 = vand.u32 %v1985, 4294901760
      %1987 = vmatmul.f32.gmra.mxu0 %v1986
      %v1988 = vpop.f32.mrf.mxu0
      %v1989 = vadd.f32 %v1882, %v1988
      %v1990 = vand.u32 %v1564, 4294901760
      %v1991 = vsub.f32 %v1564, %v1990
      %v1992 = vand.u32 %v1991, 4294901760
      %1993 = vmatmul.f32.gmra.mxu0 %v1992
      %v1994 = vpop.f32.mrf.mxu0
      %v1995 = vadd.f32 %v1887, %v1994
      %v1996 = vand.u32 %v1567, 4294901760
      %v1997 = vsub.f32 %v1567, %v1996
      %v1998 = vand.u32 %v1997, 4294901760
      %1999 = vmatmul.f32.gmra.mxu0 %v1998
      %v2000 = vpop.f32.mrf.mxu0
      %v2001 = vadd.f32 %v1892, %v2000
      %v2002 = vand.u32 %v1570, 4294901760
      %v2003 = vsub.f32 %v1570, %v2002
      %v2004 = vand.u32 %v2003, 4294901760
      %2005 = vmatmul.f32.gmra.mxu0 %v2004
      %v2006 = vpop.f32.mrf.mxu0
      %v2007 = vadd.f32 %v1897, %v2006
      %v2008 = vand.u32 %v1573, 4294901760
      %v2009 = vsub.f32 %v1573, %v2008
      %v2010 = vand.u32 %v2009, 4294901760
      %2011 = vmatmul.f32.gmra.mxu0 %v2010
      %v2012 = vpop.f32.mrf.mxu0
      %v2013 = vadd.f32 %v1902, %v2012
      %v2014 = vand.u32 %v1576, 4294901760
      %v2015 = vsub.f32 %v1576, %v2014
      %v2016 = vand.u32 %v2015, 4294901760
      %2017 = vmatmul.f32.gmra.mxu0 %v2016
      %v2018 = vpop.f32.mrf.mxu0
      %v2019 = vadd.f32 %v1907, %v2018
      %v2020 = vand.u32 %v1579, 4294901760
      %v2021 = vsub.f32 %v1579, %v2020
      %v2022 = vand.u32 %v2021, 4294901760
      %2023 = vmatmul.f32.gmra.mxu0 %v2022
      %v2024 = vpop.f32.mrf.mxu0
      %v2025 = vadd.f32 %v1912, %v2024
      %v2026 = vand.u32 %v1582, 4294901760
      %v2027 = vsub.f32 %v1582, %v2026
      %v2028 = vand.u32 %v2027, 4294901760
      %2029 = vmatmul.f32.gmra.mxu0 %v2028
      %v2030 = vpop.f32.mrf.mxu0
      %v2031 = vadd.f32 %v1917, %v2030
      %2032 = vdwg.mxu0
      %2033 = vmatpush.msra.mxu0 0.0
      %2034 = vmatpush.msra.mxu0 0.0
      %2035 = vmatpush.msra.mxu0 0.0
      %2036 = vmatpush.msra.mxu0 0.0
      %2037 = vmatpush.msra.mxu0 0.0
      %2038 = vmatpush.msra.mxu0 0.0
      %2039 = vmatpush.msra.mxu0 0.0
      %2040 = vmatpush.msra.mxu0 0.0
      %2041 = vmatpush.msra.mxu0 0.0
      %2042 = vmatpush.msra.mxu0 0.0
      %2043 = vmatpush.msra.mxu0 0.0
      %2044 = vmatpush.msra.mxu0 0.0
      %2045 = vmatpush.msra.mxu0 0.0
      %2046 = vmatpush.msra.mxu0 0.0
      %2047 = vmatpush.msra.mxu0 0.0
      %v2048 = vand.u32 %v1586, 4294901760
      %v2049 = vsub.f32 %v1586, %v2048
      %v2050 = vand.u32 %v2049, 4294901760
      %2051 = vmatpush.msra.mxu0 %v2050
      %v2052 = vand.u32 %v1537, 4294901760
      %2053 = vmatmul.f32.gmra.mxu0 %v2052
      %v2054 = vpop.f32.mrf.mxu0
      %v2055 = vadd.f32 %v1941, %v2054
      %v2056 = vand.u32 %v1540, 4294901760
      %2057 = vmatmul.f32.gmra.mxu0 %v2056
      %v2058 = vpop.f32.mrf.mxu0
      %v2059 = vadd.f32 %v1947, %v2058
      %v2060 = vand.u32 %v1543, 4294901760
      %2061 = vmatmul.f32.gmra.mxu0 %v2060
      %v2062 = vpop.f32.mrf.mxu0
      %v2063 = vadd.f32 %v1953, %v2062
      %v2064 = vand.u32 %v1546, 4294901760
      %2065 = vmatmul.f32.gmra.mxu0 %v2064
      %v2066 = vpop.f32.mrf.mxu0
      %v2067 = vadd.f32 %v1959, %v2066
      %v2068 = vand.u32 %v1549, 4294901760
      %2069 = vmatmul.f32.gmra.mxu0 %v2068
      %v2070 = vpop.f32.mrf.mxu0
      %v2071 = vadd.f32 %v1965, %v2070
      %v2072 = vand.u32 %v1552, 4294901760
      %2073 = vmatmul.f32.gmra.mxu0 %v2072
      %v2074 = vpop.f32.mrf.mxu0
      %v2075 = vadd.f32 %v1971, %v2074
      %v2076 = vand.u32 %v1555, 4294901760
      %2077 = vmatmul.f32.gmra.mxu0 %v2076
      %v2078 = vpop.f32.mrf.mxu0
      %v2079 = vadd.f32 %v1977, %v2078
      %v2080 = vand.u32 %v1558, 4294901760
      %2081 = vmatmul.f32.gmra.mxu0 %v2080
      %v2082 = vpop.f32.mrf.mxu0
      %v2083 = vadd.f32 %v1983, %v2082
      %v2084 = vand.u32 %v1561, 4294901760
      %2085 = vmatmul.f32.gmra.mxu0 %v2084
      %v2086 = vpop.f32.mrf.mxu0
      %v2087 = vadd.f32 %v1989, %v2086
      %v2088 = vand.u32 %v1564, 4294901760
      %2089 = vmatmul.f32.gmra.mxu0 %v2088
      %v2090 = vpop.f32.mrf.mxu0
      %v2091 = vadd.f32 %v1995, %v2090
      %v2092 = vand.u32 %v1567, 4294901760
      %2093 = vmatmul.f32.gmra.mxu0 %v2092
      %v2094 = vpop.f32.mrf.mxu0
      %v2095 = vadd.f32 %v2001, %v2094
      %v2096 = vand.u32 %v1570, 4294901760
      %2097 = vmatmul.f32.gmra.mxu0 %v2096
      %v2098 = vpop.f32.mrf.mxu0
      %v2099 = vadd.f32 %v2007, %v2098
      %v2100 = vand.u32 %v1573, 4294901760
      %2101 = vmatmul.f32.gmra.mxu0 %v2100
      %v2102 = vpop.f32.mrf.mxu0
      %v2103 = vadd.f32 %v2013, %v2102
      %v2104 = vand.u32 %v1576, 4294901760
      %2105 = vmatmul.f32.gmra.mxu0 %v2104
      %v2106 = vpop.f32.mrf.mxu0
      %v2107 = vadd.f32 %v2019, %v2106
      %v2108 = vand.u32 %v1579, 4294901760
      %2109 = vmatmul.f32.gmra.mxu0 %v2108
      %v2110 = vpop.f32.mrf.mxu0
      %v2111 = vadd.f32 %v2025, %v2110
      %v2112 = vand.u32 %v1582, 4294901760
      %2113 = vmatmul.f32.gmra.mxu0 %v2112
      %v2114 = vpop.f32.mrf.mxu0
      %v2115 = vadd.f32 %v2031, %v2114
      %2116 = vdwg.mxu0
      %2117 = vmatpush.msra.mxu0 0.0
      %2118 = vmatpush.msra.mxu0 0.0
      %2119 = vmatpush.msra.mxu0 0.0
      %2120 = vmatpush.msra.mxu0 0.0
      %2121 = vmatpush.msra.mxu0 0.0
      %2122 = vmatpush.msra.mxu0 0.0
      %2123 = vmatpush.msra.mxu0 0.0
      %2124 = vmatpush.msra.mxu0 0.0
      %2125 = vmatpush.msra.mxu0 0.0
      %2126 = vmatpush.msra.mxu0 0.0
      %2127 = vmatpush.msra.mxu0 0.0
      %2128 = vmatpush.msra.mxu0 0.0
      %2129 = vmatpush.msra.mxu0 0.0
      %2130 = vmatpush.msra.mxu0 0.0
      %2131 = vmatpush.msra.mxu0 0.0
      %v2132 = vand.u32 %v1586, 4294901760
      %2133 = vmatpush.msra.mxu0 %v2132
      %v2134 = vand.u32 %v1537, 4294901760
      %2135 = vmatmul.f32.gmra.mxu0 %v2134
      %v2136 = vpop.f32.mrf.mxu0
      %v2137 = vadd.f32 %v2055, %v2136
      %v2138 = vand.u32 %v1540, 4294901760
      %2139 = vmatmul.f32.gmra.mxu0 %v2138
      %v2140 = vpop.f32.mrf.mxu0
      %v2141 = vadd.f32 %v2059, %v2140
      %v2142 = vand.u32 %v1543, 4294901760
      %2143 = vmatmul.f32.gmra.mxu0 %v2142
      %v2144 = vpop.f32.mrf.mxu0
      %v2145 = vadd.f32 %v2063, %v2144
      %v2146 = vand.u32 %v1546, 4294901760
      %2147 = vmatmul.f32.gmra.mxu0 %v2146
      %v2148 = vpop.f32.mrf.mxu0
      %v2149 = vadd.f32 %v2067, %v2148
      %v2150 = vand.u32 %v1549, 4294901760
      %2151 = vmatmul.f32.gmra.mxu0 %v2150
      %v2152 = vpop.f32.mrf.mxu0
      %v2153 = vadd.f32 %v2071, %v2152
      %v2154 = vand.u32 %v1552, 4294901760
      %2155 = vmatmul.f32.gmra.mxu0 %v2154
      %v2156 = vpop.f32.mrf.mxu0
      %v2157 = vadd.f32 %v2075, %v2156
      %v2158 = vand.u32 %v1555, 4294901760
      %2159 = vmatmul.f32.gmra.mxu0 %v2158
      %v2160 = vpop.f32.mrf.mxu0
      %v2161 = vadd.f32 %v2079, %v2160
      %v2162 = vand.u32 %v1558, 4294901760
      %2163 = vmatmul.f32.gmra.mxu0 %v2162
      %v2164 = vpop.f32.mrf.mxu0
      %v2165 = vadd.f32 %v2083, %v2164
      %v2166 = vand.u32 %v1561, 4294901760
      %2167 = vmatmul.f32.gmra.mxu0 %v2166
      %v2168 = vpop.f32.mrf.mxu0
      %v2169 = vadd.f32 %v2087, %v2168
      %v2170 = vand.u32 %v1564, 4294901760
      %2171 = vmatmul.f32.gmra.mxu0 %v2170
      %v2172 = vpop.f32.mrf.mxu0
      %v2173 = vadd.f32 %v2091, %v2172
      %v2174 = vand.u32 %v1567, 4294901760
      %2175 = vmatmul.f32.gmra.mxu0 %v2174
      %v2176 = vpop.f32.mrf.mxu0
      %v2177 = vadd.f32 %v2095, %v2176
      %v2178 = vand.u32 %v1570, 4294901760
      %2179 = vmatmul.f32.gmra.mxu0 %v2178
      %v2180 = vpop.f32.mrf.mxu0
      %v2181 = vadd.f32 %v2099, %v2180
      %v2182 = vand.u32 %v1573, 4294901760
      %2183 = vmatmul.f32.gmra.mxu0 %v2182
      %v2184 = vpop.f32.mrf.mxu0
      %v2185 = vadd.f32 %v2103, %v2184
      %v2186 = vand.u32 %v1576, 4294901760
      %2187 = vmatmul.f32.gmra.mxu0 %v2186
      %v2188 = vpop.f32.mrf.mxu0
      %v2189 = vadd.f32 %v2107, %v2188
      %v2190 = vand.u32 %v1579, 4294901760
      %2191 = vmatmul.f32.gmra.mxu0 %v2190
      %v2192 = vpop.f32.mrf.mxu0
      %v2193 = vadd.f32 %v2111, %v2192
      %v2194 = vand.u32 %v1582, 4294901760
      %2195 = vmatmul.f32.gmra.mxu0 %v2194
      %v2196 = vpop.f32.mrf.mxu0
      %v2197 = vadd.f32 %v2115, %v2196
      %2198 = vdwg.mxu0
      %v2199 = vxor.u32 %v2137, 2147483648
      %v2200 = vxor.u32 %v2141, 2147483648
      %v2201 = vxor.u32 %v2145, 2147483648
      %v2202 = vxor.u32 %v2149, 2147483648
      %v2203 = vxor.u32 %v2153, 2147483648
      %v2204 = vxor.u32 %v2157, 2147483648
      %v2205 = vxor.u32 %v2161, 2147483648
      %v2206 = vxor.u32 %v2165, 2147483648
      %v2207 = vxor.u32 %v2169, 2147483648
      %v2208 = vxor.u32 %v2173, 2147483648
      %v2209 = vxor.u32 %v2177, 2147483648
      %v2210 = vxor.u32 %v2181, 2147483648
      %v2211 = vxor.u32 %v2185, 2147483648
      %v2212 = vxor.u32 %v2189, 2147483648
      %v2213 = vxor.u32 %v2193, 2147483648
      %v2214 = vxor.u32 %v2197, 2147483648
      %v2215 = vmul.f32 %v2199, 1.442695
      %v2216 = vpow.pop %v2215
      %v2217 = vmul.f32 %v2200, 1.442695
      %v2218 = vpow.pop %v2217
      %v2219 = vmul.f32 %v2201, 1.442695
      %v2220 = vpow.pop %v2219
      %v2221 = vmul.f32 %v2202, 1.442695
      %v2222 = vpow.pop %v2221
      %v2223 = vmul.f32 %v2203, 1.442695
      %v2224 = vpow.pop %v2223
      %v2225 = vmul.f32 %v2204, 1.442695
      %v2226 = vpow.pop %v2225
      %v2227 = vmul.f32 %v2205, 1.442695
      %v2228 = vpow.pop %v2227
      %v2229 = vmul.f32 %v2206, 1.442695
      %v2230 = vpow.pop %v2229
      %v2231 = vmul.f32 %v2207, 1.442695
      %v2232 = vpow.pop %v2231
      %v2233 = vmul.f32 %v2208, 1.442695
      %v2234 = vpow.pop %v2233
      %v2235 = vmul.f32 %v2209, 1.442695
      %v2236 = vpow.pop %v2235
      %v2237 = vmul.f32 %v2210, 1.442695
      %v2238 = vpow.pop %v2237
      %v2239 = vmul.f32 %v2211, 1.442695
      %v2240 = vpow.pop %v2239
      %v2241 = vmul.f32 %v2212, 1.442695
      %v2242 = vpow.pop %v2241
      %v2243 = vmul.f32 %v2213, 1.442695
      %v2244 = vpow.pop %v2243
      %v2245 = vmul.f32 %v2214, 1.442695
      %v2246 = vpow.pop %v2245
      %v2247 = vadd.f32 %v2216, 1.0
      %v2248 = vadd.f32 %v2218, 1.0
      %v2249 = vadd.f32 %v2220, 1.0
      %v2250 = vadd.f32 %v2222, 1.0
      %v2251 = vadd.f32 %v2224, 1.0
      %v2252 = vadd.f32 %v2226, 1.0
      %v2253 = vadd.f32 %v2228, 1.0
      %v2254 = vadd.f32 %v2230, 1.0
      %v2255 = vadd.f32 %v2232, 1.0
      %v2256 = vadd.f32 %v2234, 1.0
      %v2257 = vadd.f32 %v2236, 1.0
      %v2258 = vadd.f32 %v2238, 1.0
      %v2259 = vadd.f32 %v2240, 1.0
      %v2260 = vadd.f32 %v2242, 1.0
      %v2261 = vadd.f32 %v2244, 1.0
      %v2262 = vadd.f32 %v2246, 1.0
      %v2263 = vrcp.pop %v2247
      %v2264 = vmul.f32 %v2247, %v2263
      %v2265 = vsub.f32 1.0, %v2264
      %v2266 = vmul.f32 %v2263, %v2265
      %v2267 = vadd.f32 %v2263, %v2266
      %vm2268 = vweird.f32 %v2247
      %vm2269 = vweird.f32 %v2263
      %vm2270 = vmor %vm2268, %vm2269
      %v2271 = vsel %vm2270, %v2263, %v2267
      %v2272 = vand.u32 2147483647, %v2247
      %vm2273 = vcmp.eq.f32.partialorder %v2272, 8.507059e+37
      %v2274 = vand.u32 %v2247, 2147483648
      %v2275 = vor.u32 1.1754944e-38, %v2274
      %v2276 = vsel %vm2273, %v2275, %v2271
      %v2277 = vmul.f32 1.0, %v2276
      %v2278 = vrcp.pop %v2248
      %v2279 = vmul.f32 %v2248, %v2278
      %v2280 = vsub.f32 1.0, %v2279
      %v2281 = vmul.f32 %v2278, %v2280
      %v2282 = vadd.f32 %v2278, %v2281
      %vm2283 = vweird.f32 %v2248
      %vm2284 = vweird.f32 %v2278
      %vm2285 = vmor %vm2283, %vm2284
      %v2286 = vsel %vm2285, %v2278, %v2282
      %v2287 = vand.u32 2147483647, %v2248
      %vm2288 = vcmp.eq.f32.partialorder %v2287, 8.507059e+37
      %v2289 = vand.u32 %v2248, 2147483648
      %v2290 = vor.u32 1.1754944e-38, %v2289
      %v2291 = vsel %vm2288, %v2290, %v2286
      %v2292 = vmul.f32 1.0, %v2291
      %v2293 = vrcp.pop %v2249
      %v2294 = vmul.f32 %v2249, %v2293
      %v2295 = vsub.f32 1.0, %v2294
      %v2296 = vmul.f32 %v2293, %v2295
      %v2297 = vadd.f32 %v2293, %v2296
      %vm2298 = vweird.f32 %v2249
      %vm2299 = vweird.f32 %v2293
      %vm2300 = vmor %vm2298, %vm2299
      %v2301 = vsel %vm2300, %v2293, %v2297
      %v2302 = vand.u32 2147483647, %v2249
      %vm2303 = vcmp.eq.f32.partialorder %v2302, 8.507059e+37
      %v2304 = vand.u32 %v2249, 2147483648
      %v2305 = vor.u32 1.1754944e-38, %v2304
      %v2306 = vsel %vm2303, %v2305, %v2301
      %v2307 = vmul.f32 1.0, %v2306
      %v2308 = vrcp.pop %v2250
      %v2309 = vmul.f32 %v2250, %v2308
      %v2310 = vsub.f32 1.0, %v2309
      %v2311 = vmul.f32 %v2308, %v2310
      %v2312 = vadd.f32 %v2308, %v2311
      %vm2313 = vweird.f32 %v2250
      %vm2314 = vweird.f32 %v2308
      %vm2315 = vmor %vm2313, %vm2314
      %v2316 = vsel %vm2315, %v2308, %v2312
      %v2317 = vand.u32 2147483647, %v2250
      %vm2318 = vcmp.eq.f32.partialorder %v2317, 8.507059e+37
      %v2319 = vand.u32 %v2250, 2147483648
      %v2320 = vor.u32 1.1754944e-38, %v2319
      %v2321 = vsel %vm2318, %v2320, %v2316
      %v2322 = vmul.f32 1.0, %v2321
      %v2323 = vrcp.pop %v2251
      %v2324 = vmul.f32 %v2251, %v2323
      %v2325 = vsub.f32 1.0, %v2324
      %v2326 = vmul.f32 %v2323, %v2325
      %v2327 = vadd.f32 %v2323, %v2326
      %vm2328 = vweird.f32 %v2251
      %vm2329 = vweird.f32 %v2323
      %vm2330 = vmor %vm2328, %vm2329
      %v2331 = vsel %vm2330, %v2323, %v2327
      %v2332 = vand.u32 2147483647, %v2251
      %vm2333 = vcmp.eq.f32.partialorder %v2332, 8.507059e+37
      %v2334 = vand.u32 %v2251, 2147483648
      %v2335 = vor.u32 1.1754944e-38, %v2334
      %v2336 = vsel %vm2333, %v2335, %v2331
      %v2337 = vmul.f32 1.0, %v2336
      %v2338 = vrcp.pop %v2252
      %v2339 = vmul.f32 %v2252, %v2338
      %v2340 = vsub.f32 1.0, %v2339
      %v2341 = vmul.f32 %v2338, %v2340
      %v2342 = vadd.f32 %v2338, %v2341
      %vm2343 = vweird.f32 %v2252
      %vm2344 = vweird.f32 %v2338
      %vm2345 = vmor %vm2343, %vm2344
      %v2346 = vsel %vm2345, %v2338, %v2342
      %v2347 = vand.u32 2147483647, %v2252
      %vm2348 = vcmp.eq.f32.partialorder %v2347, 8.507059e+37
      %v2349 = vand.u32 %v2252, 2147483648
      %v2350 = vor.u32 1.1754944e-38, %v2349
      %v2351 = vsel %vm2348, %v2350, %v2346
      %v2352 = vmul.f32 1.0, %v2351
      %v2353 = vrcp.pop %v2253
      %v2354 = vmul.f32 %v2253, %v2353
      %v2355 = vsub.f32 1.0, %v2354
      %v2356 = vmul.f32 %v2353, %v2355
      %v2357 = vadd.f32 %v2353, %v2356
      %vm2358 = vweird.f32 %v2253
      %vm2359 = vweird.f32 %v2353
      %vm2360 = vmor %vm2358, %vm2359
      %v2361 = vsel %vm2360, %v2353, %v2357
      %v2362 = vand.u32 2147483647, %v2253
      %vm2363 = vcmp.eq.f32.partialorder %v2362, 8.507059e+37
      %v2364 = vand.u32 %v2253, 2147483648
      %v2365 = vor.u32 1.1754944e-38, %v2364
      %v2366 = vsel %vm2363, %v2365, %v2361
      %v2367 = vmul.f32 1.0, %v2366
      %v2368 = vrcp.pop %v2254
      %v2369 = vmul.f32 %v2254, %v2368
      %v2370 = vsub.f32 1.0, %v2369
      %v2371 = vmul.f32 %v2368, %v2370
      %v2372 = vadd.f32 %v2368, %v2371
      %vm2373 = vweird.f32 %v2254
      %vm2374 = vweird.f32 %v2368
      %vm2375 = vmor %vm2373, %vm2374
      %v2376 = vsel %vm2375, %v2368, %v2372
      %v2377 = vand.u32 2147483647, %v2254
      %vm2378 = vcmp.eq.f32.partialorder %v2377, 8.507059e+37
      %v2379 = vand.u32 %v2254, 2147483648
      %v2380 = vor.u32 1.1754944e-38, %v2379
      %v2381 = vsel %vm2378, %v2380, %v2376
      %v2382 = vmul.f32 1.0, %v2381
      %v2383 = vrcp.pop %v2255
      %v2384 = vmul.f32 %v2255, %v2383
      %v2385 = vsub.f32 1.0, %v2384
      %v2386 = vmul.f32 %v2383, %v2385
      %v2387 = vadd.f32 %v2383, %v2386
      %vm2388 = vweird.f32 %v2255
      %vm2389 = vweird.f32 %v2383
      %vm2390 = vmor %vm2388, %vm2389
      %v2391 = vsel %vm2390, %v2383, %v2387
      %v2392 = vand.u32 2147483647, %v2255
      %vm2393 = vcmp.eq.f32.partialorder %v2392, 8.507059e+37
      %v2394 = vand.u32 %v2255, 2147483648
      %v2395 = vor.u32 1.1754944e-38, %v2394
      %v2396 = vsel %vm2393, %v2395, %v2391
      %v2397 = vmul.f32 1.0, %v2396
      %v2398 = vrcp.pop %v2256
      %v2399 = vmul.f32 %v2256, %v2398
      %v2400 = vsub.f32 1.0, %v2399
      %v2401 = vmul.f32 %v2398, %v2400
      %v2402 = vadd.f32 %v2398, %v2401
      %vm2403 = vweird.f32 %v2256
      %vm2404 = vweird.f32 %v2398
      %vm2405 = vmor %vm2403, %vm2404
      %v2406 = vsel %vm2405, %v2398, %v2402
      %v2407 = vand.u32 2147483647, %v2256
      %vm2408 = vcmp.eq.f32.partialorder %v2407, 8.507059e+37
      %v2409 = vand.u32 %v2256, 2147483648
      %v2410 = vor.u32 1.1754944e-38, %v2409
      %v2411 = vsel %vm2408, %v2410, %v2406
      %v2412 = vmul.f32 1.0, %v2411
      %v2413 = vrcp.pop %v2257
      %v2414 = vmul.f32 %v2257, %v2413
      %v2415 = vsub.f32 1.0, %v2414
      %v2416 = vmul.f32 %v2413, %v2415
      %v2417 = vadd.f32 %v2413, %v2416
      %vm2418 = vweird.f32 %v2257
      %vm2419 = vweird.f32 %v2413
      %vm2420 = vmor %vm2418, %vm2419
      %v2421 = vsel %vm2420, %v2413, %v2417
      %v2422 = vand.u32 2147483647, %v2257
      %vm2423 = vcmp.eq.f32.partialorder %v2422, 8.507059e+37
      %v2424 = vand.u32 %v2257, 2147483648
      %v2425 = vor.u32 1.1754944e-38, %v2424
      %v2426 = vsel %vm2423, %v2425, %v2421
      %v2427 = vmul.f32 1.0, %v2426
      %v2428 = vrcp.pop %v2258
      %v2429 = vmul.f32 %v2258, %v2428
      %v2430 = vsub.f32 1.0, %v2429
      %v2431 = vmul.f32 %v2428, %v2430
      %v2432 = vadd.f32 %v2428, %v2431
      %vm2433 = vweird.f32 %v2258
      %vm2434 = vweird.f32 %v2428
      %vm2435 = vmor %vm2433, %vm2434
      %v2436 = vsel %vm2435, %v2428, %v2432
      %v2437 = vand.u32 2147483647, %v2258
      %vm2438 = vcmp.eq.f32.partialorder %v2437, 8.507059e+37
      %v2439 = vand.u32 %v2258, 2147483648
      %v2440 = vor.u32 1.1754944e-38, %v2439
      %v2441 = vsel %vm2438, %v2440, %v2436
      %v2442 = vmul.f32 1.0, %v2441
      %v2443 = vrcp.pop %v2259
      %v2444 = vmul.f32 %v2259, %v2443
      %v2445 = vsub.f32 1.0, %v2444
      %v2446 = vmul.f32 %v2443, %v2445
      %v2447 = vadd.f32 %v2443, %v2446
      %vm2448 = vweird.f32 %v2259
      %vm2449 = vweird.f32 %v2443
      %vm2450 = vmor %vm2448, %vm2449
      %v2451 = vsel %vm2450, %v2443, %v2447
      %v2452 = vand.u32 2147483647, %v2259
      %vm2453 = vcmp.eq.f32.partialorder %v2452, 8.507059e+37
      %v2454 = vand.u32 %v2259, 2147483648
      %v2455 = vor.u32 1.1754944e-38, %v2454
      %v2456 = vsel %vm2453, %v2455, %v2451
      %v2457 = vmul.f32 1.0, %v2456
      %v2458 = vrcp.pop %v2260
      %v2459 = vmul.f32 %v2260, %v2458
      %v2460 = vsub.f32 1.0, %v2459
      %v2461 = vmul.f32 %v2458, %v2460
      %v2462 = vadd.f32 %v2458, %v2461
      %vm2463 = vweird.f32 %v2260
      %vm2464 = vweird.f32 %v2458
      %vm2465 = vmor %vm2463, %vm2464
      %v2466 = vsel %vm2465, %v2458, %v2462
      %v2467 = vand.u32 2147483647, %v2260
      %vm2468 = vcmp.eq.f32.partialorder %v2467, 8.507059e+37
      %v2469 = vand.u32 %v2260, 2147483648
      %v2470 = vor.u32 1.1754944e-38, %v2469
      %v2471 = vsel %vm2468, %v2470, %v2466
      %v2472 = vmul.f32 1.0, %v2471
      %v2473 = vrcp.pop %v2261
      %v2474 = vmul.f32 %v2261, %v2473
      %v2475 = vsub.f32 1.0, %v2474
      %v2476 = vmul.f32 %v2473, %v2475
      %v2477 = vadd.f32 %v2473, %v2476
      %vm2478 = vweird.f32 %v2261
      %vm2479 = vweird.f32 %v2473
      %vm2480 = vmor %vm2478, %vm2479
      %v2481 = vsel %vm2480, %v2473, %v2477
      %v2482 = vand.u32 2147483647, %v2261
      %vm2483 = vcmp.eq.f32.partialorder %v2482, 8.507059e+37
      %v2484 = vand.u32 %v2261, 2147483648
      %v2485 = vor.u32 1.1754944e-38, %v2484
      %v2486 = vsel %vm2483, %v2485, %v2481
      %v2487 = vmul.f32 1.0, %v2486
      %v2488 = vrcp.pop %v2262
      %v2489 = vmul.f32 %v2262, %v2488
      %v2490 = vsub.f32 1.0, %v2489
      %v2491 = vmul.f32 %v2488, %v2490
      %v2492 = vadd.f32 %v2488, %v2491
      %vm2493 = vweird.f32 %v2262
      %vm2494 = vweird.f32 %v2488
      %vm2495 = vmor %vm2493, %vm2494
      %v2496 = vsel %vm2495, %v2488, %v2492
      %v2497 = vand.u32 2147483647, %v2262
      %vm2498 = vcmp.eq.f32.partialorder %v2497, 8.507059e+37
      %v2499 = vand.u32 %v2262, 2147483648
      %v2500 = vor.u32 1.1754944e-38, %v2499
      %v2501 = vsel %vm2498, %v2500, %v2496
      %v2502 = vmul.f32 1.0, %v2501
      %v2503 = vmul.f32 %v392, %v2277
      %v2504 = vmul.f32 %v393, %v2292
      %v2505 = vmul.f32 %v394, %v2307
      %v2506 = vmul.f32 %v395, %v2322
      %v2507 = vmul.f32 %v396, %v2337
      %v2508 = vmul.f32 %v397, %v2352
      %v2509 = vmul.f32 %v398, %v2367
      %v2510 = vmul.f32 %v399, %v2382
      %v2511 = vmul.f32 %v400, %v2397
      %v2512 = vmul.f32 %v401, %v2412
      %v2513 = vmul.f32 %v402, %v2427
      %v2514 = vmul.f32 %v403, %v2442
      %v2515 = vmul.f32 %v404, %v2457
      %v2516 = vmul.f32 %v405, %v2472
      %v2517 = vmul.f32 %v406, %v2487
      %v2518 = vmul.f32 %v407, %v2502
      %v2519 = vpack.c.bf16 %v393, %v392
      %v2520 = vpack.c.bf16 %v395, %v394
      %v2521 = vpack.c.bf16 %v397, %v396
      %v2522 = vpack.c.bf16 %v399, %v398
      %v2523 = vpack.c.bf16 %v401, %v400
      %v2524 = vpack.c.bf16 %v403, %v402
      %v2525 = vpack.c.bf16 %v405, %v404
      %v2526 = vpack.c.bf16 %v407, %v406
      %v2527 = vpack.c.bf16 %v2504, %v2503
      %v2528 = vpack.c.bf16 %v2506, %v2505
      %v2529 = vpack.c.bf16 %v2508, %v2507
      %v2530 = vpack.c.bf16 %v2510, %v2509
      %v2531 = vpack.c.bf16 %v2512, %v2511
      %v2532 = vpack.c.bf16 %v2514, %v2513
      %v2533 = vpack.c.bf16 %v2516, %v2515
      %v2534 = vpack.c.bf16 %v2518, %v2517
      %v2535 = vld [vmem:[%s3] sm:$0xff]
      %v2536 = vld [vmem:[%s3 + $0x8] sm:$0xff]
      %v2537 = vld [vmem:[%s3 + $0x10] sm:$0xff]
      %v2538 = vld [vmem:[%s3 + $0x18] sm:$0xff]
      %v2539 = vld [vmem:[%s3 + $0x20] sm:$0xff]
      %v2540 = vld [vmem:[%s3 + $0x28] sm:$0xff]
      %v2541 = vld [vmem:[%s3 + $0x30] sm:$0xff]
      %v2542 = vld [vmem:[%s3 + $0x38] sm:$0xff]
      %v2543 = vld [vmem:[%s3 + $0x40] sm:$0xff]
      %v2544 = vld [vmem:[%s3 + $0x48] sm:$0xff]
      %v2545 = vld [vmem:[%s3 + $0x50] sm:$0xff]
      %v2546 = vld [vmem:[%s3 + $0x58] sm:$0xff]
      %v2547 = vld [vmem:[%s3 + $0x60] sm:$0xff]
      %v2548 = vld [vmem:[%s3 + $0x68] sm:$0xff]
      %v2549 = vld [vmem:[%s3 + $0x70] sm:$0xff]
      %v2550 = vld [vmem:[%s3 + $0x78] sm:$0xff]
      %v2551 = vld [vmem:[%s3 + $0x80] sm:$0xff]
      %v2552 = vld [vmem:[%s3 + $0x88] sm:$0xff]
      %v2553 = vld [vmem:[%s3 + $0x90] sm:$0xff]
      %v2554 = vld [vmem:[%s3 + $0x98] sm:$0xff]
      %v2555 = vld [vmem:[%s3 + $0xa0] sm:$0xff]
      %v2556 = vld [vmem:[%s3 + $0xa8] sm:$0xff]
      %v2557 = vld [vmem:[%s3 + $0xb0] sm:$0xff]
      %v2558 = vld [vmem:[%s3 + $0xb8] sm:$0xff]
      %v2559 = vld [vmem:[%s3 + $0xc0] sm:$0xff]
      %v2560 = vld [vmem:[%s3 + $0xc8] sm:$0xff]
      %v2561 = vld [vmem:[%s3 + $0xd0] sm:$0xff]
      %v2562 = vld [vmem:[%s3 + $0xd8] sm:$0xff]
      %v2563 = vld [vmem:[%s3 + $0xe0] sm:$0xff]
      %v2564 = vld [vmem:[%s3 + $0xe8] sm:$0xff]
      %v2565 = vld [vmem:[%s3 + $0xf0] sm:$0xff]
      %v2566 = vld [vmem:[%s3 + $0xf8] sm:$0xff]
      %v2567 = vld [vmem:[%s3 + $0x100] sm:$0xff]
      %v2568 = vld [vmem:[%s3 + $0x108] sm:$0xff]
      %v2569 = vld [vmem:[%s3 + $0x110] sm:$0xff]
      %v2570 = vld [vmem:[%s3 + $0x118] sm:$0xff]
      %v2571 = vld [vmem:[%s3 + $0x120] sm:$0xff]
      %v2572 = vld [vmem:[%s3 + $0x128] sm:$0xff]
      %v2573 = vld [vmem:[%s3 + $0x130] sm:$0xff]
      %v2574 = vld [vmem:[%s3 + $0x138] sm:$0xff]
      %v2575 = vld [vmem:[%s3 + $0x140] sm:$0xff]
      %v2576 = vld [vmem:[%s3 + $0x148] sm:$0xff]
      %v2577 = vld [vmem:[%s3 + $0x150] sm:$0xff]
      %v2578 = vld [vmem:[%s3 + $0x158] sm:$0xff]
      %v2579 = vld [vmem:[%s3 + $0x160] sm:$0xff]
      %v2580 = vld [vmem:[%s3 + $0x168] sm:$0xff]
      %v2581 = vld [vmem:[%s3 + $0x170] sm:$0xff]
      %v2582 = vld [vmem:[%s3 + $0x178] sm:$0xff]
      %v2583 = vld [vmem:[%s3 + $0x180] sm:$0xff]
      %v2584 = vld [vmem:[%s3 + $0x188] sm:$0xff]
      %v2585 = vld [vmem:[%s3 + $0x190] sm:$0xff]
      %v2586 = vld [vmem:[%s3 + $0x198] sm:$0xff]
      %v2587 = vld [vmem:[%s3 + $0x1a0] sm:$0xff]
      %v2588 = vld [vmem:[%s3 + $0x1a8] sm:$0xff]
      %v2589 = vld [vmem:[%s3 + $0x1b0] sm:$0xff]
      %v2590 = vld [vmem:[%s3 + $0x1b8] sm:$0xff]
      %v2591 = vld [vmem:[%s3 + $0x1c0] sm:$0xff]
      %v2592 = vld [vmem:[%s3 + $0x1c8] sm:$0xff]
      %v2593 = vld [vmem:[%s3 + $0x1d0] sm:$0xff]
      %v2594 = vld [vmem:[%s3 + $0x1d8] sm:$0xff]
      %v2595 = vld [vmem:[%s3 + $0x1e0] sm:$0xff]
      %v2596 = vld [vmem:[%s3 + $0x1e8] sm:$0xff]
      %v2597 = vld [vmem:[%s3 + $0x1f0] sm:$0xff]
      %v2598 = vld [vmem:[%s3 + $0x1f8] sm:$0xff]
      %v2663 = vunpack.c.l.b16 %v2535
      %v2664 = vunpack.c.h.b16 %v2535
      %v2665 = vunpack.c.l.b16 %v2536
      %v2666 = vunpack.c.h.b16 %v2536
      %v2667 = vunpack.c.l.b16 %v2537
      %v2668 = vunpack.c.h.b16 %v2537
      %v2669 = vunpack.c.l.b16 %v2538
      %v2670 = vunpack.c.h.b16 %v2538
      %v2671 = vunpack.c.l.b16 %v2539
      %v2672 = vunpack.c.h.b16 %v2539
      %v2673 = vunpack.c.l.b16 %v2540
      %v2674 = vunpack.c.h.b16 %v2540
      %v2675 = vunpack.c.l.b16 %v2541
      %v2676 = vunpack.c.h.b16 %v2541
      %v2677 = vunpack.c.l.b16 %v2542
      %v2678 = vunpack.c.h.b16 %v2542
      %v2679 = vunpack.c.l.b16 %v2543
      %v2680 = vunpack.c.h.b16 %v2543
      %v2681 = vunpack.c.l.b16 %v2544
      %v2682 = vunpack.c.h.b16 %v2544
      %v2683 = vunpack.c.l.b16 %v2545
      %v2684 = vunpack.c.h.b16 %v2545
      %v2685 = vunpack.c.l.b16 %v2546
      %v2686 = vunpack.c.h.b16 %v2546
      %v2687 = vunpack.c.l.b16 %v2547
      %v2688 = vunpack.c.h.b16 %v2547
      %v2689 = vunpack.c.l.b16 %v2548
      %v2690 = vunpack.c.h.b16 %v2548
      %v2691 = vunpack.c.l.b16 %v2549
      %v2692 = vunpack.c.h.b16 %v2549
      %v2693 = vunpack.c.l.b16 %v2550
      %v2694 = vunpack.c.h.b16 %v2550
      %v2695 = vunpack.c.l.b16 %v2551
      %v2696 = vunpack.c.h.b16 %v2551
      %v2697 = vunpack.c.l.b16 %v2552
      %v2698 = vunpack.c.h.b16 %v2552
      %v2699 = vunpack.c.l.b16 %v2553
      %v2700 = vunpack.c.h.b16 %v2553
      %v2701 = vunpack.c.l.b16 %v2554
      %v2702 = vunpack.c.h.b16 %v2554
      %v2703 = vunpack.c.l.b16 %v2555
      %v2704 = vunpack.c.h.b16 %v2555
      %v2705 = vunpack.c.l.b16 %v2556
      %v2706 = vunpack.c.h.b16 %v2556
      %v2707 = vunpack.c.l.b16 %v2557
      %v2708 = vunpack.c.h.b16 %v2557
      %v2709 = vunpack.c.l.b16 %v2558
      %v2710 = vunpack.c.h.b16 %v2558
      %v2711 = vunpack.c.l.b16 %v2559
      %v2712 = vunpack.c.h.b16 %v2559
      %v2713 = vunpack.c.l.b16 %v2560
      %v2714 = vunpack.c.h.b16 %v2560
      %v2715 = vunpack.c.l.b16 %v2561
      %v2716 = vunpack.c.h.b16 %v2561
      %v2717 = vunpack.c.l.b16 %v2562
      %v2718 = vunpack.c.h.b16 %v2562
      %v2719 = vunpack.c.l.b16 %v2563
      %v2720 = vunpack.c.h.b16 %v2563
      %v2721 = vunpack.c.l.b16 %v2564
      %v2722 = vunpack.c.h.b16 %v2564
      %v2723 = vunpack.c.l.b16 %v2565
      %v2724 = vunpack.c.h.b16 %v2565
      %v2725 = vunpack.c.l.b16 %v2566
      %v2726 = vunpack.c.h.b16 %v2566
      %v2727 = vunpack.c.l.b16 %v2567
      %v2728 = vunpack.c.h.b16 %v2567
      %v2729 = vunpack.c.l.b16 %v2568
      %v2730 = vunpack.c.h.b16 %v2568
      %v2731 = vunpack.c.l.b16 %v2569
      %v2732 = vunpack.c.h.b16 %v2569
      %v2733 = vunpack.c.l.b16 %v2570
      %v2734 = vunpack.c.h.b16 %v2570
      %v2735 = vunpack.c.l.b16 %v2571
      %v2736 = vunpack.c.h.b16 %v2571
      %v2737 = vunpack.c.l.b16 %v2572
      %v2738 = vunpack.c.h.b16 %v2572
      %v2739 = vunpack.c.l.b16 %v2573
      %v2740 = vunpack.c.h.b16 %v2573
      %v2741 = vunpack.c.l.b16 %v2574
      %v2742 = vunpack.c.h.b16 %v2574
      %v2743 = vunpack.c.l.b16 %v2575
      %v2744 = vunpack.c.h.b16 %v2575
      %v2745 = vunpack.c.l.b16 %v2576
      %v2746 = vunpack.c.h.b16 %v2576
      %v2747 = vunpack.c.l.b16 %v2577
      %v2748 = vunpack.c.h.b16 %v2577
      %v2749 = vunpack.c.l.b16 %v2578
      %v2750 = vunpack.c.h.b16 %v2578
      %v2751 = vunpack.c.l.b16 %v2579
      %v2752 = vunpack.c.h.b16 %v2579
      %v2753 = vunpack.c.l.b16 %v2580
      %v2754 = vunpack.c.h.b16 %v2580
      %v2755 = vunpack.c.l.b16 %v2581
      %v2756 = vunpack.c.h.b16 %v2581
      %v2757 = vunpack.c.l.b16 %v2582
      %v2758 = vunpack.c.h.b16 %v2582
      %v2759 = vunpack.c.l.b16 %v2583
      %v2760 = vunpack.c.h.b16 %v2583
      %v2761 = vunpack.c.l.b16 %v2584
      %v2762 = vunpack.c.h.b16 %v2584
      %v2763 = vunpack.c.l.b16 %v2585
      %v2764 = vunpack.c.h.b16 %v2585
      %v2765 = vunpack.c.l.b16 %v2586
      %v2766 = vunpack.c.h.b16 %v2586
      %v2767 = vunpack.c.l.b16 %v2587
      %v2768 = vunpack.c.h.b16 %v2587
      %v2769 = vunpack.c.l.b16 %v2588
      %v2770 = vunpack.c.h.b16 %v2588
      %v2771 = vunpack.c.l.b16 %v2589
      %v2772 = vunpack.c.h.b16 %v2589
      %v2773 = vunpack.c.l.b16 %v2590
      %v2774 = vunpack.c.h.b16 %v2590
      %v2775 = vunpack.c.l.b16 %v2591
      %v2776 = vunpack.c.h.b16 %v2591
      %v2777 = vunpack.c.l.b16 %v2592
      %v2778 = vunpack.c.h.b16 %v2592
      %v2779 = vunpack.c.l.b16 %v2593
      %v2780 = vunpack.c.h.b16 %v2593
      %v2781 = vunpack.c.l.b16 %v2594
      %v2782 = vunpack.c.h.b16 %v2594
      %v2783 = vunpack.c.l.b16 %v2595
      %v2784 = vunpack.c.h.b16 %v2595
      %v2785 = vunpack.c.l.b16 %v2596
      %v2786 = vunpack.c.h.b16 %v2596
      %v2787 = vunpack.c.l.b16 %v2597
      %v2788 = vunpack.c.h.b16 %v2597
      %v2789 = vunpack.c.l.b16 %v2598
      %v2790 = vunpack.c.h.b16 %v2598
      %v2791 = vpack.c.b16 %v2671, %v2663
      %v2792 = vpack.c.b16 %v2672, %v2664
      %v2793 = vpack.c.b16 %v2673, %v2665
      %v2794 = vpack.c.b16 %v2674, %v2666
      %v2795 = vpack.c.b16 %v2675, %v2667
      %v2796 = vpack.c.b16 %v2676, %v2668
      %v2797 = vpack.c.b16 %v2677, %v2669
      %v2798 = vpack.c.b16 %v2678, %v2670
      %v2799 = vpack.c.b16 %v2687, %v2679
      %v2800 = vpack.c.b16 %v2688, %v2680
      %v2801 = vpack.c.b16 %v2689, %v2681
      %v2802 = vpack.c.b16 %v2690, %v2682
      %v2803 = vpack.c.b16 %v2691, %v2683
      %v2804 = vpack.c.b16 %v2692, %v2684
      %v2805 = vpack.c.b16 %v2693, %v2685
      %v2806 = vpack.c.b16 %v2694, %v2686
      %v2807 = vpack.c.b16 %v2703, %v2695
      %v2808 = vpack.c.b16 %v2704, %v2696
      %v2809 = vpack.c.b16 %v2705, %v2697
      %v2810 = vpack.c.b16 %v2706, %v2698
      %v2811 = vpack.c.b16 %v2707, %v2699
      %v2812 = vpack.c.b16 %v2708, %v2700
      %v2813 = vpack.c.b16 %v2709, %v2701
      %v2814 = vpack.c.b16 %v2710, %v2702
      %v2815 = vpack.c.b16 %v2719, %v2711
      %v2816 = vpack.c.b16 %v2720, %v2712
      %v2817 = vpack.c.b16 %v2721, %v2713
      %v2818 = vpack.c.b16 %v2722, %v2714
      %v2819 = vpack.c.b16 %v2723, %v2715
      %v2820 = vpack.c.b16 %v2724, %v2716
      %v2821 = vpack.c.b16 %v2725, %v2717
      %v2822 = vpack.c.b16 %v2726, %v2718
      %v2823 = vpack.c.b16 %v2735, %v2727
      %v2824 = vpack.c.b16 %v2736, %v2728
      %v2825 = vpack.c.b16 %v2737, %v2729
      %v2826 = vpack.c.b16 %v2738, %v2730
      %v2827 = vpack.c.b16 %v2739, %v2731
      %v2828 = vpack.c.b16 %v2740, %v2732
      %v2829 = vpack.c.b16 %v2741, %v2733
      %v2830 = vpack.c.b16 %v2742, %v2734
      %v2831 = vpack.c.b16 %v2751, %v2743
      %v2832 = vpack.c.b16 %v2752, %v2744
      %v2833 = vpack.c.b16 %v2753, %v2745
      %v2834 = vpack.c.b16 %v2754, %v2746
      %v2835 = vpack.c.b16 %v2755, %v2747
      %v2836 = vpack.c.b16 %v2756, %v2748
      %v2837 = vpack.c.b16 %v2757, %v2749
      %v2838 = vpack.c.b16 %v2758, %v2750
      %v2839 = vpack.c.b16 %v2767, %v2759
      %v2840 = vpack.c.b16 %v2768, %v2760
      %v2841 = vpack.c.b16 %v2769, %v2761
      %v2842 = vpack.c.b16 %v2770, %v2762
      %v2843 = vpack.c.b16 %v2771, %v2763
      %v2844 = vpack.c.b16 %v2772, %v2764
      %v2845 = vpack.c.b16 %v2773, %v2765
      %v2846 = vpack.c.b16 %v2774, %v2766
      %v2847 = vpack.c.b16 %v2783, %v2775
      %v2848 = vpack.c.b16 %v2784, %v2776
      %v2849 = vpack.c.b16 %v2785, %v2777
      %v2850 = vpack.c.b16 %v2786, %v2778
      %v2851 = vpack.c.b16 %v2787, %v2779
      %v2852 = vpack.c.b16 %v2788, %v2780
      %v2853 = vpack.c.b16 %v2789, %v2781
      %v2854 = vpack.c.b16 %v2790, %v2782
      %2919 = vmatpush.bf16.msra.mxu0 %v2847
      %2920 = vmatpush.bf16.msra.mxu0 %v2839
      %2921 = vmatpush.bf16.msra.mxu0 %v2831
      %2922 = vmatpush.bf16.msra.mxu0 %v2823
      %2923 = vmatpush.bf16.msra.mxu0 %v2815
      %2924 = vmatpush.bf16.msra.mxu0 %v2807
      %2925 = vmatpush.bf16.msra.mxu0 %v2799
      %2926 = vmatpush.bf16.msra.mxu0 %v2791
      %2927 = vmatmul.bf16.gmra.mxu0 %v2519
      %v2928 = vpop.f32.mrf.mxu0
      %v2929 = vadd.f32 0.0, %v2928
      %v2930 = vpop.f32.mrf.mxu0
      %v2931 = vadd.f32 0.0, %v2930
      %2932 = vmatmul.bf16.gmra.mxu0 %v2520
      %v2933 = vpop.f32.mrf.mxu0
      %v2934 = vadd.f32 0.0, %v2933
      %v2935 = vpop.f32.mrf.mxu0
      %v2936 = vadd.f32 0.0, %v2935
      %2937 = vmatmul.bf16.gmra.mxu0 %v2521
      %v2938 = vpop.f32.mrf.mxu0
      %v2939 = vadd.f32 0.0, %v2938
      %v2940 = vpop.f32.mrf.mxu0
      %v2941 = vadd.f32 0.0, %v2940
      %2942 = vmatmul.bf16.gmra.mxu0 %v2522
      %v2943 = vpop.f32.mrf.mxu0
      %v2944 = vadd.f32 0.0, %v2943
      %v2945 = vpop.f32.mrf.mxu0
      %v2946 = vadd.f32 0.0, %v2945
      %2947 = vmatmul.bf16.gmra.mxu0 %v2523
      %v2948 = vpop.f32.mrf.mxu0
      %v2949 = vadd.f32 0.0, %v2948
      %v2950 = vpop.f32.mrf.mxu0
      %v2951 = vadd.f32 0.0, %v2950
      %2952 = vmatmul.bf16.gmra.mxu0 %v2524
      %v2953 = vpop.f32.mrf.mxu0
      %v2954 = vadd.f32 0.0, %v2953
      %v2955 = vpop.f32.mrf.mxu0
      %v2956 = vadd.f32 0.0, %v2955
      %2957 = vmatmul.bf16.gmra.mxu0 %v2525
      %v2958 = vpop.f32.mrf.mxu0
      %v2959 = vadd.f32 0.0, %v2958
      %v2960 = vpop.f32.mrf.mxu0
      %v2961 = vadd.f32 0.0, %v2960
      %2962 = vmatmul.bf16.gmra.mxu0 %v2526
      %v2963 = vpop.f32.mrf.mxu0
      %v2964 = vadd.f32 0.0, %v2963
      %v2965 = vpop.f32.mrf.mxu0
      %v2966 = vadd.f32 0.0, %v2965
      %2967 = vmatmul.bf16.gmra.mxu0 %v2527
      %v2968 = vpop.f32.mrf.mxu0
      %v2969 = vadd.f32 0.0, %v2968
      %v2970 = vpop.f32.mrf.mxu0
      %v2971 = vadd.f32 0.0, %v2970
      %2972 = vmatmul.bf16.gmra.mxu0 %v2528
      %v2973 = vpop.f32.mrf.mxu0
      %v2974 = vadd.f32 0.0, %v2973
      %v2975 = vpop.f32.mrf.mxu0
      %v2976 = vadd.f32 0.0, %v2975
      %2977 = vmatmul.bf16.gmra.mxu0 %v2529
      %v2978 = vpop.f32.mrf.mxu0
      %v2979 = vadd.f32 0.0, %v2978
      %v2980 = vpop.f32.mrf.mxu0
      %v2981 = vadd.f32 0.0, %v2980
      %2982 = vmatmul.bf16.gmra.mxu0 %v2530
      %v2983 = vpop.f32.mrf.mxu0
      %v2984 = vadd.f32 0.0, %v2983
      %v2985 = vpop.f32.mrf.mxu0
      %v2986 = vadd.f32 0.0, %v2985
      %2987 = vmatmul.bf16.gmra.mxu0 %v2531
      %v2988 = vpop.f32.mrf.mxu0
      %v2989 = vadd.f32 0.0, %v2988
      %v2990 = vpop.f32.mrf.mxu0
      %v2991 = vadd.f32 0.0, %v2990
      %2992 = vmatmul.bf16.gmra.mxu0 %v2532
      %v2993 = vpop.f32.mrf.mxu0
      %v2994 = vadd.f32 0.0, %v2993
      %v2995 = vpop.f32.mrf.mxu0
      %v2996 = vadd.f32 0.0, %v2995
      %2997 = vmatmul.bf16.gmra.mxu0 %v2533
      %v2998 = vpop.f32.mrf.mxu0
      %v2999 = vadd.f32 0.0, %v2998
      %v3000 = vpop.f32.mrf.mxu0
      %v3001 = vadd.f32 0.0, %v3000
      %3002 = vmatmul.bf16.gmra.mxu0 %v2534
      %v3003 = vpop.f32.mrf.mxu0
      %v3004 = vadd.f32 0.0, %v3003
      %v3005 = vpop.f32.mrf.mxu0
      %v3006 = vadd.f32 0.0, %v3005
      %3007 = vdwg.mxu0
      %3008 = vmatpush.bf16.msra.mxu0 %v2848
      %3009 = vmatpush.bf16.msra.mxu0 %v2840
      %3010 = vmatpush.bf16.msra.mxu0 %v2832
      %3011 = vmatpush.bf16.msra.mxu0 %v2824
      %3012 = vmatpush.bf16.msra.mxu0 %v2816
      %3013 = vmatpush.bf16.msra.mxu0 %v2808
      %3014 = vmatpush.bf16.msra.mxu0 %v2800
      %3015 = vmatpush.bf16.msra.mxu0 %v2792
      %3016 = vmatmul.bf16.gmra.mxu0 %v2519
      %v3017 = vpop.f32.mrf.mxu0
      %v3018 = vadd.f32 0.0, %v3017
      %v3019 = vpop.f32.mrf.mxu0
      %v3020 = vadd.f32 0.0, %v3019
      %3021 = vmatmul.bf16.gmra.mxu0 %v2520
      %v3022 = vpop.f32.mrf.mxu0
      %v3023 = vadd.f32 0.0, %v3022
      %v3024 = vpop.f32.mrf.mxu0
      %v3025 = vadd.f32 0.0, %v3024
      %3026 = vmatmul.bf16.gmra.mxu0 %v2521
      %v3027 = vpop.f32.mrf.mxu0
      %v3028 = vadd.f32 0.0, %v3027
      %v3029 = vpop.f32.mrf.mxu0
      %v3030 = vadd.f32 0.0, %v3029
      %3031 = vmatmul.bf16.gmra.mxu0 %v2522
      %v3032 = vpop.f32.mrf.mxu0
      %v3033 = vadd.f32 0.0, %v3032
      %v3034 = vpop.f32.mrf.mxu0
      %v3035 = vadd.f32 0.0, %v3034
      %3036 = vmatmul.bf16.gmra.mxu0 %v2523
      %v3037 = vpop.f32.mrf.mxu0
      %v3038 = vadd.f32 0.0, %v3037
      %v3039 = vpop.f32.mrf.mxu0
      %v3040 = vadd.f32 0.0, %v3039
      %3041 = vmatmul.bf16.gmra.mxu0 %v2524
      %v3042 = vpop.f32.mrf.mxu0
      %v3043 = vadd.f32 0.0, %v3042
      %v3044 = vpop.f32.mrf.mxu0
      %v3045 = vadd.f32 0.0, %v3044
      %3046 = vmatmul.bf16.gmra.mxu0 %v2525
      %v3047 = vpop.f32.mrf.mxu0
      %v3048 = vadd.f32 0.0, %v3047
      %v3049 = vpop.f32.mrf.mxu0
      %v3050 = vadd.f32 0.0, %v3049
      %3051 = vmatmul.bf16.gmra.mxu0 %v2526
      %v3052 = vpop.f32.mrf.mxu0
      %v3053 = vadd.f32 0.0, %v3052
      %v3054 = vpop.f32.mrf.mxu0
      %v3055 = vadd.f32 0.0, %v3054
      %3056 = vmatmul.bf16.gmra.mxu0 %v2527
      %v3057 = vpop.f32.mrf.mxu0
      %v3058 = vadd.f32 0.0, %v3057
      %v3059 = vpop.f32.mrf.mxu0
      %v3060 = vadd.f32 0.0, %v3059
      %3061 = vmatmul.bf16.gmra.mxu0 %v2528
      %v3062 = vpop.f32.mrf.mxu0
      %v3063 = vadd.f32 0.0, %v3062
      %v3064 = vpop.f32.mrf.mxu0
      %v3065 = vadd.f32 0.0, %v3064
      %3066 = vmatmul.bf16.gmra.mxu0 %v2529
      %v3067 = vpop.f32.mrf.mxu0
      %v3068 = vadd.f32 0.0, %v3067
      %v3069 = vpop.f32.mrf.mxu0
      %v3070 = vadd.f32 0.0, %v3069
      %3071 = vmatmul.bf16.gmra.mxu0 %v2530
      %v3072 = vpop.f32.mrf.mxu0
      %v3073 = vadd.f32 0.0, %v3072
      %v3074 = vpop.f32.mrf.mxu0
      %v3075 = vadd.f32 0.0, %v3074
      %3076 = vmatmul.bf16.gmra.mxu0 %v2531
      %v3077 = vpop.f32.mrf.mxu0
      %v3078 = vadd.f32 0.0, %v3077
      %v3079 = vpop.f32.mrf.mxu0
      %v3080 = vadd.f32 0.0, %v3079
      %3081 = vmatmul.bf16.gmra.mxu0 %v2532
      %v3082 = vpop.f32.mrf.mxu0
      %v3083 = vadd.f32 0.0, %v3082
      %v3084 = vpop.f32.mrf.mxu0
      %v3085 = vadd.f32 0.0, %v3084
      %3086 = vmatmul.bf16.gmra.mxu0 %v2533
      %v3087 = vpop.f32.mrf.mxu0
      %v3088 = vadd.f32 0.0, %v3087
      %v3089 = vpop.f32.mrf.mxu0
      %v3090 = vadd.f32 0.0, %v3089
      %3091 = vmatmul.bf16.gmra.mxu0 %v2534
      %v3092 = vpop.f32.mrf.mxu0
      %v3093 = vadd.f32 0.0, %v3092
      %v3094 = vpop.f32.mrf.mxu0
      %v3095 = vadd.f32 0.0, %v3094
      %3096 = vdwg.mxu0
      %3097 = vmatpush.bf16.msra.mxu0 %v2849
      %3098 = vmatpush.bf16.msra.mxu0 %v2841
      %3099 = vmatpush.bf16.msra.mxu0 %v2833
      %3100 = vmatpush.bf16.msra.mxu0 %v2825
      %3101 = vmatpush.bf16.msra.mxu0 %v2817
      %3102 = vmatpush.bf16.msra.mxu0 %v2809
      %3103 = vmatpush.bf16.msra.mxu0 %v2801
      %3104 = vmatpush.bf16.msra.mxu0 %v2793
      %3105 = vmatmul.bf16.gmra.mxu0 %v2519
      %v3106 = vpop.f32.mrf.mxu0
      %v3107 = vadd.f32 0.0, %v3106
      %v3108 = vpop.f32.mrf.mxu0
      %v3109 = vadd.f32 0.0, %v3108
      %3110 = vmatmul.bf16.gmra.mxu0 %v2520
      %v3111 = vpop.f32.mrf.mxu0
      %v3112 = vadd.f32 0.0, %v3111
      %v3113 = vpop.f32.mrf.mxu0
      %v3114 = vadd.f32 0.0, %v3113
      %3115 = vmatmul.bf16.gmra.mxu0 %v2521
      %v3116 = vpop.f32.mrf.mxu0
      %v3117 = vadd.f32 0.0, %v3116
      %v3118 = vpop.f32.mrf.mxu0
      %v3119 = vadd.f32 0.0, %v3118
      %3120 = vmatmul.bf16.gmra.mxu0 %v2522
      %v3121 = vpop.f32.mrf.mxu0
      %v3122 = vadd.f32 0.0, %v3121
      %v3123 = vpop.f32.mrf.mxu0
      %v3124 = vadd.f32 0.0, %v3123
      %3125 = vmatmul.bf16.gmra.mxu0 %v2523
      %v3126 = vpop.f32.mrf.mxu0
      %v3127 = vadd.f32 0.0, %v3126
      %v3128 = vpop.f32.mrf.mxu0
      %v3129 = vadd.f32 0.0, %v3128
      %3130 = vmatmul.bf16.gmra.mxu0 %v2524
      %v3131 = vpop.f32.mrf.mxu0
      %v3132 = vadd.f32 0.0, %v3131
      %v3133 = vpop.f32.mrf.mxu0
      %v3134 = vadd.f32 0.0, %v3133
      %3135 = vmatmul.bf16.gmra.mxu0 %v2525
      %v3136 = vpop.f32.mrf.mxu0
      %v3137 = vadd.f32 0.0, %v3136
      %v3138 = vpop.f32.mrf.mxu0
      %v3139 = vadd.f32 0.0, %v3138
      %3140 = vmatmul.bf16.gmra.mxu0 %v2526
      %v3141 = vpop.f32.mrf.mxu0
      %v3142 = vadd.f32 0.0, %v3141
      %v3143 = vpop.f32.mrf.mxu0
      %v3144 = vadd.f32 0.0, %v3143
      %3145 = vmatmul.bf16.gmra.mxu0 %v2527
      %v3146 = vpop.f32.mrf.mxu0
      %v3147 = vadd.f32 0.0, %v3146
      %v3148 = vpop.f32.mrf.mxu0
      %v3149 = vadd.f32 0.0, %v3148
      %3150 = vmatmul.bf16.gmra.mxu0 %v2528
      %v3151 = vpop.f32.mrf.mxu0
      %v3152 = vadd.f32 0.0, %v3151
      %v3153 = vpop.f32.mrf.mxu0
      %v3154 = vadd.f32 0.0, %v3153
      %3155 = vmatmul.bf16.gmra.mxu0 %v2529
      %v3156 = vpop.f32.mrf.mxu0
      %v3157 = vadd.f32 0.0, %v3156
      %v3158 = vpop.f32.mrf.mxu0
      %v3159 = vadd.f32 0.0, %v3158
      %3160 = vmatmul.bf16.gmra.mxu0 %v2530
      %v3161 = vpop.f32.mrf.mxu0
      %v3162 = vadd.f32 0.0, %v3161
      %v3163 = vpop.f32.mrf.mxu0
      %v3164 = vadd.f32 0.0, %v3163
      %3165 = vmatmul.bf16.gmra.mxu0 %v2531
      %v3166 = vpop.f32.mrf.mxu0
      %v3167 = vadd.f32 0.0, %v3166
      %v3168 = vpop.f32.mrf.mxu0
      %v3169 = vadd.f32 0.0, %v3168
      %3170 = vmatmul.bf16.gmra.mxu0 %v2532
      %v3171 = vpop.f32.mrf.mxu0
      %v3172 = vadd.f32 0.0, %v3171
      %v3173 = vpop.f32.mrf.mxu0
      %v3174 = vadd.f32 0.0, %v3173
      %3175 = vmatmul.bf16.gmra.mxu0 %v2533
      %v3176 = vpop.f32.mrf.mxu0
      %v3177 = vadd.f32 0.0, %v3176
      %v3178 = vpop.f32.mrf.mxu0
      %v3179 = vadd.f32 0.0, %v3178
      %3180 = vmatmul.bf16.gmra.mxu0 %v2534
      %v3181 = vpop.f32.mrf.mxu0
      %v3182 = vadd.f32 0.0, %v3181
      %v3183 = vpop.f32.mrf.mxu0
      %v3184 = vadd.f32 0.0, %v3183
      %3185 = vdwg.mxu0
      %3186 = vmatpush.bf16.msra.mxu0 %v2850
      %3187 = vmatpush.bf16.msra.mxu0 %v2842
      %3188 = vmatpush.bf16.msra.mxu0 %v2834
      %3189 = vmatpush.bf16.msra.mxu0 %v2826
      %3190 = vmatpush.bf16.msra.mxu0 %v2818
      %3191 = vmatpush.bf16.msra.mxu0 %v2810
      %3192 = vmatpush.bf16.msra.mxu0 %v2802
      %3193 = vmatpush.bf16.msra.mxu0 %v2794
      %3194 = vmatmul.bf16.gmra.mxu0 %v2519
      %v3195 = vpop.f32.mrf.mxu0
      %v3196 = vadd.f32 0.0, %v3195
      %v3197 = vpop.f32.mrf.mxu0
      %v3198 = vadd.f32 0.0, %v3197
      %3199 = vmatmul.bf16.gmra.mxu0 %v2520
      %v3200 = vpop.f32.mrf.mxu0
      %v3201 = vadd.f32 0.0, %v3200
      %v3202 = vpop.f32.mrf.mxu0
      %v3203 = vadd.f32 0.0, %v3202
      %3204 = vmatmul.bf16.gmra.mxu0 %v2521
      %v3205 = vpop.f32.mrf.mxu0
      %v3206 = vadd.f32 0.0, %v3205
      %v3207 = vpop.f32.mrf.mxu0
      %v3208 = vadd.f32 0.0, %v3207
      %3209 = vmatmul.bf16.gmra.mxu0 %v2522
      %v3210 = vpop.f32.mrf.mxu0
      %v3211 = vadd.f32 0.0, %v3210
      %v3212 = vpop.f32.mrf.mxu0
      %v3213 = vadd.f32 0.0, %v3212
      %3214 = vmatmul.bf16.gmra.mxu0 %v2523
      %v3215 = vpop.f32.mrf.mxu0
      %v3216 = vadd.f32 0.0, %v3215
      %v3217 = vpop.f32.mrf.mxu0
      %v3218 = vadd.f32 0.0, %v3217
      %3219 = vmatmul.bf16.gmra.mxu0 %v2524
      %v3220 = vpop.f32.mrf.mxu0
      %v3221 = vadd.f32 0.0, %v3220
      %v3222 = vpop.f32.mrf.mxu0
      %v3223 = vadd.f32 0.0, %v3222
      %3224 = vmatmul.bf16.gmra.mxu0 %v2525
      %v3225 = vpop.f32.mrf.mxu0
      %v3226 = vadd.f32 0.0, %v3225
      %v3227 = vpop.f32.mrf.mxu0
      %v3228 = vadd.f32 0.0, %v3227
      %3229 = vmatmul.bf16.gmra.mxu0 %v2526
      %v3230 = vpop.f32.mrf.mxu0
      %v3231 = vadd.f32 0.0, %v3230
      %v3232 = vpop.f32.mrf.mxu0
      %v3233 = vadd.f32 0.0, %v3232
      %3234 = vmatmul.bf16.gmra.mxu0 %v2527
      %v3235 = vpop.f32.mrf.mxu0
      %v3236 = vadd.f32 0.0, %v3235
      %v3237 = vpop.f32.mrf.mxu0
      %v3238 = vadd.f32 0.0, %v3237
      %3239 = vmatmul.bf16.gmra.mxu0 %v2528
      %v3240 = vpop.f32.mrf.mxu0
      %v3241 = vadd.f32 0.0, %v3240
      %v3242 = vpop.f32.mrf.mxu0
      %v3243 = vadd.f32 0.0, %v3242
      %3244 = vmatmul.bf16.gmra.mxu0 %v2529
      %v3245 = vpop.f32.mrf.mxu0
      %v3246 = vadd.f32 0.0, %v3245
      %v3247 = vpop.f32.mrf.mxu0
      %v3248 = vadd.f32 0.0, %v3247
      %3249 = vmatmul.bf16.gmra.mxu0 %v2530
      %v3250 = vpop.f32.mrf.mxu0
      %v3251 = vadd.f32 0.0, %v3250
      %v3252 = vpop.f32.mrf.mxu0
      %v3253 = vadd.f32 0.0, %v3252
      %3254 = vmatmul.bf16.gmra.mxu0 %v2531
      %v3255 = vpop.f32.mrf.mxu0
      %v3256 = vadd.f32 0.0, %v3255
      %v3257 = vpop.f32.mrf.mxu0
      %v3258 = vadd.f32 0.0, %v3257
      %3259 = vmatmul.bf16.gmra.mxu0 %v2532
      %v3260 = vpop.f32.mrf.mxu0
      %v3261 = vadd.f32 0.0, %v3260
      %v3262 = vpop.f32.mrf.mxu0
      %v3263 = vadd.f32 0.0, %v3262
      %3264 = vmatmul.bf16.gmra.mxu0 %v2533
      %v3265 = vpop.f32.mrf.mxu0
      %v3266 = vadd.f32 0.0, %v3265
      %v3267 = vpop.f32.mrf.mxu0
      %v3268 = vadd.f32 0.0, %v3267
      %3269 = vmatmul.bf16.gmra.mxu0 %v2534
      %v3270 = vpop.f32.mrf.mxu0
      %v3271 = vadd.f32 0.0, %v3270
      %v3272 = vpop.f32.mrf.mxu0
      %v3273 = vadd.f32 0.0, %v3272
      %3274 = vdwg.mxu0
      %3275 = vmatpush.bf16.msra.mxu0 %v2851
      %3276 = vmatpush.bf16.msra.mxu0 %v2843
      %3277 = vmatpush.bf16.msra.mxu0 %v2835
      %3278 = vmatpush.bf16.msra.mxu0 %v2827
      %3279 = vmatpush.bf16.msra.mxu0 %v2819
      %3280 = vmatpush.bf16.msra.mxu0 %v2811
      %3281 = vmatpush.bf16.msra.mxu0 %v2803
      %3282 = vmatpush.bf16.msra.mxu0 %v2795
      %3283 = vmatmul.bf16.gmra.mxu0 %v2519
      %v3284 = vpop.f32.mrf.mxu0
      %v3285 = vadd.f32 0.0, %v3284
      %v3286 = vpop.f32.mrf.mxu0
      %v3287 = vadd.f32 0.0, %v3286
      %3288 = vmatmul.bf16.gmra.mxu0 %v2520
      %v3289 = vpop.f32.mrf.mxu0
      %v3290 = vadd.f32 0.0, %v3289
      %v3291 = vpop.f32.mrf.mxu0
      %v3292 = vadd.f32 0.0, %v3291
      %3293 = vmatmul.bf16.gmra.mxu0 %v2521
      %v3294 = vpop.f32.mrf.mxu0
      %v3295 = vadd.f32 0.0, %v3294
      %v3296 = vpop.f32.mrf.mxu0
      %v3297 = vadd.f32 0.0, %v3296
      %3298 = vmatmul.bf16.gmra.mxu0 %v2522
      %v3299 = vpop.f32.mrf.mxu0
      %v3300 = vadd.f32 0.0, %v3299
      %v3301 = vpop.f32.mrf.mxu0
      %v3302 = vadd.f32 0.0, %v3301
      %3303 = vmatmul.bf16.gmra.mxu0 %v2523
      %v3304 = vpop.f32.mrf.mxu0
      %v3305 = vadd.f32 0.0, %v3304
      %v3306 = vpop.f32.mrf.mxu0
      %v3307 = vadd.f32 0.0, %v3306
      %3308 = vmatmul.bf16.gmra.mxu0 %v2524
      %v3309 = vpop.f32.mrf.mxu0
      %v3310 = vadd.f32 0.0, %v3309
      %v3311 = vpop.f32.mrf.mxu0
      %v3312 = vadd.f32 0.0, %v3311
      %3313 = vmatmul.bf16.gmra.mxu0 %v2525
      %v3314 = vpop.f32.mrf.mxu0
      %v3315 = vadd.f32 0.0, %v3314
      %v3316 = vpop.f32.mrf.mxu0
      %v3317 = vadd.f32 0.0, %v3316
      %3318 = vmatmul.bf16.gmra.mxu0 %v2526
      %v3319 = vpop.f32.mrf.mxu0
      %v3320 = vadd.f32 0.0, %v3319
      %v3321 = vpop.f32.mrf.mxu0
      %v3322 = vadd.f32 0.0, %v3321
      %3323 = vmatmul.bf16.gmra.mxu0 %v2527
      %v3324 = vpop.f32.mrf.mxu0
      %v3325 = vadd.f32 0.0, %v3324
      %v3326 = vpop.f32.mrf.mxu0
      %v3327 = vadd.f32 0.0, %v3326
      %3328 = vmatmul.bf16.gmra.mxu0 %v2528
      %v3329 = vpop.f32.mrf.mxu0
      %v3330 = vadd.f32 0.0, %v3329
      %v3331 = vpop.f32.mrf.mxu0
      %v3332 = vadd.f32 0.0, %v3331
      %3333 = vmatmul.bf16.gmra.mxu0 %v2529
      %v3334 = vpop.f32.mrf.mxu0
      %v3335 = vadd.f32 0.0, %v3334
      %v3336 = vpop.f32.mrf.mxu0
      %v3337 = vadd.f32 0.0, %v3336
      %3338 = vmatmul.bf16.gmra.mxu0 %v2530
      %v3339 = vpop.f32.mrf.mxu0
      %v3340 = vadd.f32 0.0, %v3339
      %v3341 = vpop.f32.mrf.mxu0
      %v3342 = vadd.f32 0.0, %v3341
      %3343 = vmatmul.bf16.gmra.mxu0 %v2531
      %v3344 = vpop.f32.mrf.mxu0
      %v3345 = vadd.f32 0.0, %v3344
      %v3346 = vpop.f32.mrf.mxu0
      %v3347 = vadd.f32 0.0, %v3346
      %3348 = vmatmul.bf16.gmra.mxu0 %v2532
      %v3349 = vpop.f32.mrf.mxu0
      %v3350 = vadd.f32 0.0, %v3349
      %v3351 = vpop.f32.mrf.mxu0
      %v3352 = vadd.f32 0.0, %v3351
      %3353 = vmatmul.bf16.gmra.mxu0 %v2533
      %v3354 = vpop.f32.mrf.mxu0
      %v3355 = vadd.f32 0.0, %v3354
      %v3356 = vpop.f32.mrf.mxu0
      %v3357 = vadd.f32 0.0, %v3356
      %3358 = vmatmul.bf16.gmra.mxu0 %v2534
      %v3359 = vpop.f32.mrf.mxu0
      %v3360 = vadd.f32 0.0, %v3359
      %v3361 = vpop.f32.mrf.mxu0
      %v3362 = vadd.f32 0.0, %v3361
      %3363 = vdwg.mxu0
      %3364 = vmatpush.bf16.msra.mxu0 %v2852
      %3365 = vmatpush.bf16.msra.mxu0 %v2844
      %3366 = vmatpush.bf16.msra.mxu0 %v2836
      %3367 = vmatpush.bf16.msra.mxu0 %v2828
      %3368 = vmatpush.bf16.msra.mxu0 %v2820
      %3369 = vmatpush.bf16.msra.mxu0 %v2812
      %3370 = vmatpush.bf16.msra.mxu0 %v2804
      %3371 = vmatpush.bf16.msra.mxu0 %v2796
      %3372 = vmatmul.bf16.gmra.mxu0 %v2519
      %v3373 = vpop.f32.mrf.mxu0
      %v3374 = vadd.f32 0.0, %v3373
      %v3375 = vpop.f32.mrf.mxu0
      %v3376 = vadd.f32 0.0, %v3375
      %3377 = vmatmul.bf16.gmra.mxu0 %v2520
      %v3378 = vpop.f32.mrf.mxu0
      %v3379 = vadd.f32 0.0, %v3378
      %v3380 = vpop.f32.mrf.mxu0
      %v3381 = vadd.f32 0.0, %v3380
      %3382 = vmatmul.bf16.gmra.mxu0 %v2521
      %v3383 = vpop.f32.mrf.mxu0
      %v3384 = vadd.f32 0.0, %v3383
      %v3385 = vpop.f32.mrf.mxu0
      %v3386 = vadd.f32 0.0, %v3385
      %3387 = vmatmul.bf16.gmra.mxu0 %v2522
      %v3388 = vpop.f32.mrf.mxu0
      %v3389 = vadd.f32 0.0, %v3388
      %v3390 = vpop.f32.mrf.mxu0
      %v3391 = vadd.f32 0.0, %v3390
      %3392 = vmatmul.bf16.gmra.mxu0 %v2523
      %v3393 = vpop.f32.mrf.mxu0
      %v3394 = vadd.f32 0.0, %v3393
      %v3395 = vpop.f32.mrf.mxu0
      %v3396 = vadd.f32 0.0, %v3395
      %3397 = vmatmul.bf16.gmra.mxu0 %v2524
      %v3398 = vpop.f32.mrf.mxu0
      %v3399 = vadd.f32 0.0, %v3398
      %v3400 = vpop.f32.mrf.mxu0
      %v3401 = vadd.f32 0.0, %v3400
      %3402 = vmatmul.bf16.gmra.mxu0 %v2525
      %v3403 = vpop.f32.mrf.mxu0
      %v3404 = vadd.f32 0.0, %v3403
      %v3405 = vpop.f32.mrf.mxu0
      %v3406 = vadd.f32 0.0, %v3405
      %3407 = vmatmul.bf16.gmra.mxu0 %v2526
      %v3408 = vpop.f32.mrf.mxu0
      %v3409 = vadd.f32 0.0, %v3408
      %v3410 = vpop.f32.mrf.mxu0
      %v3411 = vadd.f32 0.0, %v3410
      %3412 = vmatmul.bf16.gmra.mxu0 %v2527
      %v3413 = vpop.f32.mrf.mxu0
      %v3414 = vadd.f32 0.0, %v3413
      %v3415 = vpop.f32.mrf.mxu0
      %v3416 = vadd.f32 0.0, %v3415
      %3417 = vmatmul.bf16.gmra.mxu0 %v2528
      %v3418 = vpop.f32.mrf.mxu0
      %v3419 = vadd.f32 0.0, %v3418
      %v3420 = vpop.f32.mrf.mxu0
      %v3421 = vadd.f32 0.0, %v3420
      %3422 = vmatmul.bf16.gmra.mxu0 %v2529
      %v3423 = vpop.f32.mrf.mxu0
      %v3424 = vadd.f32 0.0, %v3423
      %v3425 = vpop.f32.mrf.mxu0
      %v3426 = vadd.f32 0.0, %v3425
      %3427 = vmatmul.bf16.gmra.mxu0 %v2530
      %v3428 = vpop.f32.mrf.mxu0
      %v3429 = vadd.f32 0.0, %v3428
      %v3430 = vpop.f32.mrf.mxu0
      %v3431 = vadd.f32 0.0, %v3430
      %3432 = vmatmul.bf16.gmra.mxu0 %v2531
      %v3433 = vpop.f32.mrf.mxu0
      %v3434 = vadd.f32 0.0, %v3433
      %v3435 = vpop.f32.mrf.mxu0
      %v3436 = vadd.f32 0.0, %v3435
      %3437 = vmatmul.bf16.gmra.mxu0 %v2532
      %v3438 = vpop.f32.mrf.mxu0
      %v3439 = vadd.f32 0.0, %v3438
      %v3440 = vpop.f32.mrf.mxu0
      %v3441 = vadd.f32 0.0, %v3440
      %3442 = vmatmul.bf16.gmra.mxu0 %v2533
      %v3443 = vpop.f32.mrf.mxu0
      %v3444 = vadd.f32 0.0, %v3443
      %v3445 = vpop.f32.mrf.mxu0
      %v3446 = vadd.f32 0.0, %v3445
      %3447 = vmatmul.bf16.gmra.mxu0 %v2534
      %v3448 = vpop.f32.mrf.mxu0
      %v3449 = vadd.f32 0.0, %v3448
      %v3450 = vpop.f32.mrf.mxu0
      %v3451 = vadd.f32 0.0, %v3450
      %3452 = vdwg.mxu0
      %3453 = vmatpush.bf16.msra.mxu0 %v2853
      %3454 = vmatpush.bf16.msra.mxu0 %v2845
      %3455 = vmatpush.bf16.msra.mxu0 %v2837
      %3456 = vmatpush.bf16.msra.mxu0 %v2829
      %3457 = vmatpush.bf16.msra.mxu0 %v2821
      %3458 = vmatpush.bf16.msra.mxu0 %v2813
      %3459 = vmatpush.bf16.msra.mxu0 %v2805
      %3460 = vmatpush.bf16.msra.mxu0 %v2797
      %3461 = vmatmul.bf16.gmra.mxu0 %v2519
      %v3462 = vpop.f32.mrf.mxu0
      %v3463 = vadd.f32 0.0, %v3462
      %v3464 = vpop.f32.mrf.mxu0
      %v3465 = vadd.f32 0.0, %v3464
      %3466 = vmatmul.bf16.gmra.mxu0 %v2520
      %v3467 = vpop.f32.mrf.mxu0
      %v3468 = vadd.f32 0.0, %v3467
      %v3469 = vpop.f32.mrf.mxu0
      %v3470 = vadd.f32 0.0, %v3469
      %3471 = vmatmul.bf16.gmra.mxu0 %v2521
      %v3472 = vpop.f32.mrf.mxu0
      %v3473 = vadd.f32 0.0, %v3472
      %v3474 = vpop.f32.mrf.mxu0
      %v3475 = vadd.f32 0.0, %v3474
      %3476 = vmatmul.bf16.gmra.mxu0 %v2522
      %v3477 = vpop.f32.mrf.mxu0
      %v3478 = vadd.f32 0.0, %v3477
      %v3479 = vpop.f32.mrf.mxu0
      %v3480 = vadd.f32 0.0, %v3479
      %3481 = vmatmul.bf16.gmra.mxu0 %v2523
      %v3482 = vpop.f32.mrf.mxu0
      %v3483 = vadd.f32 0.0, %v3482
      %v3484 = vpop.f32.mrf.mxu0
      %v3485 = vadd.f32 0.0, %v3484
      %3486 = vmatmul.bf16.gmra.mxu0 %v2524
      %v3487 = vpop.f32.mrf.mxu0
      %v3488 = vadd.f32 0.0, %v3487
      %v3489 = vpop.f32.mrf.mxu0
      %v3490 = vadd.f32 0.0, %v3489
      %3491 = vmatmul.bf16.gmra.mxu0 %v2525
      %v3492 = vpop.f32.mrf.mxu0
      %v3493 = vadd.f32 0.0, %v3492
      %v3494 = vpop.f32.mrf.mxu0
      %v3495 = vadd.f32 0.0, %v3494
      %3496 = vmatmul.bf16.gmra.mxu0 %v2526
      %v3497 = vpop.f32.mrf.mxu0
      %v3498 = vadd.f32 0.0, %v3497
      %v3499 = vpop.f32.mrf.mxu0
      %v3500 = vadd.f32 0.0, %v3499
      %3501 = vmatmul.bf16.gmra.mxu0 %v2527
      %v3502 = vpop.f32.mrf.mxu0
      %v3503 = vadd.f32 0.0, %v3502
      %v3504 = vpop.f32.mrf.mxu0
      %v3505 = vadd.f32 0.0, %v3504
      %3506 = vmatmul.bf16.gmra.mxu0 %v2528
      %v3507 = vpop.f32.mrf.mxu0
      %v3508 = vadd.f32 0.0, %v3507
      %v3509 = vpop.f32.mrf.mxu0
      %v3510 = vadd.f32 0.0, %v3509
      %3511 = vmatmul.bf16.gmra.mxu0 %v2529
      %v3512 = vpop.f32.mrf.mxu0
      %v3513 = vadd.f32 0.0, %v3512
      %v3514 = vpop.f32.mrf.mxu0
      %v3515 = vadd.f32 0.0, %v3514
      %3516 = vmatmul.bf16.gmra.mxu0 %v2530
      %v3517 = vpop.f32.mrf.mxu0
      %v3518 = vadd.f32 0.0, %v3517
      %v3519 = vpop.f32.mrf.mxu0
      %v3520 = vadd.f32 0.0, %v3519
      %3521 = vmatmul.bf16.gmra.mxu0 %v2531
      %v3522 = vpop.f32.mrf.mxu0
      %v3523 = vadd.f32 0.0, %v3522
      %v3524 = vpop.f32.mrf.mxu0
      %v3525 = vadd.f32 0.0, %v3524
      %3526 = vmatmul.bf16.gmra.mxu0 %v2532
      %v3527 = vpop.f32.mrf.mxu0
      %v3528 = vadd.f32 0.0, %v3527
      %v3529 = vpop.f32.mrf.mxu0
      %v3530 = vadd.f32 0.0, %v3529
      %3531 = vmatmul.bf16.gmra.mxu0 %v2533
      %v3532 = vpop.f32.mrf.mxu0
      %v3533 = vadd.f32 0.0, %v3532
      %v3534 = vpop.f32.mrf.mxu0
      %v3535 = vadd.f32 0.0, %v3534
      %3536 = vmatmul.bf16.gmra.mxu0 %v2534
      %v3537 = vpop.f32.mrf.mxu0
      %v3538 = vadd.f32 0.0, %v3537
      %v3539 = vpop.f32.mrf.mxu0
      %v3540 = vadd.f32 0.0, %v3539
      %3541 = vdwg.mxu0
      %3542 = vmatpush.bf16.msra.mxu0 %v2854
      %3543 = vmatpush.bf16.msra.mxu0 %v2846
      %3544 = vmatpush.bf16.msra.mxu0 %v2838
      %3545 = vmatpush.bf16.msra.mxu0 %v2830
      %3546 = vmatpush.bf16.msra.mxu0 %v2822
      %3547 = vmatpush.bf16.msra.mxu0 %v2814
      %3548 = vmatpush.bf16.msra.mxu0 %v2806
      %3549 = vmatpush.bf16.msra.mxu0 %v2798
      %3550 = vmatmul.bf16.gmra.mxu0 %v2519
      %v3551 = vpop.f32.mrf.mxu0
      %v3552 = vadd.f32 0.0, %v3551
      %v3553 = vpop.f32.mrf.mxu0
      %v3554 = vadd.f32 0.0, %v3553
      %3555 = vmatmul.bf16.gmra.mxu0 %v2520
      %v3556 = vpop.f32.mrf.mxu0
      %v3557 = vadd.f32 0.0, %v3556
      %v3558 = vpop.f32.mrf.mxu0
      %v3559 = vadd.f32 0.0, %v3558
      %3560 = vmatmul.bf16.gmra.mxu0 %v2521
      %v3561 = vpop.f32.mrf.mxu0
      %v3562 = vadd.f32 0.0, %v3561
      %v3563 = vpop.f32.mrf.mxu0
      %v3564 = vadd.f32 0.0, %v3563
      %3565 = vmatmul.bf16.gmra.mxu0 %v2522
      %v3566 = vpop.f32.mrf.mxu0
      %v3567 = vadd.f32 0.0, %v3566
      %v3568 = vpop.f32.mrf.mxu0
      %v3569 = vadd.f32 0.0, %v3568
      %3570 = vmatmul.bf16.gmra.mxu0 %v2523
      %v3571 = vpop.f32.mrf.mxu0
      %v3572 = vadd.f32 0.0, %v3571
      %v3573 = vpop.f32.mrf.mxu0
      %v3574 = vadd.f32 0.0, %v3573
      %3575 = vmatmul.bf16.gmra.mxu0 %v2524
      %v3576 = vpop.f32.mrf.mxu0
      %v3577 = vadd.f32 0.0, %v3576
      %v3578 = vpop.f32.mrf.mxu0
      %v3579 = vadd.f32 0.0, %v3578
      %3580 = vmatmul.bf16.gmra.mxu0 %v2525
      %v3581 = vpop.f32.mrf.mxu0
      %v3582 = vadd.f32 0.0, %v3581
      %v3583 = vpop.f32.mrf.mxu0
      %v3584 = vadd.f32 0.0, %v3583
      %3585 = vmatmul.bf16.gmra.mxu0 %v2526
      %v3586 = vpop.f32.mrf.mxu0
      %v3587 = vadd.f32 0.0, %v3586
      %v3588 = vpop.f32.mrf.mxu0
      %v3589 = vadd.f32 0.0, %v3588
      %3590 = vmatmul.bf16.gmra.mxu0 %v2527
      %v3591 = vpop.f32.mrf.mxu0
      %v3592 = vadd.f32 0.0, %v3591
      %v3593 = vpop.f32.mrf.mxu0
      %v3594 = vadd.f32 0.0, %v3593
      %3595 = vmatmul.bf16.gmra.mxu0 %v2528
      %v3596 = vpop.f32.mrf.mxu0
      %v3597 = vadd.f32 0.0, %v3596
      %v3598 = vpop.f32.mrf.mxu0
      %v3599 = vadd.f32 0.0, %v3598
      %3600 = vmatmul.bf16.gmra.mxu0 %v2529
      %v3601 = vpop.f32.mrf.mxu0
      %v3602 = vadd.f32 0.0, %v3601
      %v3603 = vpop.f32.mrf.mxu0
      %v3604 = vadd.f32 0.0, %v3603
      %3605 = vmatmul.bf16.gmra.mxu0 %v2530
      %v3606 = vpop.f32.mrf.mxu0
      %v3607 = vadd.f32 0.0, %v3606
      %v3608 = vpop.f32.mrf.mxu0
      %v3609 = vadd.f32 0.0, %v3608
      %3610 = vmatmul.bf16.gmra.mxu0 %v2531
      %v3611 = vpop.f32.mrf.mxu0
      %v3612 = vadd.f32 0.0, %v3611
      %v3613 = vpop.f32.mrf.mxu0
      %v3614 = vadd.f32 0.0, %v3613
      %3615 = vmatmul.bf16.gmra.mxu0 %v2532
      %v3616 = vpop.f32.mrf.mxu0
      %v3617 = vadd.f32 0.0, %v3616
      %v3618 = vpop.f32.mrf.mxu0
      %v3619 = vadd.f32 0.0, %v3618
      %3620 = vmatmul.bf16.gmra.mxu0 %v2533
      %v3621 = vpop.f32.mrf.mxu0
      %v3622 = vadd.f32 0.0, %v3621
      %v3623 = vpop.f32.mrf.mxu0
      %v3624 = vadd.f32 0.0, %v3623
      %3625 = vmatmul.bf16.gmra.mxu0 %v2534
      %v3626 = vpop.f32.mrf.mxu0
      %v3627 = vadd.f32 0.0, %v3626
      %v3628 = vpop.f32.mrf.mxu0
      %v3629 = vadd.f32 0.0, %v3628
      %3630 = vdwg.mxu0
      %v3631 = vmul.f32 %v2929, %v392
      %v3632 = vmul.f32 %v3018, %v392
      %v3633 = vmul.f32 %v3107, %v392
      %v3634 = vmul.f32 %v3196, %v392
      %v3635 = vmul.f32 %v3285, %v392
      %v3636 = vmul.f32 %v3374, %v392
      %v3637 = vmul.f32 %v3463, %v392
      %v3638 = vmul.f32 %v3552, %v392
      %v3639 = vmul.f32 %v2931, %v393
      %v3640 = vmul.f32 %v3020, %v393
      %v3641 = vmul.f32 %v3109, %v393
      %v3642 = vmul.f32 %v3198, %v393
      %v3643 = vmul.f32 %v3287, %v393
      %v3644 = vmul.f32 %v3376, %v393
      %v3645 = vmul.f32 %v3465, %v393
      %v3646 = vmul.f32 %v3554, %v393
      %v3647 = vmul.f32 %v2934, %v394
      %v3648 = vmul.f32 %v3023, %v394
      %v3649 = vmul.f32 %v3112, %v394
      %v3650 = vmul.f32 %v3201, %v394
      %v3651 = vmul.f32 %v3290, %v394
      %v3652 = vmul.f32 %v3379, %v394
      %v3653 = vmul.f32 %v3468, %v394
      %v3654 = vmul.f32 %v3557, %v394
      %v3655 = vmul.f32 %v2936, %v395
      %v3656 = vmul.f32 %v3025, %v395
      %v3657 = vmul.f32 %v3114, %v395
      %v3658 = vmul.f32 %v3203, %v395
      %v3659 = vmul.f32 %v3292, %v395
      %v3660 = vmul.f32 %v3381, %v395
      %v3661 = vmul.f32 %v3470, %v395
      %v3662 = vmul.f32 %v3559, %v395
      %v3663 = vmul.f32 %v2939, %v396
      %v3664 = vmul.f32 %v3028, %v396
      %v3665 = vmul.f32 %v3117, %v396
      %v3666 = vmul.f32 %v3206, %v396
      %v3667 = vmul.f32 %v3295, %v396
      %v3668 = vmul.f32 %v3384, %v396
      %v3669 = vmul.f32 %v3473, %v396
      %v3670 = vmul.f32 %v3562, %v396
      %v3671 = vmul.f32 %v2941, %v397
      %v3672 = vmul.f32 %v3030, %v397
      %v3673 = vmul.f32 %v3119, %v397
      %v3674 = vmul.f32 %v3208, %v397
      %v3675 = vmul.f32 %v3297, %v397
      %v3676 = vmul.f32 %v3386, %v397
      %v3677 = vmul.f32 %v3475, %v397
      %v3678 = vmul.f32 %v3564, %v397
      %v3679 = vmul.f32 %v2944, %v398
      %v3680 = vmul.f32 %v3033, %v398
      %v3681 = vmul.f32 %v3122, %v398
      %v3682 = vmul.f32 %v3211, %v398
      %v3683 = vmul.f32 %v3300, %v398
      %v3684 = vmul.f32 %v3389, %v398
      %v3685 = vmul.f32 %v3478, %v398
      %v3686 = vmul.f32 %v3567, %v398
      %v3687 = vmul.f32 %v2946, %v399
      %v3688 = vmul.f32 %v3035, %v399
      %v3689 = vmul.f32 %v3124, %v399
      %v3690 = vmul.f32 %v3213, %v399
      %v3691 = vmul.f32 %v3302, %v399
      %v3692 = vmul.f32 %v3391, %v399
      %v3693 = vmul.f32 %v3480, %v399
      %v3694 = vmul.f32 %v3569, %v399
      %v3695 = vmul.f32 %v2949, %v400
      %v3696 = vmul.f32 %v3038, %v400
      %v3697 = vmul.f32 %v3127, %v400
      %v3698 = vmul.f32 %v3216, %v400
      %v3699 = vmul.f32 %v3305, %v400
      %v3700 = vmul.f32 %v3394, %v400
      %v3701 = vmul.f32 %v3483, %v400
      %v3702 = vmul.f32 %v3572, %v400
      %v3703 = vmul.f32 %v2951, %v401
      %v3704 = vmul.f32 %v3040, %v401
      %v3705 = vmul.f32 %v3129, %v401
      %v3706 = vmul.f32 %v3218, %v401
      %v3707 = vmul.f32 %v3307, %v401
      %v3708 = vmul.f32 %v3396, %v401
      %v3709 = vmul.f32 %v3485, %v401
      %v3710 = vmul.f32 %v3574, %v401
      %v3711 = vmul.f32 %v2954, %v402
      %v3712 = vmul.f32 %v3043, %v402
      %v3713 = vmul.f32 %v3132, %v402
      %v3714 = vmul.f32 %v3221, %v402
      %v3715 = vmul.f32 %v3310, %v402
      %v3716 = vmul.f32 %v3399, %v402
      %v3717 = vmul.f32 %v3488, %v402
      %v3718 = vmul.f32 %v3577, %v402
      %v3719 = vmul.f32 %v2956, %v403
      %v3720 = vmul.f32 %v3045, %v403
      %v3721 = vmul.f32 %v3134, %v403
      %v3722 = vmul.f32 %v3223, %v403
      %v3723 = vmul.f32 %v3312, %v403
      %v3724 = vmul.f32 %v3401, %v403
      %v3725 = vmul.f32 %v3490, %v403
      %v3726 = vmul.f32 %v3579, %v403
      %v3727 = vmul.f32 %v2959, %v404
      %v3728 = vmul.f32 %v3048, %v404
      %v3729 = vmul.f32 %v3137, %v404
      %v3730 = vmul.f32 %v3226, %v404
      %v3731 = vmul.f32 %v3315, %v404
      %v3732 = vmul.f32 %v3404, %v404
      %v3733 = vmul.f32 %v3493, %v404
      %v3734 = vmul.f32 %v3582, %v404
      %v3735 = vmul.f32 %v2961, %v405
      %v3736 = vmul.f32 %v3050, %v405
      %v3737 = vmul.f32 %v3139, %v405
      %v3738 = vmul.f32 %v3228, %v405
      %v3739 = vmul.f32 %v3317, %v405
      %v3740 = vmul.f32 %v3406, %v405
      %v3741 = vmul.f32 %v3495, %v405
      %v3742 = vmul.f32 %v3584, %v405
      %v3743 = vmul.f32 %v2964, %v406
      %v3744 = vmul.f32 %v3053, %v406
      %v3745 = vmul.f32 %v3142, %v406
      %v3746 = vmul.f32 %v3231, %v406
      %v3747 = vmul.f32 %v3320, %v406
      %v3748 = vmul.f32 %v3409, %v406
      %v3749 = vmul.f32 %v3498, %v406
      %v3750 = vmul.f32 %v3587, %v406
      %v3751 = vmul.f32 %v2966, %v407
      %v3752 = vmul.f32 %v3055, %v407
      %v3753 = vmul.f32 %v3144, %v407
      %v3754 = vmul.f32 %v3233, %v407
      %v3755 = vmul.f32 %v3322, %v407
      %v3756 = vmul.f32 %v3411, %v407
      %v3757 = vmul.f32 %v3500, %v407
      %v3758 = vmul.f32 %v3589, %v407
      %v3759 = vmul.f32 %v2969, %v2503
      %v3760 = vmul.f32 %v3058, %v2503
      %v3761 = vmul.f32 %v3147, %v2503
      %v3762 = vmul.f32 %v3236, %v2503
      %v3763 = vmul.f32 %v3325, %v2503
      %v3764 = vmul.f32 %v3414, %v2503
      %v3765 = vmul.f32 %v3503, %v2503
      %v3766 = vmul.f32 %v3592, %v2503
      %v3767 = vmul.f32 %v2971, %v2504
      %v3768 = vmul.f32 %v3060, %v2504
      %v3769 = vmul.f32 %v3149, %v2504
      %v3770 = vmul.f32 %v3238, %v2504
      %v3771 = vmul.f32 %v3327, %v2504
      %v3772 = vmul.f32 %v3416, %v2504
      %v3773 = vmul.f32 %v3505, %v2504
      %v3774 = vmul.f32 %v3594, %v2504
      %v3775 = vmul.f32 %v2974, %v2505
      %v3776 = vmul.f32 %v3063, %v2505
      %v3777 = vmul.f32 %v3152, %v2505
      %v3778 = vmul.f32 %v3241, %v2505
      %v3779 = vmul.f32 %v3330, %v2505
      %v3780 = vmul.f32 %v3419, %v2505
      %v3781 = vmul.f32 %v3508, %v2505
      %v3782 = vmul.f32 %v3597, %v2505
      %v3783 = vmul.f32 %v2976, %v2506
      %v3784 = vmul.f32 %v3065, %v2506
      %v3785 = vmul.f32 %v3154, %v2506
      %v3786 = vmul.f32 %v3243, %v2506
      %v3787 = vmul.f32 %v3332, %v2506
      %v3788 = vmul.f32 %v3421, %v2506
      %v3789 = vmul.f32 %v3510, %v2506
      %v3790 = vmul.f32 %v3599, %v2506
      %v3791 = vmul.f32 %v2979, %v2507
      %v3792 = vmul.f32 %v3068, %v2507
      %v3793 = vmul.f32 %v3157, %v2507
      %v3794 = vmul.f32 %v3246, %v2507
      %v3795 = vmul.f32 %v3335, %v2507
      %v3796 = vmul.f32 %v3424, %v2507
      %v3797 = vmul.f32 %v3513, %v2507
      %v3798 = vmul.f32 %v3602, %v2507
      %v3799 = vmul.f32 %v2981, %v2508
      %v3800 = vmul.f32 %v3070, %v2508
      %v3801 = vmul.f32 %v3159, %v2508
      %v3802 = vmul.f32 %v3248, %v2508
      %v3803 = vmul.f32 %v3337, %v2508
      %v3804 = vmul.f32 %v3426, %v2508
      %v3805 = vmul.f32 %v3515, %v2508
      %v3806 = vmul.f32 %v3604, %v2508
      %v3807 = vmul.f32 %v2984, %v2509
      %v3808 = vmul.f32 %v3073, %v2509
      %v3809 = vmul.f32 %v3162, %v2509
      %v3810 = vmul.f32 %v3251, %v2509
      %v3811 = vmul.f32 %v3340, %v2509
      %v3812 = vmul.f32 %v3429, %v2509
      %v3813 = vmul.f32 %v3518, %v2509
      %v3814 = vmul.f32 %v3607, %v2509
      %v3815 = vmul.f32 %v2986, %v2510
      %v3816 = vmul.f32 %v3075, %v2510
      %v3817 = vmul.f32 %v3164, %v2510
      %v3818 = vmul.f32 %v3253, %v2510
      %v3819 = vmul.f32 %v3342, %v2510
      %v3820 = vmul.f32 %v3431, %v2510
      %v3821 = vmul.f32 %v3520, %v2510
      %v3822 = vmul.f32 %v3609, %v2510
      %v3823 = vmul.f32 %v2989, %v2511
      %v3824 = vmul.f32 %v3078, %v2511
      %v3825 = vmul.f32 %v3167, %v2511
      %v3826 = vmul.f32 %v3256, %v2511
      %v3827 = vmul.f32 %v3345, %v2511
      %v3828 = vmul.f32 %v3434, %v2511
      %v3829 = vmul.f32 %v3523, %v2511
      %v3830 = vmul.f32 %v3612, %v2511
      %v3831 = vmul.f32 %v2991, %v2512
      %v3832 = vmul.f32 %v3080, %v2512
      %v3833 = vmul.f32 %v3169, %v2512
      %v3834 = vmul.f32 %v3258, %v2512
      %v3835 = vmul.f32 %v3347, %v2512
      %v3836 = vmul.f32 %v3436, %v2512
      %v3837 = vmul.f32 %v3525, %v2512
      %v3838 = vmul.f32 %v3614, %v2512
      %v3839 = vmul.f32 %v2994, %v2513
      %v3840 = vmul.f32 %v3083, %v2513
      %v3841 = vmul.f32 %v3172, %v2513
      %v3842 = vmul.f32 %v3261, %v2513
      %v3843 = vmul.f32 %v3350, %v2513
      %v3844 = vmul.f32 %v3439, %v2513
      %v3845 = vmul.f32 %v3528, %v2513
      %v3846 = vmul.f32 %v3617, %v2513
      %v3847 = vmul.f32 %v2996, %v2514
      %v3848 = vmul.f32 %v3085, %v2514
      %v3849 = vmul.f32 %v3174, %v2514
      %v3850 = vmul.f32 %v3263, %v2514
      %v3851 = vmul.f32 %v3352, %v2514
      %v3852 = vmul.f32 %v3441, %v2514
      %v3853 = vmul.f32 %v3530, %v2514
      %v3854 = vmul.f32 %v3619, %v2514
      %v3855 = vmul.f32 %v2999, %v2515
      %v3856 = vmul.f32 %v3088, %v2515
      %v3857 = vmul.f32 %v3177, %v2515
      %v3858 = vmul.f32 %v3266, %v2515
      %v3859 = vmul.f32 %v3355, %v2515
      %v3860 = vmul.f32 %v3444, %v2515
      %v3861 = vmul.f32 %v3533, %v2515
      %v3862 = vmul.f32 %v3622, %v2515
      %v3863 = vmul.f32 %v3001, %v2516
      %v3864 = vmul.f32 %v3090, %v2516
      %v3865 = vmul.f32 %v3179, %v2516
      %v3866 = vmul.f32 %v3268, %v2516
      %v3867 = vmul.f32 %v3357, %v2516
      %v3868 = vmul.f32 %v3446, %v2516
      %v3869 = vmul.f32 %v3535, %v2516
      %v3870 = vmul.f32 %v3624, %v2516
      %v3871 = vmul.f32 %v3004, %v2517
      %v3872 = vmul.f32 %v3093, %v2517
      %v3873 = vmul.f32 %v3182, %v2517
      %v3874 = vmul.f32 %v3271, %v2517
      %v3875 = vmul.f32 %v3360, %v2517
      %v3876 = vmul.f32 %v3449, %v2517
      %v3877 = vmul.f32 %v3538, %v2517
      %v3878 = vmul.f32 %v3627, %v2517
      %v3879 = vmul.f32 %v3006, %v2518
      %v3880 = vmul.f32 %v3095, %v2518
      %v3881 = vmul.f32 %v3184, %v2518
      %v3882 = vmul.f32 %v3273, %v2518
      %v3883 = vmul.f32 %v3362, %v2518
      %v3884 = vmul.f32 %v3451, %v2518
      %v3885 = vmul.f32 %v3540, %v2518
      %v3886 = vmul.f32 %v3629, %v2518
      %v3887 = vpack.c.bf16 %v3639, %v3631
      %v3888 = vpack.c.bf16 %v3640, %v3632
      %v3889 = vpack.c.bf16 %v3641, %v3633
      %v3890 = vpack.c.bf16 %v3642, %v3634
      %v3891 = vpack.c.bf16 %v3643, %v3635
      %v3892 = vpack.c.bf16 %v3644, %v3636
      %v3893 = vpack.c.bf16 %v3645, %v3637
      %v3894 = vpack.c.bf16 %v3646, %v3638
      %v3895 = vpack.c.bf16 %v3655, %v3647
      %v3896 = vpack.c.bf16 %v3656, %v3648
      %v3897 = vpack.c.bf16 %v3657, %v3649
      %v3898 = vpack.c.bf16 %v3658, %v3650
      %v3899 = vpack.c.bf16 %v3659, %v3651
      %v3900 = vpack.c.bf16 %v3660, %v3652
      %v3901 = vpack.c.bf16 %v3661, %v3653
      %v3902 = vpack.c.bf16 %v3662, %v3654
      %v3903 = vpack.c.bf16 %v3671, %v3663
      %v3904 = vpack.c.bf16 %v3672, %v3664
      %v3905 = vpack.c.bf16 %v3673, %v3665
      %v3906 = vpack.c.bf16 %v3674, %v3666
      %v3907 = vpack.c.bf16 %v3675, %v3667
      %v3908 = vpack.c.bf16 %v3676, %v3668
      %v3909 = vpack.c.bf16 %v3677, %v3669
      %v3910 = vpack.c.bf16 %v3678, %v3670
      %v3911 = vpack.c.bf16 %v3687, %v3679
      %v3912 = vpack.c.bf16 %v3688, %v3680
      %v3913 = vpack.c.bf16 %v3689, %v3681
      %v3914 = vpack.c.bf16 %v3690, %v3682
      %v3915 = vpack.c.bf16 %v3691, %v3683
      %v3916 = vpack.c.bf16 %v3692, %v3684
      %v3917 = vpack.c.bf16 %v3693, %v3685
      %v3918 = vpack.c.bf16 %v3694, %v3686
      %v3919 = vpack.c.bf16 %v3703, %v3695
      %v3920 = vpack.c.bf16 %v3704, %v3696
      %v3921 = vpack.c.bf16 %v3705, %v3697
      %v3922 = vpack.c.bf16 %v3706, %v3698
      %v3923 = vpack.c.bf16 %v3707, %v3699
      %v3924 = vpack.c.bf16 %v3708, %v3700
      %v3925 = vpack.c.bf16 %v3709, %v3701
      %v3926 = vpack.c.bf16 %v3710, %v3702
      %v3927 = vpack.c.bf16 %v3719, %v3711
      %v3928 = vpack.c.bf16 %v3720, %v3712
      %v3929 = vpack.c.bf16 %v3721, %v3713
      %v3930 = vpack.c.bf16 %v3722, %v3714
      %v3931 = vpack.c.bf16 %v3723, %v3715
      %v3932 = vpack.c.bf16 %v3724, %v3716
      %v3933 = vpack.c.bf16 %v3725, %v3717
      %v3934 = vpack.c.bf16 %v3726, %v3718
      %v3935 = vpack.c.bf16 %v3735, %v3727
      %v3936 = vpack.c.bf16 %v3736, %v3728
      %v3937 = vpack.c.bf16 %v3737, %v3729
      %v3938 = vpack.c.bf16 %v3738, %v3730
      %v3939 = vpack.c.bf16 %v3739, %v3731
      %v3940 = vpack.c.bf16 %v3740, %v3732
      %v3941 = vpack.c.bf16 %v3741, %v3733
      %v3942 = vpack.c.bf16 %v3742, %v3734
      %v3943 = vpack.c.bf16 %v3751, %v3743
      %v3944 = vpack.c.bf16 %v3752, %v3744
      %v3945 = vpack.c.bf16 %v3753, %v3745
      %v3946 = vpack.c.bf16 %v3754, %v3746
      %v3947 = vpack.c.bf16 %v3755, %v3747
      %v3948 = vpack.c.bf16 %v3756, %v3748
      %v3949 = vpack.c.bf16 %v3757, %v3749
      %v3950 = vpack.c.bf16 %v3758, %v3750
      %v3951 = vld [vmem:[%s4] sm:$0xf]
      %v3952 = vld [vmem:[%s4 + $0x4] sm:$0xf]
      %v3953 = vld [vmem:[%s4 + $0x8] sm:$0xf]
      %v3954 = vld [vmem:[%s4 + $0xc] sm:$0xf]
      %v3955 = vld [vmem:[%s4 + $0x10] sm:$0xf]
      %v3956 = vld [vmem:[%s4 + $0x14] sm:$0xf]
      %v3957 = vld [vmem:[%s4 + $0x18] sm:$0xf]
      %v3958 = vld [vmem:[%s4 + $0x1c] sm:$0xf]
      %v3959 = vld [vmem:[%s4 + $0x20] sm:$0xf]
      %v3960 = vld [vmem:[%s4 + $0x24] sm:$0xf]
      %v3961 = vld [vmem:[%s4 + $0x28] sm:$0xf]
      %v3962 = vld [vmem:[%s4 + $0x2c] sm:$0xf]
      %v3963 = vld [vmem:[%s4 + $0x30] sm:$0xf]
      %v3964 = vld [vmem:[%s4 + $0x34] sm:$0xf]
      %v3965 = vld [vmem:[%s4 + $0x38] sm:$0xf]
      %v3966 = vld [vmem:[%s4 + $0x3c] sm:$0xf]
      %v3967 = vld [vmem:[%s4 + $0x40] sm:$0xf]
      %v3968 = vld [vmem:[%s4 + $0x44] sm:$0xf]
      %v3969 = vld [vmem:[%s4 + $0x48] sm:$0xf]
      %v3970 = vld [vmem:[%s4 + $0x4c] sm:$0xf]
      %v3971 = vld [vmem:[%s4 + $0x50] sm:$0xf]
      %v3972 = vld [vmem:[%s4 + $0x54] sm:$0xf]
      %v3973 = vld [vmem:[%s4 + $0x58] sm:$0xf]
      %v3974 = vld [vmem:[%s4 + $0x5c] sm:$0xf]
      %v3975 = vld [vmem:[%s4 + $0x60] sm:$0xf]
      %v3976 = vld [vmem:[%s4 + $0x64] sm:$0xf]
      %v3977 = vld [vmem:[%s4 + $0x68] sm:$0xf]
      %v3978 = vld [vmem:[%s4 + $0x6c] sm:$0xf]
      %v3979 = vld [vmem:[%s4 + $0x70] sm:$0xf]
      %v3980 = vld [vmem:[%s4 + $0x74] sm:$0xf]
      %v3981 = vld [vmem:[%s4 + $0x78] sm:$0xf]
      %v3982 = vld [vmem:[%s4 + $0x7c] sm:$0xf]
      %v3983 = vld [vmem:[%s4 + $0x80] sm:$0xf]
      %v3984 = vld [vmem:[%s4 + $0x84] sm:$0xf]
      %v3985 = vld [vmem:[%s4 + $0x88] sm:$0xf]
      %v3986 = vld [vmem:[%s4 + $0x8c] sm:$0xf]
      %v3987 = vld [vmem:[%s4 + $0x90] sm:$0xf]
      %v3988 = vld [vmem:[%s4 + $0x94] sm:$0xf]
      %v3989 = vld [vmem:[%s4 + $0x98] sm:$0xf]
      %v3990 = vld [vmem:[%s4 + $0x9c] sm:$0xf]
      %v3991 = vld [vmem:[%s4 + $0xa0] sm:$0xf]
      %v3992 = vld [vmem:[%s4 + $0xa4] sm:$0xf]
      %v3993 = vld [vmem:[%s4 + $0xa8] sm:$0xf]
      %v3994 = vld [vmem:[%s4 + $0xac] sm:$0xf]
      %v3995 = vld [vmem:[%s4 + $0xb0] sm:$0xf]
      %v3996 = vld [vmem:[%s4 + $0xb4] sm:$0xf]
      %v3997 = vld [vmem:[%s4 + $0xb8] sm:$0xf]
      %v3998 = vld [vmem:[%s4 + $0xbc] sm:$0xf]
      %v3999 = vld [vmem:[%s4 + $0xc0] sm:$0xf]
      %v4000 = vld [vmem:[%s4 + $0xc4] sm:$0xf]
      %v4001 = vld [vmem:[%s4 + $0xc8] sm:$0xf]
      %v4002 = vld [vmem:[%s4 + $0xcc] sm:$0xf]
      %v4003 = vld [vmem:[%s4 + $0xd0] sm:$0xf]
      %v4004 = vld [vmem:[%s4 + $0xd4] sm:$0xf]
      %v4005 = vld [vmem:[%s4 + $0xd8] sm:$0xf]
      %v4006 = vld [vmem:[%s4 + $0xdc] sm:$0xf]
      %v4007 = vld [vmem:[%s4 + $0xe0] sm:$0xf]
      %v4008 = vld [vmem:[%s4 + $0xe4] sm:$0xf]
      %v4009 = vld [vmem:[%s4 + $0xe8] sm:$0xf]
      %v4010 = vld [vmem:[%s4 + $0xec] sm:$0xf]
      %v4011 = vld [vmem:[%s4 + $0xf0] sm:$0xf]
      %v4012 = vld [vmem:[%s4 + $0xf4] sm:$0xf]
      %v4013 = vld [vmem:[%s4 + $0xf8] sm:$0xf]
      %v4014 = vld [vmem:[%s4 + $0xfc] sm:$0xf]
      %v4015 = vld [vmem:[%s4 + $0x100] sm:$0xf]
      %v4016 = vld [vmem:[%s4 + $0x104] sm:$0xf]
      %v4017 = vld [vmem:[%s4 + $0x108] sm:$0xf]
      %v4018 = vld [vmem:[%s4 + $0x10c] sm:$0xf]
      %v4019 = vld [vmem:[%s4 + $0x110] sm:$0xf]
      %v4020 = vld [vmem:[%s4 + $0x114] sm:$0xf]
      %v4021 = vld [vmem:[%s4 + $0x118] sm:$0xf]
      %v4022 = vld [vmem:[%s4 + $0x11c] sm:$0xf]
      %v4023 = vld [vmem:[%s4 + $0x120] sm:$0xf]
      %v4024 = vld [vmem:[%s4 + $0x124] sm:$0xf]
      %v4025 = vld [vmem:[%s4 + $0x128] sm:$0xf]
      %v4026 = vld [vmem:[%s4 + $0x12c] sm:$0xf]
      %v4027 = vld [vmem:[%s4 + $0x130] sm:$0xf]
      %v4028 = vld [vmem:[%s4 + $0x134] sm:$0xf]
      %v4029 = vld [vmem:[%s4 + $0x138] sm:$0xf]
      %v4030 = vld [vmem:[%s4 + $0x13c] sm:$0xf]
      %v4031 = vld [vmem:[%s4 + $0x140] sm:$0xf]
      %v4032 = vld [vmem:[%s4 + $0x144] sm:$0xf]
      %v4033 = vld [vmem:[%s4 + $0x148] sm:$0xf]
      %v4034 = vld [vmem:[%s4 + $0x14c] sm:$0xf]
      %v4035 = vld [vmem:[%s4 + $0x150] sm:$0xf]
      %v4036 = vld [vmem:[%s4 + $0x154] sm:$0xf]
      %v4037 = vld [vmem:[%s4 + $0x158] sm:$0xf]
      %v4038 = vld [vmem:[%s4 + $0x15c] sm:$0xf]
      %v4039 = vld [vmem:[%s4 + $0x160] sm:$0xf]
      %v4040 = vld [vmem:[%s4 + $0x164] sm:$0xf]
      %v4041 = vld [vmem:[%s4 + $0x168] sm:$0xf]
      %v4042 = vld [vmem:[%s4 + $0x16c] sm:$0xf]
      %v4043 = vld [vmem:[%s4 + $0x170] sm:$0xf]
      %v4044 = vld [vmem:[%s4 + $0x174] sm:$0xf]
      %v4045 = vld [vmem:[%s4 + $0x178] sm:$0xf]
      %v4046 = vld [vmem:[%s4 + $0x17c] sm:$0xf]
      %v4047 = vld [vmem:[%s4 + $0x180] sm:$0xf]
      %v4048 = vld [vmem:[%s4 + $0x184] sm:$0xf]
      %v4049 = vld [vmem:[%s4 + $0x188] sm:$0xf]
      %v4050 = vld [vmem:[%s4 + $0x18c] sm:$0xf]
      %v4051 = vld [vmem:[%s4 + $0x190] sm:$0xf]
      %v4052 = vld [vmem:[%s4 + $0x194] sm:$0xf]
      %v4053 = vld [vmem:[%s4 + $0x198] sm:$0xf]
      %v4054 = vld [vmem:[%s4 + $0x19c] sm:$0xf]
      %v4055 = vld [vmem:[%s4 + $0x1a0] sm:$0xf]
      %v4056 = vld [vmem:[%s4 + $0x1a4] sm:$0xf]
      %v4057 = vld [vmem:[%s4 + $0x1a8] sm:$0xf]
      %v4058 = vld [vmem:[%s4 + $0x1ac] sm:$0xf]
      %v4059 = vld [vmem:[%s4 + $0x1b0] sm:$0xf]
      %v4060 = vld [vmem:[%s4 + $0x1b4] sm:$0xf]
      %v4061 = vld [vmem:[%s4 + $0x1b8] sm:$0xf]
      %v4062 = vld [vmem:[%s4 + $0x1bc] sm:$0xf]
      %v4063 = vld [vmem:[%s4 + $0x1c0] sm:$0xf]
      %v4064 = vld [vmem:[%s4 + $0x1c4] sm:$0xf]
      %v4065 = vld [vmem:[%s4 + $0x1c8] sm:$0xf]
      %v4066 = vld [vmem:[%s4 + $0x1cc] sm:$0xf]
      %v4067 = vld [vmem:[%s4 + $0x1d0] sm:$0xf]
      %v4068 = vld [vmem:[%s4 + $0x1d4] sm:$0xf]
      %v4069 = vld [vmem:[%s4 + $0x1d8] sm:$0xf]
      %v4070 = vld [vmem:[%s4 + $0x1dc] sm:$0xf]
      %v4071 = vld [vmem:[%s4 + $0x1e0] sm:$0xf]
      %v4072 = vld [vmem:[%s4 + $0x1e4] sm:$0xf]
      %v4073 = vld [vmem:[%s4 + $0x1e8] sm:$0xf]
      %v4074 = vld [vmem:[%s4 + $0x1ec] sm:$0xf]
      %v4075 = vld [vmem:[%s4 + $0x1f0] sm:$0xf]
      %v4076 = vld [vmem:[%s4 + $0x1f4] sm:$0xf]
      %v4077 = vld [vmem:[%s4 + $0x1f8] sm:$0xf]
      %v4078 = vld [vmem:[%s4 + $0x1fc] sm:$0xf]
      %v4079 = vpack.c.bf16 %v3767, %v3759
      %v4080 = vpack.c.bf16 %v3768, %v3760
      %v4081 = vpack.c.bf16 %v3769, %v3761
      %v4082 = vpack.c.bf16 %v3770, %v3762
      %v4083 = vpack.c.bf16 %v3771, %v3763
      %v4084 = vpack.c.bf16 %v3772, %v3764
      %v4085 = vpack.c.bf16 %v3773, %v3765
      %v4086 = vpack.c.bf16 %v3774, %v3766
      %v4087 = vpack.c.bf16 %v3783, %v3775
      %v4088 = vpack.c.bf16 %v3784, %v3776
      %v4089 = vpack.c.bf16 %v3785, %v3777
      %v4090 = vpack.c.bf16 %v3786, %v3778
      %v4091 = vpack.c.bf16 %v3787, %v3779
      %v4092 = vpack.c.bf16 %v3788, %v3780
      %v4093 = vpack.c.bf16 %v3789, %v3781
      %v4094 = vpack.c.bf16 %v3790, %v3782
      %v4095 = vpack.c.bf16 %v3799, %v3791
      %v4096 = vpack.c.bf16 %v3800, %v3792
      %v4097 = vpack.c.bf16 %v3801, %v3793
      %v4098 = vpack.c.bf16 %v3802, %v3794
      %v4099 = vpack.c.bf16 %v3803, %v3795
      %v4100 = vpack.c.bf16 %v3804, %v3796
      %v4101 = vpack.c.bf16 %v3805, %v3797
      %v4102 = vpack.c.bf16 %v3806, %v3798
      %v4103 = vpack.c.bf16 %v3815, %v3807
      %v4104 = vpack.c.bf16 %v3816, %v3808
      %v4105 = vpack.c.bf16 %v3817, %v3809
      %v4106 = vpack.c.bf16 %v3818, %v3810
      %v4107 = vpack.c.bf16 %v3819, %v3811
      %v4108 = vpack.c.bf16 %v3820, %v3812
      %v4109 = vpack.c.bf16 %v3821, %v3813
      %v4110 = vpack.c.bf16 %v3822, %v3814
      %v4111 = vpack.c.bf16 %v3831, %v3823
      %v4112 = vpack.c.bf16 %v3832, %v3824
      %v4113 = vpack.c.bf16 %v3833, %v3825
      %v4114 = vpack.c.bf16 %v3834, %v3826
      %v4115 = vpack.c.bf16 %v3835, %v3827
      %v4116 = vpack.c.bf16 %v3836, %v3828
      %v4117 = vpack.c.bf16 %v3837, %v3829
      %v4118 = vpack.c.bf16 %v3838, %v3830
      %v4119 = vpack.c.bf16 %v3847, %v3839
      %v4120 = vpack.c.bf16 %v3848, %v3840
      %v4121 = vpack.c.bf16 %v3849, %v3841
      %v4122 = vpack.c.bf16 %v3850, %v3842
      %v4123 = vpack.c.bf16 %v3851, %v3843
      %v4124 = vpack.c.bf16 %v3852, %v3844
      %v4125 = vpack.c.bf16 %v3853, %v3845
      %v4126 = vpack.c.bf16 %v3854, %v3846
      %v4127 = vpack.c.bf16 %v3863, %v3855
      %v4128 = vpack.c.bf16 %v3864, %v3856
      %v4129 = vpack.c.bf16 %v3865, %v3857
      %v4130 = vpack.c.bf16 %v3866, %v3858
      %v4131 = vpack.c.bf16 %v3867, %v3859
      %v4132 = vpack.c.bf16 %v3868, %v3860
      %v4133 = vpack.c.bf16 %v3869, %v3861
      %v4134 = vpack.c.bf16 %v3870, %v3862
      %v4135 = vpack.c.bf16 %v3879, %v3871
      %v4136 = vpack.c.bf16 %v3880, %v3872
      %v4137 = vpack.c.bf16 %v3881, %v3873
      %v4138 = vpack.c.bf16 %v3882, %v3874
      %v4139 = vpack.c.bf16 %v3883, %v3875
      %v4140 = vpack.c.bf16 %v3884, %v3876
      %v4141 = vpack.c.bf16 %v3885, %v3877
      %v4142 = vpack.c.bf16 %v3886, %v3878
      %v4143 = vld [vmem:[%s5] sm:$0xf]
      %v4144 = vld [vmem:[%s5 + $0x4] sm:$0xf]
      %v4145 = vld [vmem:[%s5 + $0x8] sm:$0xf]
      %v4146 = vld [vmem:[%s5 + $0xc] sm:$0xf]
      %v4147 = vld [vmem:[%s5 + $0x10] sm:$0xf]
      %v4148 = vld [vmem:[%s5 + $0x14] sm:$0xf]
      %v4149 = vld [vmem:[%s5 + $0x18] sm:$0xf]
      %v4150 = vld [vmem:[%s5 + $0x1c] sm:$0xf]
      %v4151 = vld [vmem:[%s5 + $0x20] sm:$0xf]
      %v4152 = vld [vmem:[%s5 + $0x24] sm:$0xf]
      %v4153 = vld [vmem:[%s5 + $0x28] sm:$0xf]
      %v4154 = vld [vmem:[%s5 + $0x2c] sm:$0xf]
      %v4155 = vld [vmem:[%s5 + $0x30] sm:$0xf]
      %v4156 = vld [vmem:[%s5 + $0x34] sm:$0xf]
      %v4157 = vld [vmem:[%s5 + $0x38] sm:$0xf]
      %v4158 = vld [vmem:[%s5 + $0x3c] sm:$0xf]
      %v4159 = vld [vmem:[%s5 + $0x40] sm:$0xf]
      %v4160 = vld [vmem:[%s5 + $0x44] sm:$0xf]
      %v4161 = vld [vmem:[%s5 + $0x48] sm:$0xf]
      %v4162 = vld [vmem:[%s5 + $0x4c] sm:$0xf]
      %v4163 = vld [vmem:[%s5 + $0x50] sm:$0xf]
      %v4164 = vld [vmem:[%s5 + $0x54] sm:$0xf]
      %v4165 = vld [vmem:[%s5 + $0x58] sm:$0xf]
      %v4166 = vld [vmem:[%s5 + $0x5c] sm:$0xf]
      %v4167 = vld [vmem:[%s5 + $0x60] sm:$0xf]
      %v4168 = vld [vmem:[%s5 + $0x64] sm:$0xf]
      %v4169 = vld [vmem:[%s5 + $0x68] sm:$0xf]
      %v4170 = vld [vmem:[%s5 + $0x6c] sm:$0xf]
      %v4171 = vld [vmem:[%s5 + $0x70] sm:$0xf]
      %v4172 = vld [vmem:[%s5 + $0x74] sm:$0xf]
      %v4173 = vld [vmem:[%s5 + $0x78] sm:$0xf]
      %v4174 = vld [vmem:[%s5 + $0x7c] sm:$0xf]
      %v4175 = vld [vmem:[%s5 + $0x80] sm:$0xf]
      %v4176 = vld [vmem:[%s5 + $0x84] sm:$0xf]
      %v4177 = vld [vmem:[%s5 + $0x88] sm:$0xf]
      %v4178 = vld [vmem:[%s5 + $0x8c] sm:$0xf]
      %v4179 = vld [vmem:[%s5 + $0x90] sm:$0xf]
      %v4180 = vld [vmem:[%s5 + $0x94] sm:$0xf]
      %v4181 = vld [vmem:[%s5 + $0x98] sm:$0xf]
      %v4182 = vld [vmem:[%s5 + $0x9c] sm:$0xf]
      %v4183 = vld [vmem:[%s5 + $0xa0] sm:$0xf]
      %v4184 = vld [vmem:[%s5 + $0xa4] sm:$0xf]
      %v4185 = vld [vmem:[%s5 + $0xa8] sm:$0xf]
      %v4186 = vld [vmem:[%s5 + $0xac] sm:$0xf]
      %v4187 = vld [vmem:[%s5 + $0xb0] sm:$0xf]
      %v4188 = vld [vmem:[%s5 + $0xb4] sm:$0xf]
      %v4189 = vld [vmem:[%s5 + $0xb8] sm:$0xf]
      %v4190 = vld [vmem:[%s5 + $0xbc] sm:$0xf]
      %v4191 = vld [vmem:[%s5 + $0xc0] sm:$0xf]
      %v4192 = vld [vmem:[%s5 + $0xc4] sm:$0xf]
      %v4193 = vld [vmem:[%s5 + $0xc8] sm:$0xf]
      %v4194 = vld [vmem:[%s5 + $0xcc] sm:$0xf]
      %v4195 = vld [vmem:[%s5 + $0xd0] sm:$0xf]
      %v4196 = vld [vmem:[%s5 + $0xd4] sm:$0xf]
      %v4197 = vld [vmem:[%s5 + $0xd8] sm:$0xf]
      %v4198 = vld [vmem:[%s5 + $0xdc] sm:$0xf]
      %v4199 = vld [vmem:[%s5 + $0xe0] sm:$0xf]
      %v4200 = vld [vmem:[%s5 + $0xe4] sm:$0xf]
      %v4201 = vld [vmem:[%s5 + $0xe8] sm:$0xf]
      %v4202 = vld [vmem:[%s5 + $0xec] sm:$0xf]
      %v4203 = vld [vmem:[%s5 + $0xf0] sm:$0xf]
      %v4204 = vld [vmem:[%s5 + $0xf4] sm:$0xf]
      %v4205 = vld [vmem:[%s5 + $0xf8] sm:$0xf]
      %v4206 = vld [vmem:[%s5 + $0xfc] sm:$0xf]
      %v4207 = vld [vmem:[%s5 + $0x100] sm:$0xf]
      %v4208 = vld [vmem:[%s5 + $0x104] sm:$0xf]
      %v4209 = vld [vmem:[%s5 + $0x108] sm:$0xf]
      %v4210 = vld [vmem:[%s5 + $0x10c] sm:$0xf]
      %v4211 = vld [vmem:[%s5 + $0x110] sm:$0xf]
      %v4212 = vld [vmem:[%s5 + $0x114] sm:$0xf]
      %v4213 = vld [vmem:[%s5 + $0x118] sm:$0xf]
      %v4214 = vld [vmem:[%s5 + $0x11c] sm:$0xf]
      %v4215 = vld [vmem:[%s5 + $0x120] sm:$0xf]
      %v4216 = vld [vmem:[%s5 + $0x124] sm:$0xf]
      %v4217 = vld [vmem:[%s5 + $0x128] sm:$0xf]
      %v4218 = vld [vmem:[%s5 + $0x12c] sm:$0xf]
      %v4219 = vld [vmem:[%s5 + $0x130] sm:$0xf]
      %v4220 = vld [vmem:[%s5 + $0x134] sm:$0xf]
      %v4221 = vld [vmem:[%s5 + $0x138] sm:$0xf]
      %v4222 = vld [vmem:[%s5 + $0x13c] sm:$0xf]
      %v4223 = vld [vmem:[%s5 + $0x140] sm:$0xf]
      %v4224 = vld [vmem:[%s5 + $0x144] sm:$0xf]
      %v4225 = vld [vmem:[%s5 + $0x148] sm:$0xf]
      %v4226 = vld [vmem:[%s5 + $0x14c] sm:$0xf]
      %v4227 = vld [vmem:[%s5 + $0x150] sm:$0xf]
      %v4228 = vld [vmem:[%s5 + $0x154] sm:$0xf]
      %v4229 = vld [vmem:[%s5 + $0x158] sm:$0xf]
      %v4230 = vld [vmem:[%s5 + $0x15c] sm:$0xf]
      %v4231 = vld [vmem:[%s5 + $0x160] sm:$0xf]
      %v4232 = vld [vmem:[%s5 + $0x164] sm:$0xf]
      %v4233 = vld [vmem:[%s5 + $0x168] sm:$0xf]
      %v4234 = vld [vmem:[%s5 + $0x16c] sm:$0xf]
      %v4235 = vld [vmem:[%s5 + $0x170] sm:$0xf]
      %v4236 = vld [vmem:[%s5 + $0x174] sm:$0xf]
      %v4237 = vld [vmem:[%s5 + $0x178] sm:$0xf]
      %v4238 = vld [vmem:[%s5 + $0x17c] sm:$0xf]
      %v4239 = vld [vmem:[%s5 + $0x180] sm:$0xf]
      %v4240 = vld [vmem:[%s5 + $0x184] sm:$0xf]
      %v4241 = vld [vmem:[%s5 + $0x188] sm:$0xf]
      %v4242 = vld [vmem:[%s5 + $0x18c] sm:$0xf]
      %v4243 = vld [vmem:[%s5 + $0x190] sm:$0xf]
      %v4244 = vld [vmem:[%s5 + $0x194] sm:$0xf]
      %v4245 = vld [vmem:[%s5 + $0x198] sm:$0xf]
      %v4246 = vld [vmem:[%s5 + $0x19c] sm:$0xf]
      %v4247 = vld [vmem:[%s5 + $0x1a0] sm:$0xf]
      %v4248 = vld [vmem:[%s5 + $0x1a4] sm:$0xf]
      %v4249 = vld [vmem:[%s5 + $0x1a8] sm:$0xf]
      %v4250 = vld [vmem:[%s5 + $0x1ac] sm:$0xf]
      %v4251 = vld [vmem:[%s5 + $0x1b0] sm:$0xf]
      %v4252 = vld [vmem:[%s5 + $0x1b4] sm:$0xf]
      %v4253 = vld [vmem:[%s5 + $0x1b8] sm:$0xf]
      %v4254 = vld [vmem:[%s5 + $0x1bc] sm:$0xf]
      %v4255 = vld [vmem:[%s5 + $0x1c0] sm:$0xf]
      %v4256 = vld [vmem:[%s5 + $0x1c4] sm:$0xf]
      %v4257 = vld [vmem:[%s5 + $0x1c8] sm:$0xf]
      %v4258 = vld [vmem:[%s5 + $0x1cc] sm:$0xf]
      %v4259 = vld [vmem:[%s5 + $0x1d0] sm:$0xf]
      %v4260 = vld [vmem:[%s5 + $0x1d4] sm:$0xf]
      %v4261 = vld [vmem:[%s5 + $0x1d8] sm:$0xf]
      %v4262 = vld [vmem:[%s5 + $0x1dc] sm:$0xf]
      %v4263 = vld [vmem:[%s5 + $0x1e0] sm:$0xf]
      %v4264 = vld [vmem:[%s5 + $0x1e4] sm:$0xf]
      %v4265 = vld [vmem:[%s5 + $0x1e8] sm:$0xf]
      %v4266 = vld [vmem:[%s5 + $0x1ec] sm:$0xf]
      %v4267 = vld [vmem:[%s5 + $0x1f0] sm:$0xf]
      %v4268 = vld [vmem:[%s5 + $0x1f4] sm:$0xf]
      %v4269 = vld [vmem:[%s5 + $0x1f8] sm:$0xf]
      %v4270 = vld [vmem:[%s5 + $0x1fc] sm:$0xf]
      %v4399 = vunpack.c.l.b16 %v4143
      %v4400 = vunpack.c.l.b16 %v4144
      %v4401 = vunpack.c.l.b16 %v4145
      %v4402 = vunpack.c.l.b16 %v4146
      %v4403 = vunpack.c.l.b16 %v4147
      %v4404 = vunpack.c.l.b16 %v4148
      %v4405 = vunpack.c.l.b16 %v4149
      %v4406 = vunpack.c.l.b16 %v4150
      %v4407 = vunpack.c.l.b16 %v4151
      %v4408 = vunpack.c.l.b16 %v4152
      %v4409 = vunpack.c.l.b16 %v4153
      %v4410 = vunpack.c.l.b16 %v4154
      %v4411 = vunpack.c.l.b16 %v4155
      %v4412 = vunpack.c.l.b16 %v4156
      %v4413 = vunpack.c.l.b16 %v4157
      %v4414 = vunpack.c.l.b16 %v4158
      %v4415 = vunpack.c.l.b16 %v4159
      %v4416 = vunpack.c.l.b16 %v4160
      %v4417 = vunpack.c.l.b16 %v4161
      %v4418 = vunpack.c.l.b16 %v4162
      %v4419 = vunpack.c.l.b16 %v4163
      %v4420 = vunpack.c.l.b16 %v4164
      %v4421 = vunpack.c.l.b16 %v4165
      %v4422 = vunpack.c.l.b16 %v4166
      %v4423 = vunpack.c.l.b16 %v4167
      %v4424 = vunpack.c.l.b16 %v4168
      %v4425 = vunpack.c.l.b16 %v4169
      %v4426 = vunpack.c.l.b16 %v4170
      %v4427 = vunpack.c.l.b16 %v4171
      %v4428 = vunpack.c.l.b16 %v4172
      %v4429 = vunpack.c.l.b16 %v4173
      %v4430 = vunpack.c.l.b16 %v4174
      %v4431 = vunpack.c.l.b16 %v4175
      %v4432 = vunpack.c.l.b16 %v4176
      %v4433 = vunpack.c.l.b16 %v4177
      %v4434 = vunpack.c.l.b16 %v4178
      %v4435 = vunpack.c.l.b16 %v4179
      %v4436 = vunpack.c.l.b16 %v4180
      %v4437 = vunpack.c.l.b16 %v4181
      %v4438 = vunpack.c.l.b16 %v4182
      %v4439 = vunpack.c.l.b16 %v4183
      %v4440 = vunpack.c.l.b16 %v4184
      %v4441 = vunpack.c.l.b16 %v4185
      %v4442 = vunpack.c.l.b16 %v4186
      %v4443 = vunpack.c.l.b16 %v4187
      %v4444 = vunpack.c.l.b16 %v4188
      %v4445 = vunpack.c.l.b16 %v4189
      %v4446 = vunpack.c.l.b16 %v4190
      %v4447 = vunpack.c.l.b16 %v4191
      %v4448 = vunpack.c.l.b16 %v4192
      %v4449 = vunpack.c.l.b16 %v4193
      %v4450 = vunpack.c.l.b16 %v4194
      %v4451 = vunpack.c.l.b16 %v4195
      %v4452 = vunpack.c.l.b16 %v4196
      %v4453 = vunpack.c.l.b16 %v4197
      %v4454 = vunpack.c.l.b16 %v4198
      %v4455 = vunpack.c.l.b16 %v4199
      %v4456 = vunpack.c.l.b16 %v4200
      %v4457 = vunpack.c.l.b16 %v4201
      %v4458 = vunpack.c.l.b16 %v4202
      %v4459 = vunpack.c.l.b16 %v4203
      %v4460 = vunpack.c.l.b16 %v4204
      %v4461 = vunpack.c.l.b16 %v4205
      %v4462 = vunpack.c.l.b16 %v4206
      %v4463 = vunpack.c.l.b16 %v4207
      %v4464 = vunpack.c.l.b16 %v4208
      %v4465 = vunpack.c.l.b16 %v4209
      %v4466 = vunpack.c.l.b16 %v4210
      %v4467 = vunpack.c.l.b16 %v4211
      %v4468 = vunpack.c.l.b16 %v4212
      %v4469 = vunpack.c.l.b16 %v4213
      %v4470 = vunpack.c.l.b16 %v4214
      %v4471 = vunpack.c.l.b16 %v4215
      %v4472 = vunpack.c.l.b16 %v4216
      %v4473 = vunpack.c.l.b16 %v4217
      %v4474 = vunpack.c.l.b16 %v4218
      %v4475 = vunpack.c.l.b16 %v4219
      %v4476 = vunpack.c.l.b16 %v4220
      %v4477 = vunpack.c.l.b16 %v4221
      %v4478 = vunpack.c.l.b16 %v4222
      %v4479 = vunpack.c.l.b16 %v4223
      %v4480 = vunpack.c.l.b16 %v4224
      %v4481 = vunpack.c.l.b16 %v4225
      %v4482 = vunpack.c.l.b16 %v4226
      %v4483 = vunpack.c.l.b16 %v4227
      %v4484 = vunpack.c.l.b16 %v4228
      %v4485 = vunpack.c.l.b16 %v4229
      %v4486 = vunpack.c.l.b16 %v4230
      %v4487 = vunpack.c.l.b16 %v4231
      %v4488 = vunpack.c.l.b16 %v4232
      %v4489 = vunpack.c.l.b16 %v4233
      %v4490 = vunpack.c.l.b16 %v4234
      %v4491 = vunpack.c.l.b16 %v4235
      %v4492 = vunpack.c.l.b16 %v4236
      %v4493 = vunpack.c.l.b16 %v4237
      %v4494 = vunpack.c.l.b16 %v4238
      %v4495 = vunpack.c.l.b16 %v4239
      %v4496 = vunpack.c.l.b16 %v4240
      %v4497 = vunpack.c.l.b16 %v4241
      %v4498 = vunpack.c.l.b16 %v4242
      %v4499 = vunpack.c.l.b16 %v4243
      %v4500 = vunpack.c.l.b16 %v4244
      %v4501 = vunpack.c.l.b16 %v4245
      %v4502 = vunpack.c.l.b16 %v4246
      %v4503 = vunpack.c.l.b16 %v4247
      %v4504 = vunpack.c.l.b16 %v4248
      %v4505 = vunpack.c.l.b16 %v4249
      %v4506 = vunpack.c.l.b16 %v4250
      %v4507 = vunpack.c.l.b16 %v4251
      %v4508 = vunpack.c.l.b16 %v4252
      %v4509 = vunpack.c.l.b16 %v4253
      %v4510 = vunpack.c.l.b16 %v4254
      %v4511 = vunpack.c.l.b16 %v4255
      %v4512 = vunpack.c.l.b16 %v4256
      %v4513 = vunpack.c.l.b16 %v4257
      %v4514 = vunpack.c.l.b16 %v4258
      %v4515 = vunpack.c.l.b16 %v4259
      %v4516 = vunpack.c.l.b16 %v4260
      %v4517 = vunpack.c.l.b16 %v4261
      %v4518 = vunpack.c.l.b16 %v4262
      %v4519 = vunpack.c.l.b16 %v4263
      %v4520 = vunpack.c.l.b16 %v4264
      %v4521 = vunpack.c.l.b16 %v4265
      %v4522 = vunpack.c.l.b16 %v4266
      %v4523 = vunpack.c.l.b16 %v4267
      %v4524 = vunpack.c.l.b16 %v4268
      %v4525 = vunpack.c.l.b16 %v4269
      %v4526 = vunpack.c.l.b16 %v4270
      %v4527 = vpack.c.b16 %v4400, %v4399
      %v4528 = vpack.c.b16 %v4402, %v4401
      %v4529 = vpack.c.b16 %v4404, %v4403
      %v4530 = vpack.c.b16 %v4406, %v4405
      %v4531 = vpack.c.b16 %v4408, %v4407
      %v4532 = vpack.c.b16 %v4410, %v4409
      %v4533 = vpack.c.b16 %v4412, %v4411
      %v4534 = vpack.c.b16 %v4414, %v4413
      %v4535 = vpack.c.b16 %v4416, %v4415
      %v4536 = vpack.c.b16 %v4418, %v4417
      %v4537 = vpack.c.b16 %v4420, %v4419
      %v4538 = vpack.c.b16 %v4422, %v4421
      %v4539 = vpack.c.b16 %v4424, %v4423
      %v4540 = vpack.c.b16 %v4426, %v4425
      %v4541 = vpack.c.b16 %v4428, %v4427
      %v4542 = vpack.c.b16 %v4430, %v4429
      %v4543 = vpack.c.b16 %v4432, %v4431
      %v4544 = vpack.c.b16 %v4434, %v4433
      %v4545 = vpack.c.b16 %v4436, %v4435
      %v4546 = vpack.c.b16 %v4438, %v4437
      %v4547 = vpack.c.b16 %v4440, %v4439
      %v4548 = vpack.c.b16 %v4442, %v4441
      %v4549 = vpack.c.b16 %v4444, %v4443
      %v4550 = vpack.c.b16 %v4446, %v4445
      %v4551 = vpack.c.b16 %v4448, %v4447
      %v4552 = vpack.c.b16 %v4450, %v4449
      %v4553 = vpack.c.b16 %v4452, %v4451
      %v4554 = vpack.c.b16 %v4454, %v4453
      %v4555 = vpack.c.b16 %v4456, %v4455
      %v4556 = vpack.c.b16 %v4458, %v4457
      %v4557 = vpack.c.b16 %v4460, %v4459
      %v4558 = vpack.c.b16 %v4462, %v4461
      %v4559 = vpack.c.b16 %v4464, %v4463
      %v4560 = vpack.c.b16 %v4466, %v4465
      %v4561 = vpack.c.b16 %v4468, %v4467
      %v4562 = vpack.c.b16 %v4470, %v4469
      %v4563 = vpack.c.b16 %v4472, %v4471
      %v4564 = vpack.c.b16 %v4474, %v4473
      %v4565 = vpack.c.b16 %v4476, %v4475
      %v4566 = vpack.c.b16 %v4478, %v4477
      %v4567 = vpack.c.b16 %v4480, %v4479
      %v4568 = vpack.c.b16 %v4482, %v4481
      %v4569 = vpack.c.b16 %v4484, %v4483
      %v4570 = vpack.c.b16 %v4486, %v4485
      %v4571 = vpack.c.b16 %v4488, %v4487
      %v4572 = vpack.c.b16 %v4490, %v4489
      %v4573 = vpack.c.b16 %v4492, %v4491
      %v4574 = vpack.c.b16 %v4494, %v4493
      %v4575 = vpack.c.b16 %v4496, %v4495
      %v4576 = vpack.c.b16 %v4498, %v4497
      %v4577 = vpack.c.b16 %v4500, %v4499
      %v4578 = vpack.c.b16 %v4502, %v4501
      %v4579 = vpack.c.b16 %v4504, %v4503
      %v4580 = vpack.c.b16 %v4506, %v4505
      %v4581 = vpack.c.b16 %v4508, %v4507
      %v4582 = vpack.c.b16 %v4510, %v4509
      %v4583 = vpack.c.b16 %v4512, %v4511
      %v4584 = vpack.c.b16 %v4514, %v4513
      %v4585 = vpack.c.b16 %v4516, %v4515
      %v4586 = vpack.c.b16 %v4518, %v4517
      %v4587 = vpack.c.b16 %v4520, %v4519
      %v4588 = vpack.c.b16 %v4522, %v4521
      %v4589 = vpack.c.b16 %v4524, %v4523
      %v4590 = vpack.c.b16 %v4526, %v4525
      %4655 = vmatpush.bf16.msra.mxu0 %v4534
      %4656 = vmatpush.bf16.msra.mxu0 %v4533
      %4657 = vmatpush.bf16.msra.mxu0 %v4532
      %4658 = vmatpush.bf16.msra.mxu0 %v4531
      %4659 = vmatpush.bf16.msra.mxu0 %v4530
      %4660 = vmatpush.bf16.msra.mxu0 %v4529
      %4661 = vmatpush.bf16.msra.mxu0 %v4528
      %4662 = vmatpush.bf16.msra.mxu0 %v4527
      %4663 = vmatmul.bf16.gmra.mxu0 %v4079
      %v4664 = vpop.f32.mrf.mxu0
      %v4665 = vadd.f32 0.0, %v4664
      %v4666 = vpop.f32.mrf.mxu0
      %v4667 = vadd.f32 0.0, %v4666
      %4668 = vmatmul.bf16.gmra.mxu0 %v4087
      %v4669 = vpop.f32.mrf.mxu0
      %v4670 = vadd.f32 0.0, %v4669
      %v4671 = vpop.f32.mrf.mxu0
      %v4672 = vadd.f32 0.0, %v4671
      %4673 = vmatmul.bf16.gmra.mxu0 %v4095
      %v4674 = vpop.f32.mrf.mxu0
      %v4675 = vadd.f32 0.0, %v4674
      %v4676 = vpop.f32.mrf.mxu0
      %v4677 = vadd.f32 0.0, %v4676
      %4678 = vmatmul.bf16.gmra.mxu0 %v4103
      %v4679 = vpop.f32.mrf.mxu0
      %v4680 = vadd.f32 0.0, %v4679
      %v4681 = vpop.f32.mrf.mxu0
      %v4682 = vadd.f32 0.0, %v4681
      %4683 = vmatmul.bf16.gmra.mxu0 %v4111
      %v4684 = vpop.f32.mrf.mxu0
      %v4685 = vadd.f32 0.0, %v4684
      %v4686 = vpop.f32.mrf.mxu0
      %v4687 = vadd.f32 0.0, %v4686
      %4688 = vmatmul.bf16.gmra.mxu0 %v4119
      %v4689 = vpop.f32.mrf.mxu0
      %v4690 = vadd.f32 0.0, %v4689
      %v4691 = vpop.f32.mrf.mxu0
      %v4692 = vadd.f32 0.0, %v4691
      %4693 = vmatmul.bf16.gmra.mxu0 %v4127
      %v4694 = vpop.f32.mrf.mxu0
      %v4695 = vadd.f32 0.0, %v4694
      %v4696 = vpop.f32.mrf.mxu0
      %v4697 = vadd.f32 0.0, %v4696
      %4698 = vmatmul.bf16.gmra.mxu0 %v4135
      %v4699 = vpop.f32.mrf.mxu0
      %v4700 = vadd.f32 0.0, %v4699
      %v4701 = vpop.f32.mrf.mxu0
      %v4702 = vadd.f32 0.0, %v4701
      %4703 = vdwg.mxu0
      %4704 = vmatpush.bf16.msra.mxu0 %v4542
      %4705 = vmatpush.bf16.msra.mxu0 %v4541
      %4706 = vmatpush.bf16.msra.mxu0 %v4540
      %4707 = vmatpush.bf16.msra.mxu0 %v4539
      %4708 = vmatpush.bf16.msra.mxu0 %v4538
      %4709 = vmatpush.bf16.msra.mxu0 %v4537
      %4710 = vmatpush.bf16.msra.mxu0 %v4536
      %4711 = vmatpush.bf16.msra.mxu0 %v4535
      %4712 = vmatmul.bf16.gmra.mxu0 %v4080
      %v4713 = vpop.f32.mrf.mxu0
      %v4714 = vadd.f32 %v4665, %v4713
      %v4715 = vpop.f32.mrf.mxu0
      %v4716 = vadd.f32 %v4667, %v4715
      %4717 = vmatmul.bf16.gmra.mxu0 %v4088
      %v4718 = vpop.f32.mrf.mxu0
      %v4719 = vadd.f32 %v4670, %v4718
      %v4720 = vpop.f32.mrf.mxu0
      %v4721 = vadd.f32 %v4672, %v4720
      %4722 = vmatmul.bf16.gmra.mxu0 %v4096
      %v4723 = vpop.f32.mrf.mxu0
      %v4724 = vadd.f32 %v4675, %v4723
      %v4725 = vpop.f32.mrf.mxu0
      %v4726 = vadd.f32 %v4677, %v4725
      %4727 = vmatmul.bf16.gmra.mxu0 %v4104
      %v4728 = vpop.f32.mrf.mxu0
      %v4729 = vadd.f32 %v4680, %v4728
      %v4730 = vpop.f32.mrf.mxu0
      %v4731 = vadd.f32 %v4682, %v4730
      %4732 = vmatmul.bf16.gmra.mxu0 %v4112
      %v4733 = vpop.f32.mrf.mxu0
      %v4734 = vadd.f32 %v4685, %v4733
      %v4735 = vpop.f32.mrf.mxu0
      %v4736 = vadd.f32 %v4687, %v4735
      %4737 = vmatmul.bf16.gmra.mxu0 %v4120
      %v4738 = vpop.f32.mrf.mxu0
      %v4739 = vadd.f32 %v4690, %v4738
      %v4740 = vpop.f32.mrf.mxu0
      %v4741 = vadd.f32 %v4692, %v4740
      %4742 = vmatmul.bf16.gmra.mxu0 %v4128
      %v4743 = vpop.f32.mrf.mxu0
      %v4744 = vadd.f32 %v4695, %v4743
      %v4745 = vpop.f32.mrf.mxu0
      %v4746 = vadd.f32 %v4697, %v4745
      %4747 = vmatmul.bf16.gmra.mxu0 %v4136
      %v4748 = vpop.f32.mrf.mxu0
      %v4749 = vadd.f32 %v4700, %v4748
      %v4750 = vpop.f32.mrf.mxu0
      %v4751 = vadd.f32 %v4702, %v4750
      %4752 = vdwg.mxu0
      %4753 = vmatpush.bf16.msra.mxu0 %v4550
      %4754 = vmatpush.bf16.msra.mxu0 %v4549
      %4755 = vmatpush.bf16.msra.mxu0 %v4548
      %4756 = vmatpush.bf16.msra.mxu0 %v4547
      %4757 = vmatpush.bf16.msra.mxu0 %v4546
      %4758 = vmatpush.bf16.msra.mxu0 %v4545
      %4759 = vmatpush.bf16.msra.mxu0 %v4544
      %4760 = vmatpush.bf16.msra.mxu0 %v4543
      %4761 = vmatmul.bf16.gmra.mxu0 %v4081
      %v4762 = vpop.f32.mrf.mxu0
      %v4763 = vadd.f32 %v4714, %v4762
      %v4764 = vpop.f32.mrf.mxu0
      %v4765 = vadd.f32 %v4716, %v4764
      %4766 = vmatmul.bf16.gmra.mxu0 %v4089
      %v4767 = vpop.f32.mrf.mxu0
      %v4768 = vadd.f32 %v4719, %v4767
      %v4769 = vpop.f32.mrf.mxu0
      %v4770 = vadd.f32 %v4721, %v4769
      %4771 = vmatmul.bf16.gmra.mxu0 %v4097
      %v4772 = vpop.f32.mrf.mxu0
      %v4773 = vadd.f32 %v4724, %v4772
      %v4774 = vpop.f32.mrf.mxu0
      %v4775 = vadd.f32 %v4726, %v4774
      %4776 = vmatmul.bf16.gmra.mxu0 %v4105
      %v4777 = vpop.f32.mrf.mxu0
      %v4778 = vadd.f32 %v4729, %v4777
      %v4779 = vpop.f32.mrf.mxu0
      %v4780 = vadd.f32 %v4731, %v4779
      %4781 = vmatmul.bf16.gmra.mxu0 %v4113
      %v4782 = vpop.f32.mrf.mxu0
      %v4783 = vadd.f32 %v4734, %v4782
      %v4784 = vpop.f32.mrf.mxu0
      %v4785 = vadd.f32 %v4736, %v4784
      %4786 = vmatmul.bf16.gmra.mxu0 %v4121
      %v4787 = vpop.f32.mrf.mxu0
      %v4788 = vadd.f32 %v4739, %v4787
      %v4789 = vpop.f32.mrf.mxu0
      %v4790 = vadd.f32 %v4741, %v4789
      %4791 = vmatmul.bf16.gmra.mxu0 %v4129
      %v4792 = vpop.f32.mrf.mxu0
      %v4793 = vadd.f32 %v4744, %v4792
      %v4794 = vpop.f32.mrf.mxu0
      %v4795 = vadd.f32 %v4746, %v4794
      %4796 = vmatmul.bf16.gmra.mxu0 %v4137
      %v4797 = vpop.f32.mrf.mxu0
      %v4798 = vadd.f32 %v4749, %v4797
      %v4799 = vpop.f32.mrf.mxu0
      %v4800 = vadd.f32 %v4751, %v4799
      %4801 = vdwg.mxu0
      %4802 = vmatpush.bf16.msra.mxu0 %v4558
      %4803 = vmatpush.bf16.msra.mxu0 %v4557
      %4804 = vmatpush.bf16.msra.mxu0 %v4556
      %4805 = vmatpush.bf16.msra.mxu0 %v4555
      %4806 = vmatpush.bf16.msra.mxu0 %v4554
      %4807 = vmatpush.bf16.msra.mxu0 %v4553
      %4808 = vmatpush.bf16.msra.mxu0 %v4552
      %4809 = vmatpush.bf16.msra.mxu0 %v4551
      %4810 = vmatmul.bf16.gmra.mxu0 %v4082
      %v4811 = vpop.f32.mrf.mxu0
      %v4812 = vadd.f32 %v4763, %v4811
      %v4813 = vpop.f32.mrf.mxu0
      %v4814 = vadd.f32 %v4765, %v4813
      %4815 = vmatmul.bf16.gmra.mxu0 %v4090
      %v4816 = vpop.f32.mrf.mxu0
      %v4817 = vadd.f32 %v4768, %v4816
      %v4818 = vpop.f32.mrf.mxu0
      %v4819 = vadd.f32 %v4770, %v4818
      %4820 = vmatmul.bf16.gmra.mxu0 %v4098
      %v4821 = vpop.f32.mrf.mxu0
      %v4822 = vadd.f32 %v4773, %v4821
      %v4823 = vpop.f32.mrf.mxu0
      %v4824 = vadd.f32 %v4775, %v4823
      %4825 = vmatmul.bf16.gmra.mxu0 %v4106
      %v4826 = vpop.f32.mrf.mxu0
      %v4827 = vadd.f32 %v4778, %v4826
      %v4828 = vpop.f32.mrf.mxu0
      %v4829 = vadd.f32 %v4780, %v4828
      %4830 = vmatmul.bf16.gmra.mxu0 %v4114
      %v4831 = vpop.f32.mrf.mxu0
      %v4832 = vadd.f32 %v4783, %v4831
      %v4833 = vpop.f32.mrf.mxu0
      %v4834 = vadd.f32 %v4785, %v4833
      %4835 = vmatmul.bf16.gmra.mxu0 %v4122
      %v4836 = vpop.f32.mrf.mxu0
      %v4837 = vadd.f32 %v4788, %v4836
      %v4838 = vpop.f32.mrf.mxu0
      %v4839 = vadd.f32 %v4790, %v4838
      %4840 = vmatmul.bf16.gmra.mxu0 %v4130
      %v4841 = vpop.f32.mrf.mxu0
      %v4842 = vadd.f32 %v4793, %v4841
      %v4843 = vpop.f32.mrf.mxu0
      %v4844 = vadd.f32 %v4795, %v4843
      %4845 = vmatmul.bf16.gmra.mxu0 %v4138
      %v4846 = vpop.f32.mrf.mxu0
      %v4847 = vadd.f32 %v4798, %v4846
      %v4848 = vpop.f32.mrf.mxu0
      %v4849 = vadd.f32 %v4800, %v4848
      %4850 = vdwg.mxu0
      %4851 = vmatpush.bf16.msra.mxu0 %v4566
      %4852 = vmatpush.bf16.msra.mxu0 %v4565
      %4853 = vmatpush.bf16.msra.mxu0 %v4564
      %4854 = vmatpush.bf16.msra.mxu0 %v4563
      %4855 = vmatpush.bf16.msra.mxu0 %v4562
      %4856 = vmatpush.bf16.msra.mxu0 %v4561
      %4857 = vmatpush.bf16.msra.mxu0 %v4560
      %4858 = vmatpush.bf16.msra.mxu0 %v4559
      %4859 = vmatmul.bf16.gmra.mxu0 %v4083
      %v4860 = vpop.f32.mrf.mxu0
      %v4861 = vadd.f32 %v4812, %v4860
      %v4862 = vpop.f32.mrf.mxu0
      %v4863 = vadd.f32 %v4814, %v4862
      %4864 = vmatmul.bf16.gmra.mxu0 %v4091
      %v4865 = vpop.f32.mrf.mxu0
      %v4866 = vadd.f32 %v4817, %v4865
      %v4867 = vpop.f32.mrf.mxu0
      %v4868 = vadd.f32 %v4819, %v4867
      %4869 = vmatmul.bf16.gmra.mxu0 %v4099
      %v4870 = vpop.f32.mrf.mxu0
      %v4871 = vadd.f32 %v4822, %v4870
      %v4872 = vpop.f32.mrf.mxu0
      %v4873 = vadd.f32 %v4824, %v4872
      %4874 = vmatmul.bf16.gmra.mxu0 %v4107
      %v4875 = vpop.f32.mrf.mxu0
      %v4876 = vadd.f32 %v4827, %v4875
      %v4877 = vpop.f32.mrf.mxu0
      %v4878 = vadd.f32 %v4829, %v4877
      %4879 = vmatmul.bf16.gmra.mxu0 %v4115
      %v4880 = vpop.f32.mrf.mxu0
      %v4881 = vadd.f32 %v4832, %v4880
      %v4882 = vpop.f32.mrf.mxu0
      %v4883 = vadd.f32 %v4834, %v4882
      %4884 = vmatmul.bf16.gmra.mxu0 %v4123
      %v4885 = vpop.f32.mrf.mxu0
      %v4886 = vadd.f32 %v4837, %v4885
      %v4887 = vpop.f32.mrf.mxu0
      %v4888 = vadd.f32 %v4839, %v4887
      %4889 = vmatmul.bf16.gmra.mxu0 %v4131
      %v4890 = vpop.f32.mrf.mxu0
      %v4891 = vadd.f32 %v4842, %v4890
      %v4892 = vpop.f32.mrf.mxu0
      %v4893 = vadd.f32 %v4844, %v4892
      %4894 = vmatmul.bf16.gmra.mxu0 %v4139
      %v4895 = vpop.f32.mrf.mxu0
      %v4896 = vadd.f32 %v4847, %v4895
      %v4897 = vpop.f32.mrf.mxu0
      %v4898 = vadd.f32 %v4849, %v4897
      %4899 = vdwg.mxu0
      %4900 = vmatpush.bf16.msra.mxu0 %v4574
      %4901 = vmatpush.bf16.msra.mxu0 %v4573
      %4902 = vmatpush.bf16.msra.mxu0 %v4572
      %4903 = vmatpush.bf16.msra.mxu0 %v4571
      %4904 = vmatpush.bf16.msra.mxu0 %v4570
      %4905 = vmatpush.bf16.msra.mxu0 %v4569
      %4906 = vmatpush.bf16.msra.mxu0 %v4568
      %4907 = vmatpush.bf16.msra.mxu0 %v4567
      %4908 = vmatmul.bf16.gmra.mxu0 %v4084
      %v4909 = vpop.f32.mrf.mxu0
      %v4910 = vadd.f32 %v4861, %v4909
      %v4911 = vpop.f32.mrf.mxu0
      %v4912 = vadd.f32 %v4863, %v4911
      %4913 = vmatmul.bf16.gmra.mxu0 %v4092
      %v4914 = vpop.f32.mrf.mxu0
      %v4915 = vadd.f32 %v4866, %v4914
      %v4916 = vpop.f32.mrf.mxu0
      %v4917 = vadd.f32 %v4868, %v4916
      %4918 = vmatmul.bf16.gmra.mxu0 %v4100
      %v4919 = vpop.f32.mrf.mxu0
      %v4920 = vadd.f32 %v4871, %v4919
      %v4921 = vpop.f32.mrf.mxu0
      %v4922 = vadd.f32 %v4873, %v4921
      %4923 = vmatmul.bf16.gmra.mxu0 %v4108
      %v4924 = vpop.f32.mrf.mxu0
      %v4925 = vadd.f32 %v4876, %v4924
      %v4926 = vpop.f32.mrf.mxu0
      %v4927 = vadd.f32 %v4878, %v4926
      %4928 = vmatmul.bf16.gmra.mxu0 %v4116
      %v4929 = vpop.f32.mrf.mxu0
      %v4930 = vadd.f32 %v4881, %v4929
      %v4931 = vpop.f32.mrf.mxu0
      %v4932 = vadd.f32 %v4883, %v4931
      %4933 = vmatmul.bf16.gmra.mxu0 %v4124
      %v4934 = vpop.f32.mrf.mxu0
      %v4935 = vadd.f32 %v4886, %v4934
      %v4936 = vpop.f32.mrf.mxu0
      %v4937 = vadd.f32 %v4888, %v4936
      %4938 = vmatmul.bf16.gmra.mxu0 %v4132
      %v4939 = vpop.f32.mrf.mxu0
      %v4940 = vadd.f32 %v4891, %v4939
      %v4941 = vpop.f32.mrf.mxu0
      %v4942 = vadd.f32 %v4893, %v4941
      %4943 = vmatmul.bf16.gmra.mxu0 %v4140
      %v4944 = vpop.f32.mrf.mxu0
      %v4945 = vadd.f32 %v4896, %v4944
      %v4946 = vpop.f32.mrf.mxu0
      %v4947 = vadd.f32 %v4898, %v4946
      %4948 = vdwg.mxu0
      %4949 = vmatpush.bf16.msra.mxu0 %v4582
      %4950 = vmatpush.bf16.msra.mxu0 %v4581
      %4951 = vmatpush.bf16.msra.mxu0 %v4580
      %4952 = vmatpush.bf16.msra.mxu0 %v4579
      %4953 = vmatpush.bf16.msra.mxu0 %v4578
      %4954 = vmatpush.bf16.msra.mxu0 %v4577
      %4955 = vmatpush.bf16.msra.mxu0 %v4576
      %4956 = vmatpush.bf16.msra.mxu0 %v4575
      %4957 = vmatmul.bf16.gmra.mxu0 %v4085
      %v4958 = vpop.f32.mrf.mxu0
      %v4959 = vadd.f32 %v4910, %v4958
      %v4960 = vpop.f32.mrf.mxu0
      %v4961 = vadd.f32 %v4912, %v4960
      %4962 = vmatmul.bf16.gmra.mxu0 %v4093
      %v4963 = vpop.f32.mrf.mxu0
      %v4964 = vadd.f32 %v4915, %v4963
      %v4965 = vpop.f32.mrf.mxu0
      %v4966 = vadd.f32 %v4917, %v4965
      %4967 = vmatmul.bf16.gmra.mxu0 %v4101
      %v4968 = vpop.f32.mrf.mxu0
      %v4969 = vadd.f32 %v4920, %v4968
      %v4970 = vpop.f32.mrf.mxu0
      %v4971 = vadd.f32 %v4922, %v4970
      %4972 = vmatmul.bf16.gmra.mxu0 %v4109
      %v4973 = vpop.f32.mrf.mxu0
      %v4974 = vadd.f32 %v4925, %v4973
      %v4975 = vpop.f32.mrf.mxu0
      %v4976 = vadd.f32 %v4927, %v4975
      %4977 = vmatmul.bf16.gmra.mxu0 %v4117
      %v4978 = vpop.f32.mrf.mxu0
      %v4979 = vadd.f32 %v4930, %v4978
      %v4980 = vpop.f32.mrf.mxu0
      %v4981 = vadd.f32 %v4932, %v4980
      %4982 = vmatmul.bf16.gmra.mxu0 %v4125
      %v4983 = vpop.f32.mrf.mxu0
      %v4984 = vadd.f32 %v4935, %v4983
      %v4985 = vpop.f32.mrf.mxu0
      %v4986 = vadd.f32 %v4937, %v4985
      %4987 = vmatmul.bf16.gmra.mxu0 %v4133
      %v4988 = vpop.f32.mrf.mxu0
      %v4989 = vadd.f32 %v4940, %v4988
      %v4990 = vpop.f32.mrf.mxu0
      %v4991 = vadd.f32 %v4942, %v4990
      %4992 = vmatmul.bf16.gmra.mxu0 %v4141
      %v4993 = vpop.f32.mrf.mxu0
      %v4994 = vadd.f32 %v4945, %v4993
      %v4995 = vpop.f32.mrf.mxu0
      %v4996 = vadd.f32 %v4947, %v4995
      %4997 = vdwg.mxu0
      %4998 = vmatpush.bf16.msra.mxu0 %v4590
      %4999 = vmatpush.bf16.msra.mxu0 %v4589
      %5000 = vmatpush.bf16.msra.mxu0 %v4588
      %5001 = vmatpush.bf16.msra.mxu0 %v4587
      %5002 = vmatpush.bf16.msra.mxu0 %v4586
      %5003 = vmatpush.bf16.msra.mxu0 %v4585
      %5004 = vmatpush.bf16.msra.mxu0 %v4584
      %5005 = vmatpush.bf16.msra.mxu0 %v4583
      %5006 = vmatmul.bf16.gmra.mxu0 %v4086
      %v5007 = vpop.f32.mrf.mxu0
      %v5008 = vadd.f32 %v4959, %v5007
      %v5009 = vpop.f32.mrf.mxu0
      %v5010 = vadd.f32 %v4961, %v5009
      %5011 = vmatmul.bf16.gmra.mxu0 %v4094
      %v5012 = vpop.f32.mrf.mxu0
      %v5013 = vadd.f32 %v4964, %v5012
      %v5014 = vpop.f32.mrf.mxu0
      %v5015 = vadd.f32 %v4966, %v5014
      %5016 = vmatmul.bf16.gmra.mxu0 %v4102
      %v5017 = vpop.f32.mrf.mxu0
      %v5018 = vadd.f32 %v4969, %v5017
      %v5019 = vpop.f32.mrf.mxu0
      %v5020 = vadd.f32 %v4971, %v5019
      %5021 = vmatmul.bf16.gmra.mxu0 %v4110
      %v5022 = vpop.f32.mrf.mxu0
      %v5023 = vadd.f32 %v4974, %v5022
      %v5024 = vpop.f32.mrf.mxu0
      %v5025 = vadd.f32 %v4976, %v5024
      %5026 = vmatmul.bf16.gmra.mxu0 %v4118
      %v5027 = vpop.f32.mrf.mxu0
      %v5028 = vadd.f32 %v4979, %v5027
      %v5029 = vpop.f32.mrf.mxu0
      %v5030 = vadd.f32 %v4981, %v5029
      %5031 = vmatmul.bf16.gmra.mxu0 %v4126
      %v5032 = vpop.f32.mrf.mxu0
      %v5033 = vadd.f32 %v4984, %v5032
      %v5034 = vpop.f32.mrf.mxu0
      %v5035 = vadd.f32 %v4986, %v5034
      %5036 = vmatmul.bf16.gmra.mxu0 %v4134
      %v5037 = vpop.f32.mrf.mxu0
      %v5038 = vadd.f32 %v4989, %v5037
      %v5039 = vpop.f32.mrf.mxu0
      %v5040 = vadd.f32 %v4991, %v5039
      %5041 = vmatmul.bf16.gmra.mxu0 %v4142
      %v5042 = vpop.f32.mrf.mxu0
      %v5043 = vadd.f32 %v4994, %v5042
      %v5044 = vpop.f32.mrf.mxu0
      %v5045 = vadd.f32 %v4996, %v5044
      %5046 = vdwg.mxu0
      %v5175 = vunpack.c.l.b16 %v3951
      %v5176 = vunpack.c.l.b16 %v3952
      %v5177 = vunpack.c.l.b16 %v3953
      %v5178 = vunpack.c.l.b16 %v3954
      %v5179 = vunpack.c.l.b16 %v3955
      %v5180 = vunpack.c.l.b16 %v3956
      %v5181 = vunpack.c.l.b16 %v3957
      %v5182 = vunpack.c.l.b16 %v3958
      %v5183 = vunpack.c.l.b16 %v3959
      %v5184 = vunpack.c.l.b16 %v3960
      %v5185 = vunpack.c.l.b16 %v3961
      %v5186 = vunpack.c.l.b16 %v3962
      %v5187 = vunpack.c.l.b16 %v3963
      %v5188 = vunpack.c.l.b16 %v3964
      %v5189 = vunpack.c.l.b16 %v3965
      %v5190 = vunpack.c.l.b16 %v3966
      %v5191 = vunpack.c.l.b16 %v3967
      %v5192 = vunpack.c.l.b16 %v3968
      %v5193 = vunpack.c.l.b16 %v3969
      %v5194 = vunpack.c.l.b16 %v3970
      %v5195 = vunpack.c.l.b16 %v3971
      %v5196 = vunpack.c.l.b16 %v3972
      %v5197 = vunpack.c.l.b16 %v3973
      %v5198 = vunpack.c.l.b16 %v3974
      %v5199 = vunpack.c.l.b16 %v3975
      %v5200 = vunpack.c.l.b16 %v3976
      %v5201 = vunpack.c.l.b16 %v3977
      %v5202 = vunpack.c.l.b16 %v3978
      %v5203 = vunpack.c.l.b16 %v3979
      %v5204 = vunpack.c.l.b16 %v3980
      %v5205 = vunpack.c.l.b16 %v3981
      %v5206 = vunpack.c.l.b16 %v3982
      %v5207 = vunpack.c.l.b16 %v3983
      %v5208 = vunpack.c.l.b16 %v3984
      %v5209 = vunpack.c.l.b16 %v3985
      %v5210 = vunpack.c.l.b16 %v3986
      %v5211 = vunpack.c.l.b16 %v3987
      %v5212 = vunpack.c.l.b16 %v3988
      %v5213 = vunpack.c.l.b16 %v3989
      %v5214 = vunpack.c.l.b16 %v3990
      %v5215 = vunpack.c.l.b16 %v3991
      %v5216 = vunpack.c.l.b16 %v3992
      %v5217 = vunpack.c.l.b16 %v3993
      %v5218 = vunpack.c.l.b16 %v3994
      %v5219 = vunpack.c.l.b16 %v3995
      %v5220 = vunpack.c.l.b16 %v3996
      %v5221 = vunpack.c.l.b16 %v3997
      %v5222 = vunpack.c.l.b16 %v3998
      %v5223 = vunpack.c.l.b16 %v3999
      %v5224 = vunpack.c.l.b16 %v4000
      %v5225 = vunpack.c.l.b16 %v4001
      %v5226 = vunpack.c.l.b16 %v4002
      %v5227 = vunpack.c.l.b16 %v4003
      %v5228 = vunpack.c.l.b16 %v4004
      %v5229 = vunpack.c.l.b16 %v4005
      %v5230 = vunpack.c.l.b16 %v4006
      %v5231 = vunpack.c.l.b16 %v4007
      %v5232 = vunpack.c.l.b16 %v4008
      %v5233 = vunpack.c.l.b16 %v4009
      %v5234 = vunpack.c.l.b16 %v4010
      %v5235 = vunpack.c.l.b16 %v4011
      %v5236 = vunpack.c.l.b16 %v4012
      %v5237 = vunpack.c.l.b16 %v4013
      %v5238 = vunpack.c.l.b16 %v4014
      %v5239 = vunpack.c.l.b16 %v4015
      %v5240 = vunpack.c.l.b16 %v4016
      %v5241 = vunpack.c.l.b16 %v4017
      %v5242 = vunpack.c.l.b16 %v4018
      %v5243 = vunpack.c.l.b16 %v4019
      %v5244 = vunpack.c.l.b16 %v4020
      %v5245 = vunpack.c.l.b16 %v4021
      %v5246 = vunpack.c.l.b16 %v4022
      %v5247 = vunpack.c.l.b16 %v4023
      %v5248 = vunpack.c.l.b16 %v4024
      %v5249 = vunpack.c.l.b16 %v4025
      %v5250 = vunpack.c.l.b16 %v4026
      %v5251 = vunpack.c.l.b16 %v4027
      %v5252 = vunpack.c.l.b16 %v4028
      %v5253 = vunpack.c.l.b16 %v4029
      %v5254 = vunpack.c.l.b16 %v4030
      %v5255 = vunpack.c.l.b16 %v4031
      %v5256 = vunpack.c.l.b16 %v4032
      %v5257 = vunpack.c.l.b16 %v4033
      %v5258 = vunpack.c.l.b16 %v4034
      %v5259 = vunpack.c.l.b16 %v4035
      %v5260 = vunpack.c.l.b16 %v4036
      %v5261 = vunpack.c.l.b16 %v4037
      %v5262 = vunpack.c.l.b16 %v4038
      %v5263 = vunpack.c.l.b16 %v4039
      %v5264 = vunpack.c.l.b16 %v4040
      %v5265 = vunpack.c.l.b16 %v4041
      %v5266 = vunpack.c.l.b16 %v4042
      %v5267 = vunpack.c.l.b16 %v4043
      %v5268 = vunpack.c.l.b16 %v4044
      %v5269 = vunpack.c.l.b16 %v4045
      %v5270 = vunpack.c.l.b16 %v4046
      %v5271 = vunpack.c.l.b16 %v4047
      %v5272 = vunpack.c.l.b16 %v4048
      %v5273 = vunpack.c.l.b16 %v4049
      %v5274 = vunpack.c.l.b16 %v4050
      %v5275 = vunpack.c.l.b16 %v4051
      %v5276 = vunpack.c.l.b16 %v4052
      %v5277 = vunpack.c.l.b16 %v4053
      %v5278 = vunpack.c.l.b16 %v4054
      %v5279 = vunpack.c.l.b16 %v4055
      %v5280 = vunpack.c.l.b16 %v4056
      %v5281 = vunpack.c.l.b16 %v4057
      %v5282 = vunpack.c.l.b16 %v4058
      %v5283 = vunpack.c.l.b16 %v4059
      %v5284 = vunpack.c.l.b16 %v4060
      %v5285 = vunpack.c.l.b16 %v4061
      %v5286 = vunpack.c.l.b16 %v4062
      %v5287 = vunpack.c.l.b16 %v4063
      %v5288 = vunpack.c.l.b16 %v4064
      %v5289 = vunpack.c.l.b16 %v4065
      %v5290 = vunpack.c.l.b16 %v4066
      %v5291 = vunpack.c.l.b16 %v4067
      %v5292 = vunpack.c.l.b16 %v4068
      %v5293 = vunpack.c.l.b16 %v4069
      %v5294 = vunpack.c.l.b16 %v4070
      %v5295 = vunpack.c.l.b16 %v4071
      %v5296 = vunpack.c.l.b16 %v4072
      %v5297 = vunpack.c.l.b16 %v4073
      %v5298 = vunpack.c.l.b16 %v4074
      %v5299 = vunpack.c.l.b16 %v4075
      %v5300 = vunpack.c.l.b16 %v4076
      %v5301 = vunpack.c.l.b16 %v4077
      %v5302 = vunpack.c.l.b16 %v4078
      %v5303 = vpack.c.b16 %v5176, %v5175
      %v5304 = vpack.c.b16 %v5178, %v5177
      %v5305 = vpack.c.b16 %v5180, %v5179
      %v5306 = vpack.c.b16 %v5182, %v5181
      %v5307 = vpack.c.b16 %v5184, %v5183
      %v5308 = vpack.c.b16 %v5186, %v5185
      %v5309 = vpack.c.b16 %v5188, %v5187
      %v5310 = vpack.c.b16 %v5190, %v5189
      %v5311 = vpack.c.b16 %v5192, %v5191
      %v5312 = vpack.c.b16 %v5194, %v5193
      %v5313 = vpack.c.b16 %v5196, %v5195
      %v5314 = vpack.c.b16 %v5198, %v5197
      %v5315 = vpack.c.b16 %v5200, %v5199
      %v5316 = vpack.c.b16 %v5202, %v5201
      %v5317 = vpack.c.b16 %v5204, %v5203
      %v5318 = vpack.c.b16 %v5206, %v5205
      %v5319 = vpack.c.b16 %v5208, %v5207
      %v5320 = vpack.c.b16 %v5210, %v5209
      %v5321 = vpack.c.b16 %v5212, %v5211
      %v5322 = vpack.c.b16 %v5214, %v5213
      %v5323 = vpack.c.b16 %v5216, %v5215
      %v5324 = vpack.c.b16 %v5218, %v5217
      %v5325 = vpack.c.b16 %v5220, %v5219
      %v5326 = vpack.c.b16 %v5222, %v5221
      %v5327 = vpack.c.b16 %v5224, %v5223
      %v5328 = vpack.c.b16 %v5226, %v5225
      %v5329 = vpack.c.b16 %v5228, %v5227
      %v5330 = vpack.c.b16 %v5230, %v5229
      %v5331 = vpack.c.b16 %v5232, %v5231
      %v5332 = vpack.c.b16 %v5234, %v5233
      %v5333 = vpack.c.b16 %v5236, %v5235
      %v5334 = vpack.c.b16 %v5238, %v5237
      %v5335 = vpack.c.b16 %v5240, %v5239
      %v5336 = vpack.c.b16 %v5242, %v5241
      %v5337 = vpack.c.b16 %v5244, %v5243
      %v5338 = vpack.c.b16 %v5246, %v5245
      %v5339 = vpack.c.b16 %v5248, %v5247
      %v5340 = vpack.c.b16 %v5250, %v5249
      %v5341 = vpack.c.b16 %v5252, %v5251
      %v5342 = vpack.c.b16 %v5254, %v5253
      %v5343 = vpack.c.b16 %v5256, %v5255
      %v5344 = vpack.c.b16 %v5258, %v5257
      %v5345 = vpack.c.b16 %v5260, %v5259
      %v5346 = vpack.c.b16 %v5262, %v5261
      %v5347 = vpack.c.b16 %v5264, %v5263
      %v5348 = vpack.c.b16 %v5266, %v5265
      %v5349 = vpack.c.b16 %v5268, %v5267
      %v5350 = vpack.c.b16 %v5270, %v5269
      %v5351 = vpack.c.b16 %v5272, %v5271
      %v5352 = vpack.c.b16 %v5274, %v5273
      %v5353 = vpack.c.b16 %v5276, %v5275
      %v5354 = vpack.c.b16 %v5278, %v5277
      %v5355 = vpack.c.b16 %v5280, %v5279
      %v5356 = vpack.c.b16 %v5282, %v5281
      %v5357 = vpack.c.b16 %v5284, %v5283
      %v5358 = vpack.c.b16 %v5286, %v5285
      %v5359 = vpack.c.b16 %v5288, %v5287
      %v5360 = vpack.c.b16 %v5290, %v5289
      %v5361 = vpack.c.b16 %v5292, %v5291
      %v5362 = vpack.c.b16 %v5294, %v5293
      %v5363 = vpack.c.b16 %v5296, %v5295
      %v5364 = vpack.c.b16 %v5298, %v5297
      %v5365 = vpack.c.b16 %v5300, %v5299
      %v5366 = vpack.c.b16 %v5302, %v5301
      %5431 = vmatpush.bf16.msra.mxu0 %v5310
      %5432 = vmatpush.bf16.msra.mxu0 %v5309
      %5433 = vmatpush.bf16.msra.mxu0 %v5308
      %5434 = vmatpush.bf16.msra.mxu0 %v5307
      %5435 = vmatpush.bf16.msra.mxu0 %v5306
      %5436 = vmatpush.bf16.msra.mxu0 %v5305
      %5437 = vmatpush.bf16.msra.mxu0 %v5304
      %5438 = vmatpush.bf16.msra.mxu0 %v5303
      %5439 = vmatmul.bf16.gmra.mxu0 %v3887
      %v5440 = vpop.f32.mrf.mxu0
      %v5441 = vadd.f32 %v5008, %v5440
      %v5442 = vpop.f32.mrf.mxu0
      %v5443 = vadd.f32 %v5010, %v5442
      %5444 = vmatmul.bf16.gmra.mxu0 %v3895
      %v5445 = vpop.f32.mrf.mxu0
      %v5446 = vadd.f32 %v5013, %v5445
      %v5447 = vpop.f32.mrf.mxu0
      %v5448 = vadd.f32 %v5015, %v5447
      %5449 = vmatmul.bf16.gmra.mxu0 %v3903
      %v5450 = vpop.f32.mrf.mxu0
      %v5451 = vadd.f32 %v5018, %v5450
      %v5452 = vpop.f32.mrf.mxu0
      %v5453 = vadd.f32 %v5020, %v5452
      %5454 = vmatmul.bf16.gmra.mxu0 %v3911
      %v5455 = vpop.f32.mrf.mxu0
      %v5456 = vadd.f32 %v5023, %v5455
      %v5457 = vpop.f32.mrf.mxu0
      %v5458 = vadd.f32 %v5025, %v5457
      %5459 = vmatmul.bf16.gmra.mxu0 %v3919
      %v5460 = vpop.f32.mrf.mxu0
      %v5461 = vadd.f32 %v5028, %v5460
      %v5462 = vpop.f32.mrf.mxu0
      %v5463 = vadd.f32 %v5030, %v5462
      %5464 = vmatmul.bf16.gmra.mxu0 %v3927
      %v5465 = vpop.f32.mrf.mxu0
      %v5466 = vadd.f32 %v5033, %v5465
      %v5467 = vpop.f32.mrf.mxu0
      %v5468 = vadd.f32 %v5035, %v5467
      %5469 = vmatmul.bf16.gmra.mxu0 %v3935
      %v5470 = vpop.f32.mrf.mxu0
      %v5471 = vadd.f32 %v5038, %v5470
      %v5472 = vpop.f32.mrf.mxu0
      %v5473 = vadd.f32 %v5040, %v5472
      %5474 = vmatmul.bf16.gmra.mxu0 %v3943
      %v5475 = vpop.f32.mrf.mxu0
      %v5476 = vadd.f32 %v5043, %v5475
      %v5477 = vpop.f32.mrf.mxu0
      %v5478 = vadd.f32 %v5045, %v5477
      %5479 = vdwg.mxu0
      %5480 = vmatpush.bf16.msra.mxu0 %v5318
      %5481 = vmatpush.bf16.msra.mxu0 %v5317
      %5482 = vmatpush.bf16.msra.mxu0 %v5316
      %5483 = vmatpush.bf16.msra.mxu0 %v5315
      %5484 = vmatpush.bf16.msra.mxu0 %v5314
      %5485 = vmatpush.bf16.msra.mxu0 %v5313
      %5486 = vmatpush.bf16.msra.mxu0 %v5312
      %5487 = vmatpush.bf16.msra.mxu0 %v5311
      %5488 = vmatmul.bf16.gmra.mxu0 %v3888
      %v5489 = vpop.f32.mrf.mxu0
      %v5490 = vadd.f32 %v5441, %v5489
      %v5491 = vpop.f32.mrf.mxu0
      %v5492 = vadd.f32 %v5443, %v5491
      %5493 = vmatmul.bf16.gmra.mxu0 %v3896
      %v5494 = vpop.f32.mrf.mxu0
      %v5495 = vadd.f32 %v5446, %v5494
      %v5496 = vpop.f32.mrf.mxu0
      %v5497 = vadd.f32 %v5448, %v5496
      %5498 = vmatmul.bf16.gmra.mxu0 %v3904
      %v5499 = vpop.f32.mrf.mxu0
      %v5500 = vadd.f32 %v5451, %v5499
      %v5501 = vpop.f32.mrf.mxu0
      %v5502 = vadd.f32 %v5453, %v5501
      %5503 = vmatmul.bf16.gmra.mxu0 %v3912
      %v5504 = vpop.f32.mrf.mxu0
      %v5505 = vadd.f32 %v5456, %v5504
      %v5506 = vpop.f32.mrf.mxu0
      %v5507 = vadd.f32 %v5458, %v5506
      %5508 = vmatmul.bf16.gmra.mxu0 %v3920
      %v5509 = vpop.f32.mrf.mxu0
      %v5510 = vadd.f32 %v5461, %v5509
      %v5511 = vpop.f32.mrf.mxu0
      %v5512 = vadd.f32 %v5463, %v5511
      %5513 = vmatmul.bf16.gmra.mxu0 %v3928
      %v5514 = vpop.f32.mrf.mxu0
      %v5515 = vadd.f32 %v5466, %v5514
      %v5516 = vpop.f32.mrf.mxu0
      %v5517 = vadd.f32 %v5468, %v5516
      %5518 = vmatmul.bf16.gmra.mxu0 %v3936
      %v5519 = vpop.f32.mrf.mxu0
      %v5520 = vadd.f32 %v5471, %v5519
      %v5521 = vpop.f32.mrf.mxu0
      %v5522 = vadd.f32 %v5473, %v5521
      %5523 = vmatmul.bf16.gmra.mxu0 %v3944
      %v5524 = vpop.f32.mrf.mxu0
      %v5525 = vadd.f32 %v5476, %v5524
      %v5526 = vpop.f32.mrf.mxu0
      %v5527 = vadd.f32 %v5478, %v5526
      %5528 = vdwg.mxu0
      %5529 = vmatpush.bf16.msra.mxu0 %v5326
      %5530 = vmatpush.bf16.msra.mxu0 %v5325
      %5531 = vmatpush.bf16.msra.mxu0 %v5324
      %5532 = vmatpush.bf16.msra.mxu0 %v5323
      %5533 = vmatpush.bf16.msra.mxu0 %v5322
      %5534 = vmatpush.bf16.msra.mxu0 %v5321
      %5535 = vmatpush.bf16.msra.mxu0 %v5320
      %5536 = vmatpush.bf16.msra.mxu0 %v5319
      %5537 = vmatmul.bf16.gmra.mxu0 %v3889
      %v5538 = vpop.f32.mrf.mxu0
      %v5539 = vadd.f32 %v5490, %v5538
      %v5540 = vpop.f32.mrf.mxu0
      %v5541 = vadd.f32 %v5492, %v5540
      %5542 = vmatmul.bf16.gmra.mxu0 %v3897
      %v5543 = vpop.f32.mrf.mxu0
      %v5544 = vadd.f32 %v5495, %v5543
      %v5545 = vpop.f32.mrf.mxu0
      %v5546 = vadd.f32 %v5497, %v5545
      %5547 = vmatmul.bf16.gmra.mxu0 %v3905
      %v5548 = vpop.f32.mrf.mxu0
      %v5549 = vadd.f32 %v5500, %v5548
      %v5550 = vpop.f32.mrf.mxu0
      %v5551 = vadd.f32 %v5502, %v5550
      %5552 = vmatmul.bf16.gmra.mxu0 %v3913
      %v5553 = vpop.f32.mrf.mxu0
      %v5554 = vadd.f32 %v5505, %v5553
      %v5555 = vpop.f32.mrf.mxu0
      %v5556 = vadd.f32 %v5507, %v5555
      %5557 = vmatmul.bf16.gmra.mxu0 %v3921
      %v5558 = vpop.f32.mrf.mxu0
      %v5559 = vadd.f32 %v5510, %v5558
      %v5560 = vpop.f32.mrf.mxu0
      %v5561 = vadd.f32 %v5512, %v5560
      %5562 = vmatmul.bf16.gmra.mxu0 %v3929
      %v5563 = vpop.f32.mrf.mxu0
      %v5564 = vadd.f32 %v5515, %v5563
      %v5565 = vpop.f32.mrf.mxu0
      %v5566 = vadd.f32 %v5517, %v5565
      %5567 = vmatmul.bf16.gmra.mxu0 %v3937
      %v5568 = vpop.f32.mrf.mxu0
      %v5569 = vadd.f32 %v5520, %v5568
      %v5570 = vpop.f32.mrf.mxu0
      %v5571 = vadd.f32 %v5522, %v5570
      %5572 = vmatmul.bf16.gmra.mxu0 %v3945
      %v5573 = vpop.f32.mrf.mxu0
      %v5574 = vadd.f32 %v5525, %v5573
      %v5575 = vpop.f32.mrf.mxu0
      %v5576 = vadd.f32 %v5527, %v5575
      %5577 = vdwg.mxu0
      %5578 = vmatpush.bf16.msra.mxu0 %v5334
      %5579 = vmatpush.bf16.msra.mxu0 %v5333
      %5580 = vmatpush.bf16.msra.mxu0 %v5332
      %5581 = vmatpush.bf16.msra.mxu0 %v5331
      %5582 = vmatpush.bf16.msra.mxu0 %v5330
      %5583 = vmatpush.bf16.msra.mxu0 %v5329
      %5584 = vmatpush.bf16.msra.mxu0 %v5328
      %5585 = vmatpush.bf16.msra.mxu0 %v5327
      %5586 = vmatmul.bf16.gmra.mxu0 %v3890
      %v5587 = vpop.f32.mrf.mxu0
      %v5588 = vadd.f32 %v5539, %v5587
      %v5589 = vpop.f32.mrf.mxu0
      %v5590 = vadd.f32 %v5541, %v5589
      %5591 = vmatmul.bf16.gmra.mxu0 %v3898
      %v5592 = vpop.f32.mrf.mxu0
      %v5593 = vadd.f32 %v5544, %v5592
      %v5594 = vpop.f32.mrf.mxu0
      %v5595 = vadd.f32 %v5546, %v5594
      %5596 = vmatmul.bf16.gmra.mxu0 %v3906
      %v5597 = vpop.f32.mrf.mxu0
      %v5598 = vadd.f32 %v5549, %v5597
      %v5599 = vpop.f32.mrf.mxu0
      %v5600 = vadd.f32 %v5551, %v5599
      %5601 = vmatmul.bf16.gmra.mxu0 %v3914
      %v5602 = vpop.f32.mrf.mxu0
      %v5603 = vadd.f32 %v5554, %v5602
      %v5604 = vpop.f32.mrf.mxu0
      %v5605 = vadd.f32 %v5556, %v5604
      %5606 = vmatmul.bf16.gmra.mxu0 %v3922
      %v5607 = vpop.f32.mrf.mxu0
      %v5608 = vadd.f32 %v5559, %v5607
      %v5609 = vpop.f32.mrf.mxu0
      %v5610 = vadd.f32 %v5561, %v5609
      %5611 = vmatmul.bf16.gmra.mxu0 %v3930
      %v5612 = vpop.f32.mrf.mxu0
      %v5613 = vadd.f32 %v5564, %v5612
      %v5614 = vpop.f32.mrf.mxu0
      %v5615 = vadd.f32 %v5566, %v5614
      %5616 = vmatmul.bf16.gmra.mxu0 %v3938
      %v5617 = vpop.f32.mrf.mxu0
      %v5618 = vadd.f32 %v5569, %v5617
      %v5619 = vpop.f32.mrf.mxu0
      %v5620 = vadd.f32 %v5571, %v5619
      %5621 = vmatmul.bf16.gmra.mxu0 %v3946
      %v5622 = vpop.f32.mrf.mxu0
      %v5623 = vadd.f32 %v5574, %v5622
      %v5624 = vpop.f32.mrf.mxu0
      %v5625 = vadd.f32 %v5576, %v5624
      %5626 = vdwg.mxu0
      %5627 = vmatpush.bf16.msra.mxu0 %v5342
      %5628 = vmatpush.bf16.msra.mxu0 %v5341
      %5629 = vmatpush.bf16.msra.mxu0 %v5340
      %5630 = vmatpush.bf16.msra.mxu0 %v5339
      %5631 = vmatpush.bf16.msra.mxu0 %v5338
      %5632 = vmatpush.bf16.msra.mxu0 %v5337
      %5633 = vmatpush.bf16.msra.mxu0 %v5336
      %5634 = vmatpush.bf16.msra.mxu0 %v5335
      %5635 = vmatmul.bf16.gmra.mxu0 %v3891
      %v5636 = vpop.f32.mrf.mxu0
      %v5637 = vadd.f32 %v5588, %v5636
      %v5638 = vpop.f32.mrf.mxu0
      %v5639 = vadd.f32 %v5590, %v5638
      %5640 = vmatmul.bf16.gmra.mxu0 %v3899
      %v5641 = vpop.f32.mrf.mxu0
      %v5642 = vadd.f32 %v5593, %v5641
      %v5643 = vpop.f32.mrf.mxu0
      %v5644 = vadd.f32 %v5595, %v5643
      %5645 = vmatmul.bf16.gmra.mxu0 %v3907
      %v5646 = vpop.f32.mrf.mxu0
      %v5647 = vadd.f32 %v5598, %v5646
      %v5648 = vpop.f32.mrf.mxu0
      %v5649 = vadd.f32 %v5600, %v5648
      %5650 = vmatmul.bf16.gmra.mxu0 %v3915
      %v5651 = vpop.f32.mrf.mxu0
      %v5652 = vadd.f32 %v5603, %v5651
      %v5653 = vpop.f32.mrf.mxu0
      %v5654 = vadd.f32 %v5605, %v5653
      %5655 = vmatmul.bf16.gmra.mxu0 %v3923
      %v5656 = vpop.f32.mrf.mxu0
      %v5657 = vadd.f32 %v5608, %v5656
      %v5658 = vpop.f32.mrf.mxu0
      %v5659 = vadd.f32 %v5610, %v5658
      %5660 = vmatmul.bf16.gmra.mxu0 %v3931
      %v5661 = vpop.f32.mrf.mxu0
      %v5662 = vadd.f32 %v5613, %v5661
      %v5663 = vpop.f32.mrf.mxu0
      %v5664 = vadd.f32 %v5615, %v5663
      %5665 = vmatmul.bf16.gmra.mxu0 %v3939
      %v5666 = vpop.f32.mrf.mxu0
      %v5667 = vadd.f32 %v5618, %v5666
      %v5668 = vpop.f32.mrf.mxu0
      %v5669 = vadd.f32 %v5620, %v5668
      %5670 = vmatmul.bf16.gmra.mxu0 %v3947
      %v5671 = vpop.f32.mrf.mxu0
      %v5672 = vadd.f32 %v5623, %v5671
      %v5673 = vpop.f32.mrf.mxu0
      %v5674 = vadd.f32 %v5625, %v5673
      %5675 = vdwg.mxu0
      %5676 = vmatpush.bf16.msra.mxu0 %v5350
      %5677 = vmatpush.bf16.msra.mxu0 %v5349
      %5678 = vmatpush.bf16.msra.mxu0 %v5348
      %5679 = vmatpush.bf16.msra.mxu0 %v5347
      %5680 = vmatpush.bf16.msra.mxu0 %v5346
      %5681 = vmatpush.bf16.msra.mxu0 %v5345
      %5682 = vmatpush.bf16.msra.mxu0 %v5344
      %5683 = vmatpush.bf16.msra.mxu0 %v5343
      %5684 = vmatmul.bf16.gmra.mxu0 %v3892
      %v5685 = vpop.f32.mrf.mxu0
      %v5686 = vadd.f32 %v5637, %v5685
      %v5687 = vpop.f32.mrf.mxu0
      %v5688 = vadd.f32 %v5639, %v5687
      %5689 = vmatmul.bf16.gmra.mxu0 %v3900
      %v5690 = vpop.f32.mrf.mxu0
      %v5691 = vadd.f32 %v5642, %v5690
      %v5692 = vpop.f32.mrf.mxu0
      %v5693 = vadd.f32 %v5644, %v5692
      %5694 = vmatmul.bf16.gmra.mxu0 %v3908
      %v5695 = vpop.f32.mrf.mxu0
      %v5696 = vadd.f32 %v5647, %v5695
      %v5697 = vpop.f32.mrf.mxu0
      %v5698 = vadd.f32 %v5649, %v5697
      %5699 = vmatmul.bf16.gmra.mxu0 %v3916
      %v5700 = vpop.f32.mrf.mxu0
      %v5701 = vadd.f32 %v5652, %v5700
      %v5702 = vpop.f32.mrf.mxu0
      %v5703 = vadd.f32 %v5654, %v5702
      %5704 = vmatmul.bf16.gmra.mxu0 %v3924
      %v5705 = vpop.f32.mrf.mxu0
      %v5706 = vadd.f32 %v5657, %v5705
      %v5707 = vpop.f32.mrf.mxu0
      %v5708 = vadd.f32 %v5659, %v5707
      %5709 = vmatmul.bf16.gmra.mxu0 %v3932
      %v5710 = vpop.f32.mrf.mxu0
      %v5711 = vadd.f32 %v5662, %v5710
      %v5712 = vpop.f32.mrf.mxu0
      %v5713 = vadd.f32 %v5664, %v5712
      %5714 = vmatmul.bf16.gmra.mxu0 %v3940
      %v5715 = vpop.f32.mrf.mxu0
      %v5716 = vadd.f32 %v5667, %v5715
      %v5717 = vpop.f32.mrf.mxu0
      %v5718 = vadd.f32 %v5669, %v5717
      %5719 = vmatmul.bf16.gmra.mxu0 %v3948
      %v5720 = vpop.f32.mrf.mxu0
      %v5721 = vadd.f32 %v5672, %v5720
      %v5722 = vpop.f32.mrf.mxu0
      %v5723 = vadd.f32 %v5674, %v5722
      %5724 = vdwg.mxu0
      %5725 = vmatpush.bf16.msra.mxu0 %v5358
      %5726 = vmatpush.bf16.msra.mxu0 %v5357
      %5727 = vmatpush.bf16.msra.mxu0 %v5356
      %5728 = vmatpush.bf16.msra.mxu0 %v5355
      %5729 = vmatpush.bf16.msra.mxu0 %v5354
      %5730 = vmatpush.bf16.msra.mxu0 %v5353
      %5731 = vmatpush.bf16.msra.mxu0 %v5352
      %5732 = vmatpush.bf16.msra.mxu0 %v5351
      %5733 = vmatmul.bf16.gmra.mxu0 %v3893
      %v5734 = vpop.f32.mrf.mxu0
      %v5735 = vadd.f32 %v5686, %v5734
      %v5736 = vpop.f32.mrf.mxu0
      %v5737 = vadd.f32 %v5688, %v5736
      %5738 = vmatmul.bf16.gmra.mxu0 %v3901
      %v5739 = vpop.f32.mrf.mxu0
      %v5740 = vadd.f32 %v5691, %v5739
      %v5741 = vpop.f32.mrf.mxu0
      %v5742 = vadd.f32 %v5693, %v5741
      %5743 = vmatmul.bf16.gmra.mxu0 %v3909
      %v5744 = vpop.f32.mrf.mxu0
      %v5745 = vadd.f32 %v5696, %v5744
      %v5746 = vpop.f32.mrf.mxu0
      %v5747 = vadd.f32 %v5698, %v5746
      %5748 = vmatmul.bf16.gmra.mxu0 %v3917
      %v5749 = vpop.f32.mrf.mxu0
      %v5750 = vadd.f32 %v5701, %v5749
      %v5751 = vpop.f32.mrf.mxu0
      %v5752 = vadd.f32 %v5703, %v5751
      %5753 = vmatmul.bf16.gmra.mxu0 %v3925
      %v5754 = vpop.f32.mrf.mxu0
      %v5755 = vadd.f32 %v5706, %v5754
      %v5756 = vpop.f32.mrf.mxu0
      %v5757 = vadd.f32 %v5708, %v5756
      %5758 = vmatmul.bf16.gmra.mxu0 %v3933
      %v5759 = vpop.f32.mrf.mxu0
      %v5760 = vadd.f32 %v5711, %v5759
      %v5761 = vpop.f32.mrf.mxu0
      %v5762 = vadd.f32 %v5713, %v5761
      %5763 = vmatmul.bf16.gmra.mxu0 %v3941
      %v5764 = vpop.f32.mrf.mxu0
      %v5765 = vadd.f32 %v5716, %v5764
      %v5766 = vpop.f32.mrf.mxu0
      %v5767 = vadd.f32 %v5718, %v5766
      %5768 = vmatmul.bf16.gmra.mxu0 %v3949
      %v5769 = vpop.f32.mrf.mxu0
      %v5770 = vadd.f32 %v5721, %v5769
      %v5771 = vpop.f32.mrf.mxu0
      %v5772 = vadd.f32 %v5723, %v5771
      %5773 = vdwg.mxu0
      %5774 = vmatpush.bf16.msra.mxu0 %v5366
      %5775 = vmatpush.bf16.msra.mxu0 %v5365
      %5776 = vmatpush.bf16.msra.mxu0 %v5364
      %5777 = vmatpush.bf16.msra.mxu0 %v5363
      %5778 = vmatpush.bf16.msra.mxu0 %v5362
      %5779 = vmatpush.bf16.msra.mxu0 %v5361
      %5780 = vmatpush.bf16.msra.mxu0 %v5360
      %5781 = vmatpush.bf16.msra.mxu0 %v5359
      %5782 = vmatmul.bf16.gmra.mxu0 %v3894
      %v5783 = vpop.f32.mrf.mxu0
      %v5784 = vadd.f32 %v5735, %v5783
      %v5785 = vpop.f32.mrf.mxu0
      %v5786 = vadd.f32 %v5737, %v5785
      %5787 = vmatmul.bf16.gmra.mxu0 %v3902
      %v5788 = vpop.f32.mrf.mxu0
      %v5789 = vadd.f32 %v5740, %v5788
      %v5790 = vpop.f32.mrf.mxu0
      %v5791 = vadd.f32 %v5742, %v5790
      %5792 = vmatmul.bf16.gmra.mxu0 %v3910
      %v5793 = vpop.f32.mrf.mxu0
      %v5794 = vadd.f32 %v5745, %v5793
      %v5795 = vpop.f32.mrf.mxu0
      %v5796 = vadd.f32 %v5747, %v5795
      %5797 = vmatmul.bf16.gmra.mxu0 %v3918
      %v5798 = vpop.f32.mrf.mxu0
      %v5799 = vadd.f32 %v5750, %v5798
      %v5800 = vpop.f32.mrf.mxu0
      %v5801 = vadd.f32 %v5752, %v5800
      %5802 = vmatmul.bf16.gmra.mxu0 %v3926
      %v5803 = vpop.f32.mrf.mxu0
      %v5804 = vadd.f32 %v5755, %v5803
      %v5805 = vpop.f32.mrf.mxu0
      %v5806 = vadd.f32 %v5757, %v5805
      %5807 = vmatmul.bf16.gmra.mxu0 %v3934
      %v5808 = vpop.f32.mrf.mxu0
      %v5809 = vadd.f32 %v5760, %v5808
      %v5810 = vpop.f32.mrf.mxu0
      %v5811 = vadd.f32 %v5762, %v5810
      %5812 = vmatmul.bf16.gmra.mxu0 %v3942
      %v5813 = vpop.f32.mrf.mxu0
      %v5814 = vadd.f32 %v5765, %v5813
      %v5815 = vpop.f32.mrf.mxu0
      %v5816 = vadd.f32 %v5767, %v5815
      %5817 = vmatmul.bf16.gmra.mxu0 %v3950
      %v5818 = vpop.f32.mrf.mxu0
      %v5819 = vadd.f32 %v5770, %v5818
      %v5820 = vpop.f32.mrf.mxu0
      %v5821 = vadd.f32 %v5772, %v5820
      %5822 = vdwg.mxu0
      %v5823 = vld [vmem:[%s6] sm:$0x1]
      %v5825 = vperm.slane %v5823, 0
      %v5827 = vadd.f32 %v5784, %v5825
      %v5828 = vadd.f32 %v5786, %v5825
      %v5829 = vadd.f32 %v5789, %v5825
      %v5830 = vadd.f32 %v5791, %v5825
      %v5831 = vadd.f32 %v5794, %v5825
      %v5832 = vadd.f32 %v5796, %v5825
      %v5833 = vadd.f32 %v5799, %v5825
      %v5834 = vadd.f32 %v5801, %v5825
      %v5835 = vadd.f32 %v5804, %v5825
      %v5836 = vadd.f32 %v5806, %v5825
      %v5837 = vadd.f32 %v5809, %v5825
      %v5838 = vadd.f32 %v5811, %v5825
      %v5839 = vadd.f32 %v5814, %v5825
      %v5840 = vadd.f32 %v5816, %v5825
      %v5841 = vadd.f32 %v5819, %v5825
      %v5842 = vadd.f32 %v5821, %v5825
      %v5843 = vmax.f32 %v5827, 0.0
      %v5844 = vmax.f32 %v5828, 0.0
      %v5845 = vmax.f32 %v5829, 0.0
      %v5846 = vmax.f32 %v5830, 0.0
      %v5847 = vmax.f32 %v5831, 0.0
      %v5848 = vmax.f32 %v5832, 0.0
      %v5849 = vmax.f32 %v5833, 0.0
      %v5850 = vmax.f32 %v5834, 0.0
      %v5851 = vmax.f32 %v5835, 0.0
      %v5852 = vmax.f32 %v5836, 0.0
      %v5853 = vmax.f32 %v5837, 0.0
      %v5854 = vmax.f32 %v5838, 0.0
      %v5855 = vmax.f32 %v5839, 0.0
      %v5856 = vmax.f32 %v5840, 0.0
      %v5857 = vmax.f32 %v5841, 0.0
      %v5858 = vmax.f32 %v5842, 0.0
      %v5859 = vpack.c.bf16 %v5844, %v5843
      %v5860 = vpack.c.bf16 %v5846, %v5845
      %v5861 = vpack.c.bf16 %v5848, %v5847
      %v5862 = vpack.c.bf16 %v5850, %v5849
      %v5863 = vpack.c.bf16 %v5852, %v5851
      %v5864 = vpack.c.bf16 %v5854, %v5853
      %v5865 = vpack.c.bf16 %v5856, %v5855
      %v5866 = vpack.c.bf16 %v5858, %v5857
      %v5867 = vld [vmem:[%s7] sm:$0xf]
      %v5868 = vld [vmem:[%s7 + $0x4] sm:$0xf]
      %v5869 = vld [vmem:[%s7 + $0x8] sm:$0xf]
      %v5870 = vld [vmem:[%s7 + $0xc] sm:$0xf]
      %v5871 = vld [vmem:[%s7 + $0x10] sm:$0xf]
      %v5872 = vld [vmem:[%s7 + $0x14] sm:$0xf]
      %v5873 = vld [vmem:[%s7 + $0x18] sm:$0xf]
      %v5874 = vld [vmem:[%s7 + $0x1c] sm:$0xf]
      %v5875 = vld [vmem:[%s8] sm:$0x1]
      %v5877 = vperm.slane %v5875, 0
      %v5887 = vunpack.c.l.b16 %v5867
      %v5888 = vunpack.c.l.b16 %v5868
      %v5889 = vunpack.c.l.b16 %v5869
      %v5890 = vunpack.c.l.b16 %v5870
      %v5891 = vunpack.c.l.b16 %v5871
      %v5892 = vunpack.c.l.b16 %v5872
      %v5893 = vunpack.c.l.b16 %v5873
      %v5894 = vunpack.c.l.b16 %v5874
      %v5895 = vpack.c.b16 %v5888, %v5887
      %v5896 = vpack.c.b16 %v5890, %v5889
      %v5897 = vpack.c.b16 %v5892, %v5891
      %v5898 = vpack.c.b16 %v5894, %v5893
      %vm5903 = vcmask 523264
      %v5905 = vsel %vm5903, %v5859, 0
      %v5908 = vsel %vm5903, %v5860, 0
      %v5911 = vsel %vm5903, %v5861, 0
      %v5914 = vsel %vm5903, %v5862, 0
      %v5917 = vsel %vm5903, %v5863, 0
      %v5920 = vsel %vm5903, %v5864, 0
      %v5923 = vsel %vm5903, %v5865, 0
      %v5926 = vsel %vm5903, %v5866, 0
      %5928 = vmatpush.bf16.msra.mxu0 0
      %5929 = vmatpush.bf16.msra.mxu0 0
      %5930 = vmatpush.bf16.msra.mxu0 0
      %5931 = vmatpush.bf16.msra.mxu0 0
      %5932 = vmatpush.bf16.msra.mxu0 %v5898
      %5933 = vmatpush.bf16.msra.mxu0 %v5897
      %5934 = vmatpush.bf16.msra.mxu0 %v5896
      %5935 = vmatpush.bf16.msra.mxu0 %v5895
      %5936 = vmatmul.bf16.gmra.mxu0 %v5905
      %v5937 = vpop.f32.mrf.mxu0
      %v5938 = vadd.f32 %v5877, %v5937
      %v5939 = vpop.f32.mrf.mxu0
      %v5940 = vadd.f32 %v5877, %v5939
      %5941 = vmatmul.bf16.gmra.mxu0 %v5908
      %v5942 = vpop.f32.mrf.mxu0
      %v5943 = vadd.f32 %v5877, %v5942
      %v5944 = vpop.f32.mrf.mxu0
      %v5945 = vadd.f32 %v5877, %v5944
      %5946 = vmatmul.bf16.gmra.mxu0 %v5911
      %v5947 = vpop.f32.mrf.mxu0
      %v5948 = vadd.f32 %v5877, %v5947
      %v5949 = vpop.f32.mrf.mxu0
      %v5950 = vadd.f32 %v5877, %v5949
      %5951 = vmatmul.bf16.gmra.mxu0 %v5914
      %v5952 = vpop.f32.mrf.mxu0
      %v5953 = vadd.f32 %v5877, %v5952
      %v5954 = vpop.f32.mrf.mxu0
      %v5955 = vadd.f32 %v5877, %v5954
      %5956 = vmatmul.bf16.gmra.mxu0 %v5917
      %v5957 = vpop.f32.mrf.mxu0
      %v5958 = vadd.f32 %v5877, %v5957
      %v5959 = vpop.f32.mrf.mxu0
      %v5960 = vadd.f32 %v5877, %v5959
      %5961 = vmatmul.bf16.gmra.mxu0 %v5920
      %v5962 = vpop.f32.mrf.mxu0
      %v5963 = vadd.f32 %v5877, %v5962
      %v5964 = vpop.f32.mrf.mxu0
      %v5965 = vadd.f32 %v5877, %v5964
      %5966 = vmatmul.bf16.gmra.mxu0 %v5923
      %v5967 = vpop.f32.mrf.mxu0
      %v5968 = vadd.f32 %v5877, %v5967
      %v5969 = vpop.f32.mrf.mxu0
      %v5970 = vadd.f32 %v5877, %v5969
      %5971 = vmatmul.bf16.gmra.mxu0 %v5926
      %v5972 = vpop.f32.mrf.mxu0
      %v5973 = vadd.f32 %v5877, %v5972
      %v5974 = vpop.f32.mrf.mxu0
      %v5975 = vadd.f32 %v5877, %v5974
      %5976 = vdwg.mxu0
      %v5977 = vmax.f32 %v5938, 0.0
      %v5978 = vmax.f32 %v5940, 0.0
      %v5979 = vmax.f32 %v5943, 0.0
      %v5980 = vmax.f32 %v5945, 0.0
      %v5981 = vmax.f32 %v5948, 0.0
      %v5982 = vmax.f32 %v5950, 0.0
      %v5983 = vmax.f32 %v5953, 0.0
      %v5984 = vmax.f32 %v5955, 0.0
      %v5985 = vmax.f32 %v5958, 0.0
      %v5986 = vmax.f32 %v5960, 0.0
      %v5987 = vmax.f32 %v5963, 0.0
      %v5988 = vmax.f32 %v5965, 0.0
      %v5989 = vmax.f32 %v5968, 0.0
      %v5990 = vmax.f32 %v5970, 0.0
      %v5991 = vmax.f32 %v5973, 0.0
      %v5992 = vmax.f32 %v5975, 0.0
      %v5993 = vld [vmem:[%s9] sm:$0x1]
      %v5995 = vperm.slane %v5993, 0
      %v5997 = vmul.f32 %v5977, %v5995
      %v5998 = vmul.f32 %v5978, %v5995
      %v5999 = vmul.f32 %v5979, %v5995
      %v6000 = vmul.f32 %v5980, %v5995
      %v6001 = vmul.f32 %v5981, %v5995
      %v6002 = vmul.f32 %v5982, %v5995
      %v6003 = vmul.f32 %v5983, %v5995
      %v6004 = vmul.f32 %v5984, %v5995
      %v6005 = vmul.f32 %v5985, %v5995
      %v6006 = vmul.f32 %v5986, %v5995
      %v6007 = vmul.f32 %v5987, %v5995
      %v6008 = vmul.f32 %v5988, %v5995
      %v6009 = vmul.f32 %v5989, %v5995
      %v6010 = vmul.f32 %v5990, %v5995
      %v6011 = vmul.f32 %v5991, %v5995
      %v6012 = vmul.f32 %v5992, %v5995
      %vm6013 = vcmask 261120
      %v6014 = vsel %vm6013, %v5997, 0.0
      %6015 = vadd.xlane.f32.xlu0 %v6014
      %v6016 = vpop.xlane.xlu0 %6015
      %v6017 = vsel %vm6013, %v5998, 0.0
      %6018 = vadd.xlane.f32.xlu0 %v6017
      %v6019 = vpop.xlane.xlu0 %6018
      %v6020 = vsel %vm6013, %v5999, 0.0
      %6021 = vadd.xlane.f32.xlu0 %v6020
      %v6022 = vpop.xlane.xlu0 %6021
      %v6023 = vsel %vm6013, %v6000, 0.0
      %6024 = vadd.xlane.f32.xlu0 %v6023
      %v6025 = vpop.xlane.xlu0 %6024
      %v6026 = vsel %vm6013, %v6001, 0.0
      %6027 = vadd.xlane.f32.xlu0 %v6026
      %v6028 = vpop.xlane.xlu0 %6027
      %v6029 = vsel %vm6013, %v6002, 0.0
      %6030 = vadd.xlane.f32.xlu0 %v6029
      %v6031 = vpop.xlane.xlu0 %6030
      %v6032 = vsel %vm6013, %v6003, 0.0
      %6033 = vadd.xlane.f32.xlu0 %v6032
      %v6034 = vpop.xlane.xlu0 %6033
      %v6035 = vsel %vm6013, %v6004, 0.0
      %6036 = vadd.xlane.f32.xlu0 %v6035
      %v6037 = vpop.xlane.xlu0 %6036
      %v6038 = vsel %vm6013, %v6005, 0.0
      %6039 = vadd.xlane.f32.xlu0 %v6038
      %v6040 = vpop.xlane.xlu0 %6039
      %v6041 = vsel %vm6013, %v6006, 0.0
      %6042 = vadd.xlane.f32.xlu0 %v6041
      %v6043 = vpop.xlane.xlu0 %6042
      %v6044 = vsel %vm6013, %v6007, 0.0
      %6045 = vadd.xlane.f32.xlu0 %v6044
      %v6046 = vpop.xlane.xlu0 %6045
      %v6047 = vsel %vm6013, %v6008, 0.0
      %6048 = vadd.xlane.f32.xlu0 %v6047
      %v6049 = vpop.xlane.xlu0 %6048
      %v6050 = vsel %vm6013, %v6009, 0.0
      %6051 = vadd.xlane.f32.xlu0 %v6050
      %v6052 = vpop.xlane.xlu0 %6051
      %v6053 = vsel %vm6013, %v6010, 0.0
      %6054 = vadd.xlane.f32.xlu0 %v6053
      %v6055 = vpop.xlane.xlu0 %6054
      %v6056 = vsel %vm6013, %v6011, 0.0
      %6057 = vadd.xlane.f32.xlu0 %v6056
      %v6058 = vpop.xlane.xlu0 %6057
      %v6059 = vsel %vm6013, %v6012, 0.0
      %6060 = vadd.xlane.f32.xlu0 %v6059
      %v6061 = vpop.xlane.xlu0 %6060
      %s6062 = sld [smem:[#allocation2]]
      %v6063 = vstv %s6062
      %v6064 = vadd.f32 %v6016, %v6063
      %v6065 = vadd.f32 %v6019, %v6063
      %v6066 = vadd.f32 %v6022, %v6063
      %v6067 = vadd.f32 %v6025, %v6063
      %v6068 = vadd.f32 %v6028, %v6063
      %v6069 = vadd.f32 %v6031, %v6063
      %v6070 = vadd.f32 %v6034, %v6063
      %v6071 = vadd.f32 %v6037, %v6063
      %v6072 = vadd.f32 %v6040, %v6063
      %v6073 = vadd.f32 %v6043, %v6063
      %v6074 = vadd.f32 %v6046, %v6063
      %v6075 = vadd.f32 %v6049, %v6063
      %v6076 = vadd.f32 %v6052, %v6063
      %v6077 = vadd.f32 %v6055, %v6063
      %v6078 = vadd.f32 %v6058, %v6063
      %v6079 = vadd.f32 %v6061, %v6063
      %v6080 = vxor.u32 %v6064, 2147483648
      %v6081 = vxor.u32 %v6065, 2147483648
      %v6082 = vxor.u32 %v6066, 2147483648
      %v6083 = vxor.u32 %v6067, 2147483648
      %v6084 = vxor.u32 %v6068, 2147483648
      %v6085 = vxor.u32 %v6069, 2147483648
      %v6086 = vxor.u32 %v6070, 2147483648
      %v6087 = vxor.u32 %v6071, 2147483648
      %v6088 = vxor.u32 %v6072, 2147483648
      %v6089 = vxor.u32 %v6073, 2147483648
      %v6090 = vxor.u32 %v6074, 2147483648
      %v6091 = vxor.u32 %v6075, 2147483648
      %v6092 = vxor.u32 %v6076, 2147483648
      %v6093 = vxor.u32 %v6077, 2147483648
      %v6094 = vxor.u32 %v6078, 2147483648
      %v6095 = vxor.u32 %v6079, 2147483648
      %v6096 = vmul.f32 %v6080, 1.442695
      %v6097 = vpow.pop %v6096
      %v6098 = vmul.f32 %v6081, 1.442695
      %v6099 = vpow.pop %v6098
      %v6100 = vmul.f32 %v6082, 1.442695
      %v6101 = vpow.pop %v6100
      %v6102 = vmul.f32 %v6083, 1.442695
      %v6103 = vpow.pop %v6102
      %v6104 = vmul.f32 %v6084, 1.442695
      %v6105 = vpow.pop %v6104
      %v6106 = vmul.f32 %v6085, 1.442695
      %v6107 = vpow.pop %v6106
      %v6108 = vmul.f32 %v6086, 1.442695
      %v6109 = vpow.pop %v6108
      %v6110 = vmul.f32 %v6087, 1.442695
      %v6111 = vpow.pop %v6110
      %v6112 = vmul.f32 %v6088, 1.442695
      %v6113 = vpow.pop %v6112
      %v6114 = vmul.f32 %v6089, 1.442695
      %v6115 = vpow.pop %v6114
      %v6116 = vmul.f32 %v6090, 1.442695
      %v6117 = vpow.pop %v6116
      %v6118 = vmul.f32 %v6091, 1.442695
      %v6119 = vpow.pop %v6118
      %v6120 = vmul.f32 %v6092, 1.442695
      %v6121 = vpow.pop %v6120
      %v6122 = vmul.f32 %v6093, 1.442695
      %v6123 = vpow.pop %v6122
      %v6124 = vmul.f32 %v6094, 1.442695
      %v6125 = vpow.pop %v6124
      %v6126 = vmul.f32 %v6095, 1.442695
      %v6127 = vpow.pop %v6126
      %v6128 = vadd.f32 %v6097, 1.0
      %v6129 = vadd.f32 %v6099, 1.0
      %v6130 = vadd.f32 %v6101, 1.0
      %v6131 = vadd.f32 %v6103, 1.0
      %v6132 = vadd.f32 %v6105, 1.0
      %v6133 = vadd.f32 %v6107, 1.0
      %v6134 = vadd.f32 %v6109, 1.0
      %v6135 = vadd.f32 %v6111, 1.0
      %v6136 = vadd.f32 %v6113, 1.0
      %v6137 = vadd.f32 %v6115, 1.0
      %v6138 = vadd.f32 %v6117, 1.0
      %v6139 = vadd.f32 %v6119, 1.0
      %v6140 = vadd.f32 %v6121, 1.0
      %v6141 = vadd.f32 %v6123, 1.0
      %v6142 = vadd.f32 %v6125, 1.0
      %v6143 = vadd.f32 %v6127, 1.0
      %v6144 = vrcp.pop %v6128
      %v6145 = vmul.f32 %v6128, %v6144
      %v6146 = vsub.f32 1.0, %v6145
      %v6147 = vmul.f32 %v6144, %v6146
      %v6148 = vadd.f32 %v6144, %v6147
      %vm6149 = vweird.f32 %v6128
      %vm6150 = vweird.f32 %v6144
      %vm6151 = vmor %vm6149, %vm6150
      %v6152 = vsel %vm6151, %v6144, %v6148
      %v6153 = vand.u32 2147483647, %v6128
      %vm6154 = vcmp.eq.f32.partialorder %v6153, 8.507059e+37
      %v6155 = vand.u32 %v6128, 2147483648
      %v6156 = vor.u32 1.1754944e-38, %v6155
      %v6157 = vsel %vm6154, %v6156, %v6152
      %v6158 = vmul.f32 1.0, %v6157
      %v6159 = vrcp.pop %v6129
      %v6160 = vmul.f32 %v6129, %v6159
      %v6161 = vsub.f32 1.0, %v6160
      %v6162 = vmul.f32 %v6159, %v6161
      %v6163 = vadd.f32 %v6159, %v6162
      %vm6164 = vweird.f32 %v6129
      %vm6165 = vweird.f32 %v6159
      %vm6166 = vmor %vm6164, %vm6165
      %v6167 = vsel %vm6166, %v6159, %v6163
      %v6168 = vand.u32 2147483647, %v6129
      %vm6169 = vcmp.eq.f32.partialorder %v6168, 8.507059e+37
      %v6170 = vand.u32 %v6129, 2147483648
      %v6171 = vor.u32 1.1754944e-38, %v6170
      %v6172 = vsel %vm6169, %v6171, %v6167
      %v6173 = vmul.f32 1.0, %v6172
      %v6174 = vrcp.pop %v6130
      %v6175 = vmul.f32 %v6130, %v6174
      %v6176 = vsub.f32 1.0, %v6175
      %v6177 = vmul.f32 %v6174, %v6176
      %v6178 = vadd.f32 %v6174, %v6177
      %vm6179 = vweird.f32 %v6130
      %vm6180 = vweird.f32 %v6174
      %vm6181 = vmor %vm6179, %vm6180
      %v6182 = vsel %vm6181, %v6174, %v6178
      %v6183 = vand.u32 2147483647, %v6130
      %vm6184 = vcmp.eq.f32.partialorder %v6183, 8.507059e+37
      %v6185 = vand.u32 %v6130, 2147483648
      %v6186 = vor.u32 1.1754944e-38, %v6185
      %v6187 = vsel %vm6184, %v6186, %v6182
      %v6188 = vmul.f32 1.0, %v6187
      %v6189 = vrcp.pop %v6131
      %v6190 = vmul.f32 %v6131, %v6189
      %v6191 = vsub.f32 1.0, %v6190
      %v6192 = vmul.f32 %v6189, %v6191
      %v6193 = vadd.f32 %v6189, %v6192
      %vm6194 = vweird.f32 %v6131
      %vm6195 = vweird.f32 %v6189
      %vm6196 = vmor %vm6194, %vm6195
      %v6197 = vsel %vm6196, %v6189, %v6193
      %v6198 = vand.u32 2147483647, %v6131
      %vm6199 = vcmp.eq.f32.partialorder %v6198, 8.507059e+37
      %v6200 = vand.u32 %v6131, 2147483648
      %v6201 = vor.u32 1.1754944e-38, %v6200
      %v6202 = vsel %vm6199, %v6201, %v6197
      %v6203 = vmul.f32 1.0, %v6202
      %v6204 = vrcp.pop %v6132
      %v6205 = vmul.f32 %v6132, %v6204
      %v6206 = vsub.f32 1.0, %v6205
      %v6207 = vmul.f32 %v6204, %v6206
      %v6208 = vadd.f32 %v6204, %v6207
      %vm6209 = vweird.f32 %v6132
      %vm6210 = vweird.f32 %v6204
      %vm6211 = vmor %vm6209, %vm6210
      %v6212 = vsel %vm6211, %v6204, %v6208
      %v6213 = vand.u32 2147483647, %v6132
      %vm6214 = vcmp.eq.f32.partialorder %v6213, 8.507059e+37
      %v6215 = vand.u32 %v6132, 2147483648
      %v6216 = vor.u32 1.1754944e-38, %v6215
      %v6217 = vsel %vm6214, %v6216, %v6212
      %v6218 = vmul.f32 1.0, %v6217
      %v6219 = vrcp.pop %v6133
      %v6220 = vmul.f32 %v6133, %v6219
      %v6221 = vsub.f32 1.0, %v6220
      %v6222 = vmul.f32 %v6219, %v6221
      %v6223 = vadd.f32 %v6219, %v6222
      %vm6224 = vweird.f32 %v6133
      %vm6225 = vweird.f32 %v6219
      %vm6226 = vmor %vm6224, %vm6225
      %v6227 = vsel %vm6226, %v6219, %v6223
      %v6228 = vand.u32 2147483647, %v6133
      %vm6229 = vcmp.eq.f32.partialorder %v6228, 8.507059e+37
      %v6230 = vand.u32 %v6133, 2147483648
      %v6231 = vor.u32 1.1754944e-38, %v6230
      %v6232 = vsel %vm6229, %v6231, %v6227
      %v6233 = vmul.f32 1.0, %v6232
      %v6234 = vrcp.pop %v6134
      %v6235 = vmul.f32 %v6134, %v6234
      %v6236 = vsub.f32 1.0, %v6235
      %v6237 = vmul.f32 %v6234, %v6236
      %v6238 = vadd.f32 %v6234, %v6237
      %vm6239 = vweird.f32 %v6134
      %vm6240 = vweird.f32 %v6234
      %vm6241 = vmor %vm6239, %vm6240
      %v6242 = vsel %vm6241, %v6234, %v6238
      %v6243 = vand.u32 2147483647, %v6134
      %vm6244 = vcmp.eq.f32.partialorder %v6243, 8.507059e+37
      %v6245 = vand.u32 %v6134, 2147483648
      %v6246 = vor.u32 1.1754944e-38, %v6245
      %v6247 = vsel %vm6244, %v6246, %v6242
      %v6248 = vmul.f32 1.0, %v6247
      %v6249 = vrcp.pop %v6135
      %v6250 = vmul.f32 %v6135, %v6249
      %v6251 = vsub.f32 1.0, %v6250
      %v6252 = vmul.f32 %v6249, %v6251
      %v6253 = vadd.f32 %v6249, %v6252
      %vm6254 = vweird.f32 %v6135
      %vm6255 = vweird.f32 %v6249
      %vm6256 = vmor %vm6254, %vm6255
      %v6257 = vsel %vm6256, %v6249, %v6253
      %v6258 = vand.u32 2147483647, %v6135
      %vm6259 = vcmp.eq.f32.partialorder %v6258, 8.507059e+37
      %v6260 = vand.u32 %v6135, 2147483648
      %v6261 = vor.u32 1.1754944e-38, %v6260
      %v6262 = vsel %vm6259, %v6261, %v6257
      %v6263 = vmul.f32 1.0, %v6262
      %v6264 = vrcp.pop %v6136
      %v6265 = vmul.f32 %v6136, %v6264
      %v6266 = vsub.f32 1.0, %v6265
      %v6267 = vmul.f32 %v6264, %v6266
      %v6268 = vadd.f32 %v6264, %v6267
      %vm6269 = vweird.f32 %v6136
      %vm6270 = vweird.f32 %v6264
      %vm6271 = vmor %vm6269, %vm6270
      %v6272 = vsel %vm6271, %v6264, %v6268
      %v6273 = vand.u32 2147483647, %v6136
      %vm6274 = vcmp.eq.f32.partialorder %v6273, 8.507059e+37
      %v6275 = vand.u32 %v6136, 2147483648
      %v6276 = vor.u32 1.1754944e-38, %v6275
      %v6277 = vsel %vm6274, %v6276, %v6272
      %v6278 = vmul.f32 1.0, %v6277
      %v6279 = vrcp.pop %v6137
      %v6280 = vmul.f32 %v6137, %v6279
      %v6281 = vsub.f32 1.0, %v6280
      %v6282 = vmul.f32 %v6279, %v6281
      %v6283 = vadd.f32 %v6279, %v6282
      %vm6284 = vweird.f32 %v6137
      %vm6285 = vweird.f32 %v6279
      %vm6286 = vmor %vm6284, %vm6285
      %v6287 = vsel %vm6286, %v6279, %v6283
      %v6288 = vand.u32 2147483647, %v6137
      %vm6289 = vcmp.eq.f32.partialorder %v6288, 8.507059e+37
      %v6290 = vand.u32 %v6137, 2147483648
      %v6291 = vor.u32 1.1754944e-38, %v6290
      %v6292 = vsel %vm6289, %v6291, %v6287
      %v6293 = vmul.f32 1.0, %v6292
      %v6294 = vrcp.pop %v6138
      %v6295 = vmul.f32 %v6138, %v6294
      %v6296 = vsub.f32 1.0, %v6295
      %v6297 = vmul.f32 %v6294, %v6296
      %v6298 = vadd.f32 %v6294, %v6297
      %vm6299 = vweird.f32 %v6138
      %vm6300 = vweird.f32 %v6294
      %vm6301 = vmor %vm6299, %vm6300
      %v6302 = vsel %vm6301, %v6294, %v6298
      %v6303 = vand.u32 2147483647, %v6138
      %vm6304 = vcmp.eq.f32.partialorder %v6303, 8.507059e+37
      %v6305 = vand.u32 %v6138, 2147483648
      %v6306 = vor.u32 1.1754944e-38, %v6305
      %v6307 = vsel %vm6304, %v6306, %v6302
      %v6308 = vmul.f32 1.0, %v6307
      %v6309 = vrcp.pop %v6139
      %v6310 = vmul.f32 %v6139, %v6309
      %v6311 = vsub.f32 1.0, %v6310
      %v6312 = vmul.f32 %v6309, %v6311
      %v6313 = vadd.f32 %v6309, %v6312
      %vm6314 = vweird.f32 %v6139
      %vm6315 = vweird.f32 %v6309
      %vm6316 = vmor %vm6314, %vm6315
      %v6317 = vsel %vm6316, %v6309, %v6313
      %v6318 = vand.u32 2147483647, %v6139
      %vm6319 = vcmp.eq.f32.partialorder %v6318, 8.507059e+37
      %v6320 = vand.u32 %v6139, 2147483648
      %v6321 = vor.u32 1.1754944e-38, %v6320
      %v6322 = vsel %vm6319, %v6321, %v6317
      %v6323 = vmul.f32 1.0, %v6322
      %v6324 = vrcp.pop %v6140
      %v6325 = vmul.f32 %v6140, %v6324
      %v6326 = vsub.f32 1.0, %v6325
      %v6327 = vmul.f32 %v6324, %v6326
      %v6328 = vadd.f32 %v6324, %v6327
      %vm6329 = vweird.f32 %v6140
      %vm6330 = vweird.f32 %v6324
      %vm6331 = vmor %vm6329, %vm6330
      %v6332 = vsel %vm6331, %v6324, %v6328
      %v6333 = vand.u32 2147483647, %v6140
      %vm6334 = vcmp.eq.f32.partialorder %v6333, 8.507059e+37
      %v6335 = vand.u32 %v6140, 2147483648
      %v6336 = vor.u32 1.1754944e-38, %v6335
      %v6337 = vsel %vm6334, %v6336, %v6332
      %v6338 = vmul.f32 1.0, %v6337
      %v6339 = vrcp.pop %v6141
      %v6340 = vmul.f32 %v6141, %v6339
      %v6341 = vsub.f32 1.0, %v6340
      %v6342 = vmul.f32 %v6339, %v6341
      %v6343 = vadd.f32 %v6339, %v6342
      %vm6344 = vweird.f32 %v6141
      %vm6345 = vweird.f32 %v6339
      %vm6346 = vmor %vm6344, %vm6345
      %v6347 = vsel %vm6346, %v6339, %v6343
      %v6348 = vand.u32 2147483647, %v6141
      %vm6349 = vcmp.eq.f32.partialorder %v6348, 8.507059e+37
      %v6350 = vand.u32 %v6141, 2147483648
      %v6351 = vor.u32 1.1754944e-38, %v6350
      %v6352 = vsel %vm6349, %v6351, %v6347
      %v6353 = vmul.f32 1.0, %v6352
      %v6354 = vrcp.pop %v6142
      %v6355 = vmul.f32 %v6142, %v6354
      %v6356 = vsub.f32 1.0, %v6355
      %v6357 = vmul.f32 %v6354, %v6356
      %v6358 = vadd.f32 %v6354, %v6357
      %vm6359 = vweird.f32 %v6142
      %vm6360 = vweird.f32 %v6354
      %vm6361 = vmor %vm6359, %vm6360
      %v6362 = vsel %vm6361, %v6354, %v6358
      %v6363 = vand.u32 2147483647, %v6142
      %vm6364 = vcmp.eq.f32.partialorder %v6363, 8.507059e+37
      %v6365 = vand.u32 %v6142, 2147483648
      %v6366 = vor.u32 1.1754944e-38, %v6365
      %v6367 = vsel %vm6364, %v6366, %v6362
      %v6368 = vmul.f32 1.0, %v6367
      %v6369 = vrcp.pop %v6143
      %v6370 = vmul.f32 %v6143, %v6369
      %v6371 = vsub.f32 1.0, %v6370
      %v6372 = vmul.f32 %v6369, %v6371
      %v6373 = vadd.f32 %v6369, %v6372
      %vm6374 = vweird.f32 %v6143
      %vm6375 = vweird.f32 %v6369
      %vm6376 = vmor %vm6374, %vm6375
      %v6377 = vsel %vm6376, %v6369, %v6373
      %v6378 = vand.u32 2147483647, %v6143
      %vm6379 = vcmp.eq.f32.partialorder %v6378, 8.507059e+37
      %v6380 = vand.u32 %v6143, 2147483648
      %v6381 = vor.u32 1.1754944e-38, %v6380
      %v6382 = vsel %vm6379, %v6381, %v6377
      %v6383 = vmul.f32 1.0, %v6382
      %vm6384 = vcmask 7168
      %6385 = vst.msk [vmem:[%s389] sm:$0xff] %vm6384, %v6158
      %6386 = vst.msk [vmem:[%s389 + $0x8] sm:$0xff] %vm6384, %v6173
      %6387 = vst.msk [vmem:[%s389 + $0x10] sm:$0xff] %vm6384, %v6188
      %6388 = vst.msk [vmem:[%s389 + $0x18] sm:$0xff] %vm6384, %v6203
      %6389 = vst.msk [vmem:[%s389 + $0x20] sm:$0xff] %vm6384, %v6218
      %6390 = vst.msk [vmem:[%s389 + $0x28] sm:$0xff] %vm6384, %v6233
      %6391 = vst.msk [vmem:[%s389 + $0x30] sm:$0xff] %vm6384, %v6248
      %6392 = vst.msk [vmem:[%s389 + $0x38] sm:$0xff] %vm6384, %v6263
      %6393 = vst.msk [vmem:[%s389 + $0x40] sm:$0xff] %vm6384, %v6278
      %6394 = vst.msk [vmem:[%s389 + $0x48] sm:$0xff] %vm6384, %v6293
      %6395 = vst.msk [vmem:[%s389 + $0x50] sm:$0xff] %vm6384, %v6308
      %6396 = vst.msk [vmem:[%s389 + $0x58] sm:$0xff] %vm6384, %v6323
      %6397 = vst.msk [vmem:[%s389 + $0x60] sm:$0xff] %vm6384, %v6338
      %6398 = vst.msk [vmem:[%s389 + $0x68] sm:$0xff] %vm6384, %v6353
      %6399 = vst.msk [vmem:[%s389 + $0x70] sm:$0xff] %vm6384, %v6368
      %6400 = vst.msk [vmem:[%s389 + $0x78] sm:$0xff] %vm6384, %v6383
      %s6401 = smul.u32 16, %s23
      %p6402 = scmp.lt.s32.totalorder %s6401, 31
      %s6403 = scalar_select %p6402, %s6401, 31
      %s6404 = smul.addr %s6403, 8
      %s6405 = scalar_lea.vmem %s11, %s6404
      // Predicated region
      $region65: #{tpu_custom_call.1} parent=63 // pred_check
        %p6406 = pneg %p277
      $region66: #{tpu_custom_call.1} parent=63 // pred_check_branch
        %6408 = sbr.rel (%p6406) target = $region68
      $region67: #{tpu_custom_call.1} parent=63 // pred_region
        %s6409 = smul.u32 16, %s23
      $region68: #{tpu_custom_call.1} parent=63 // pred_fallthru
        _
    $region64: #{tpu_custom_call.1} parent=5 // pred_fallthru
      _
    %p6410 = scmp.le.s32.totalorder 2, %s18
    // Predicated region
    $region69: #{tpu_custom_call.1} parent=5 // pred_check
      %p6411 = pneg %p6410
    $region70: #{tpu_custom_call.1} parent=5 // pred_check_branch
      %6413 = sbr.rel (%p6411) target = $region72
    $region71: #{tpu_custom_call.1} parent=5 // pred_region
      %s6414 = ssub.s32 %s18, 2
      // Predicated region
      $region73: #{tpu_custom_call.1} parent=71 // pred_check
        %p6415 = pneg %p283
      $region74: #{tpu_custom_call.1} parent=71 // pred_check_branch
        %6417 = sbr.rel (%p6415) target = $region76
      $region75: #{tpu_custom_call.1} parent=71 // pred_region
        %s6418 = smul.u32 16, %s24
        %p6419 = scmp.lt.s32.totalorder %s6418, 31
        %s6420 = scalar_select %p6419, %s6418, 31
        %s6421 = smul.addr %s6420, 8
        %s6422 = scalar_lea.vmem %s11, %s6421
      $region76: #{tpu_custom_call.1} parent=71 // pred_fallthru
        _
    $region72: #{tpu_custom_call.1} parent=5 // pred_fallthru
      _
  $region6: #{tpu_custom_call.1} parent=0 // loop_footer
    %s22 = sadd.s32 1, %s18
  $region7: #{tpu_custom_call.1} parent=0 // loop_footer_branch
    %17 = sbr.rel target = $region3
  $region8: #{tpu_custom_call.1} parent=0 // loop_exit
    _

</llo_original>
